<compile_context>
chip_gen: v6e
topology: v6e:2x2x1
jax: 0.10.0
libtpu: 0.0.40
codegen_flags: <defaults>
</compile_context>

<pallas_src>
import functools

import jax
import jax.numpy as jnp
from jax.experimental import pallas as pl
from jax.experimental.pallas import tpu as pltpu

LANE = 128

# (in_features, out_features, apply_relu) for the 8 Linear layers.
LAYERS = [
    (28 * 28, 128, True),
    (128, 64, True),
    (64, 12, True),
    (12, 3, False),      # encoder output (no activation)
    (3, 12, True),
    (12, 64, True),
    (64, 128, True),
    (128, 28 * 28, False),  # decoder output (sigmoid applied at the end)
]
N_LAYERS = len(LAYERS)


def _round_up(x, m):
    return (x + m - 1) // m * m


OUT_FEATS = LAYERS[-1][1]                 # 784
OUT_PAD = _round_up(OUT_FEATS, LANE)      # 896 (7 * 128) -> lane-dense stores

# Packed-bias layout: each bias gets a 128-aligned slot inside one (1, TOTAL) buffer.
BIAS_SLOTS = [_round_up(o, LANE) for (_, o, _) in LAYERS]          # 7*128 + 896
BIAS_OFFSETS = [sum(BIAS_SLOTS[:i]) for i in range(N_LAYERS)]
BIAS_TOTAL = sum(BIAS_SLOTS)                                       # 1792


def autoencoder_kernel(x_ref, *refs):
    """refs = (w1, ..., w8, b_all, out_ref).

    x_ref:   (TM, 784) f32 batch tile
    w_i:     (in, out) bf16 (last layer padded to (128, 896))
    b_all:   (1, 1792) f32 packed biases
    out_ref: (TM, 896) f32
    """
    out_ref = refs[-1]
    b_all_ref = refs[-2]
    w_refs = refs[:-2]

    h = x_ref[...]  # f32
    for i, (_, out_f, relu) in enumerate(LAYERS):
        last = i == N_LAYERS - 1
        width = OUT_PAD if last else out_f
        off = BIAS_OFFSETS[i]
        w = w_refs[i][...]                                   # bf16 (in, width)
        b = b_all_ref[:, off:off + width]                    # f32  (1, width)
        # bf16 x bf16 MXU matmul with f32 accumulation.
        h = jnp.dot(h.astype(jnp.bfloat16), w,
                    preferred_element_type=jnp.float32) + b
        if relu:
            h = jnp.maximum(h, 0.0)
    out_ref[...] = jax.nn.sigmoid(h).astype(out_ref.dtype)


def init_params(key):
    """Deterministic init mimicking PyTorch's U(-1/sqrt(fan_in), 1/sqrt(fan_in)).

    Weights are stored as [in_features, out_features] (transposed vs nn.Linear).
    """
    params = []
    for (fan_in, fan_out, _) in LAYERS:
        key, kw, kb = jax.random.split(key, 3)
        bound = 1.0 / jnp.sqrt(jnp.float32(fan_in))
        w = jax.random.uniform(kw, (fan_in, fan_out), jnp.float32, -bound, bound)
        b = jax.random.uniform(kb, (1, fan_out), jnp.float32, -bound, bound)
        params.append((w, b))
    return params


def prepare_params(params):
    """f32 [in,out]/[1,out] params -> (bf16 weight list, packed f32 bias buffer)."""
    ws = []
    b_all = jnp.zeros((1, BIAS_TOTAL), jnp.float32)
    for i, ((w, b), (fin, fout, _)) in enumerate(zip(params, LAYERS)):
        w = jnp.asarray(w, jnp.float32)
        b = jnp.reshape(jnp.asarray(b, jnp.float32), (1, fout))
        if i == N_LAYERS - 1:
            # Pad final layer's output dim to 896 with zero columns (lane-dense store).
            w = jnp.pad(w, ((0, 0), (0, OUT_PAD - fout)))
        ws.append(w.astype(jnp.bfloat16))
        off = BIAS_OFFSETS[i]
        b_all = b_all.at[:, off:off + fout].set(b)
    return ws, b_all


def _default_tm():
    """128 on v5-class chips (4x128^2 MXU), 256 on v6e/v7x (2x256^2 MXU)."""
    try:
        kind = jax.devices()[0].device_kind.lower()
    except Exception:
        kind = ""
    return 128 if "v5" in kind else 256


@functools.partial(jax.jit, static_argnames=("tm",))
def autoencoder_forward(x, ws, b_all, *, tm):
    B, D = x.shape
    assert D == 28 * 28

    n_tiles = pl.cdiv(B, tm)
    b_pad = n_tiles * tm
    if b_pad != B:
        x = jnp.pad(x, ((0, b_pad - B), (0, 0)))

    # x / out are tiled over the batch; weights & packed biases use a constant
    # index_map so they stay VMEM-resident across grid steps (loaded once).
    in_specs = [pl.BlockSpec((tm, D), lambda i: (i, 0))]
    for w in ws:
        in_specs.append(pl.BlockSpec(w.shape, lambda i: (0, 0)))
    in_specs.append(pl.BlockSpec(b_all.shape, lambda i: (0, 0)))

    out = pl.pallas_call(
        autoencoder_kernel,
        out_shape=jax.ShapeDtypeStruct((b_pad, OUT_PAD), jnp.float32),
        grid=(n_tiles,),
        in_specs=in_specs,
        out_specs=pl.BlockSpec((tm, OUT_PAD), lambda i: (i, 0)),
        compiler_params=pltpu.CompilerParams(
            dimension_semantics=("parallel",)),
    )(x, *ws, b_all)

    return out[:B, :OUT_FEATS]


def reference_forward(x, ws, b_all):
    """Pure-JAX reference using the exact same bf16-weight / f32-accum math."""
    h = x
    for i, (_, out_f, relu) in enumerate(LAYERS):
        last = i == N_LAYERS - 1
        width = OUT_PAD if last else out_f
        off = BIAS_OFFSETS[i]
        b = b_all[:, off:off + width]
        h = jnp.dot(h.astype(jnp.bfloat16), ws[i],
                    preferred_element_type=jnp.float32) + b
        if relu:
            h = jnp.maximum(h, 0.0)
    return jax.nn.sigmoid(h)[:, :OUT_FEATS]


if __name__ == "__main__":
    key = jax.random.PRNGKey(0)
    key_x, key_p = jax.random.split(key)

    B = 300  # not a multiple of the tile -> exercises padding + multi-step grid
    x = jax.random.uniform(key_x, (B, 28 * 28), jnp.float32)
    params = init_params(key_p)
    ws, b_all = prepare_params(params)

    tm = _default_tm()
    out = autoencoder_forward(x, ws, b_all, tm=tm)
    out = jax.block_until_ready(out)

    ref = reference_forward(x, ws, b_all)
    assert out.shape == (B, 28 * 28)
    max_diff = jnp.max(jnp.abs(out - ref))
    assert jnp.allclose(out, ref, atol=2e-3, rtol=2e-3), (
        f"Pallas output mismatch vs reference (max abs diff {max_diff})")

    print("KERNEL_OK")
</pallas_src>

<mosaic_0001>
module attributes {stable_mosaic.version = 11 : i64} {
  func.func @autoencoder_kernel(%arg0: i32, %arg1: memref<256x784xf32, #tpu.memory_space<vmem>>, %arg2: memref<784x128xbf16, #tpu.memory_space<vmem>>, %arg3: memref<128x64xbf16, #tpu.memory_space<vmem>>, %arg4: memref<64x12xbf16, #tpu.memory_space<vmem>>, %arg5: memref<12x3xbf16, #tpu.memory_space<vmem>>, %arg6: memref<3x12xbf16, #tpu.memory_space<vmem>>, %arg7: memref<12x64xbf16, #tpu.memory_space<vmem>>, %arg8: memref<64x128xbf16, #tpu.memory_space<vmem>>, %arg9: memref<128x896xbf16, #tpu.memory_space<vmem>>, %arg10: memref<1x1792xf32, #tpu.memory_space<vmem>>, %arg11: memref<256x896xf32, #tpu.memory_space<vmem>>) attributes {dimension_semantics = [#tpu.dimension_semantics<parallel>], iteration_bounds = array<i64: 2>, scalar_prefetch = 0 : i64, scratch_operands = 0 : i64, tpu.core_type = #tpu.core_type<tc>, window_params = [{transform_indices = @transform_0, window_bounds = array<i64: 256, 784>}, {pipeline_mode = #tpu.pipeline_mode<synchronous>, transform_indices = @transform_1, window_bounds = array<i64: 784, 128>}, {pipeline_mode = #tpu.pipeline_mode<synchronous>, transform_indices = @transform_2, window_bounds = array<i64: 128, 64>}, {pipeline_mode = #tpu.pipeline_mode<synchronous>, transform_indices = @transform_3, window_bounds = array<i64: 64, 12>}, {pipeline_mode = #tpu.pipeline_mode<synchronous>, transform_indices = @transform_4, window_bounds = array<i64: 12, 3>}, {pipeline_mode = #tpu.pipeline_mode<synchronous>, transform_indices = @transform_5, window_bounds = array<i64: 3, 12>}, {pipeline_mode = #tpu.pipeline_mode<synchronous>, transform_indices = @transform_6, window_bounds = array<i64: 12, 64>}, {pipeline_mode = #tpu.pipeline_mode<synchronous>, transform_indices = @transform_7, window_bounds = array<i64: 64, 128>}, {pipeline_mode = #tpu.pipeline_mode<synchronous>, transform_indices = @transform_8, window_bounds = array<i64: 128, 896>}, {pipeline_mode = #tpu.pipeline_mode<synchronous>, transform_indices = @transform_9, window_bounds = array<i64: 1, 1792>}, {transform_indices = @transform_10, window_bounds = array<i64: 256, 896>}]} {
    %c0 = arith.constant 0 : index
    %c0_0 = arith.constant 0 : index
    %0 = vector.load %arg1[%c0, %c0_0] : memref<256x784xf32, #tpu.memory_space<vmem>>, vector<256x784xf32>
    %c0_1 = arith.constant 0 : index
    %c0_2 = arith.constant 0 : index
    %1 = vector.load %arg2[%c0_1, %c0_2] : memref<784x128xbf16, #tpu.memory_space<vmem>>, vector<784x128xbf16>
    %c0_3 = arith.constant 0 : index
    %c0_4 = arith.constant 0 : index
    %2 = vector.load %arg10[%c0_3, %c0_4] : memref<1x1792xf32, #tpu.memory_space<vmem>>, vector<1x128xf32>
    %3 = arith.truncf %0 : vector<256x784xf32> to vector<256x784xbf16>
    %cst = arith.constant dense<0.000000e+00> : vector<256x128xf32>
    %4 = tpu.matmul %3, %1, %cst {dimension_numbers = #tpu.dot_dimension_numbers<[1], [0], [0], [1], [0, 0, 1, 1], [], []>} : vector<256x784xbf16>, vector<784x128xbf16>, vector<256x128xf32> -> vector<256x128xf32>
    %5 = vector.broadcast %2 : vector<1x128xf32> to vector<256x128xf32>
    %6 = arith.addf %4, %5 : vector<256x128xf32>
    %cst_5 = arith.constant 0.000000e+00 : f32
    %7 = vector.broadcast %cst_5 : f32 to vector<256x128xf32>
    %8 = arith.maximumf %6, %7 : vector<256x128xf32>
    %c0_6 = arith.constant 0 : index
    %c0_7 = arith.constant 0 : index
    %9 = vector.load %arg3[%c0_6, %c0_7] : memref<128x64xbf16, #tpu.memory_space<vmem>>, vector<128x64xbf16>
    %c0_8 = arith.constant 0 : index
    %c128 = arith.constant 128 : index
    %10 = vector.load %arg10[%c0_8, %c128] : memref<1x1792xf32, #tpu.memory_space<vmem>>, vector<1x64xf32>
    %11 = arith.truncf %8 : vector<256x128xf32> to vector<256x128xbf16>
    %cst_9 = arith.constant dense<0.000000e+00> : vector<256x64xf32>
    %12 = tpu.matmul %11, %9, %cst_9 {dimension_numbers = #tpu.dot_dimension_numbers<[1], [0], [0], [1], [0, 0, 1, 1], [], []>} : vector<256x128xbf16>, vector<128x64xbf16>, vector<256x64xf32> -> vector<256x64xf32>
    %13 = vector.broadcast %10 : vector<1x64xf32> to vector<256x64xf32>
    %14 = arith.addf %12, %13 : vector<256x64xf32>
    %cst_10 = arith.constant 0.000000e+00 : f32
    %15 = vector.broadcast %cst_10 : f32 to vector<256x64xf32>
    %16 = arith.maximumf %14, %15 : vector<256x64xf32>
    %c0_11 = arith.constant 0 : index
    %c0_12 = arith.constant 0 : index
    %17 = vector.load %arg4[%c0_11, %c0_12] : memref<64x12xbf16, #tpu.memory_space<vmem>>, vector<64x12xbf16>
    %c0_13 = arith.constant 0 : index
    %c256 = arith.constant 256 : index
    %18 = vector.load %arg10[%c0_13, %c256] : memref<1x1792xf32, #tpu.memory_space<vmem>>, vector<1x12xf32>
    %19 = arith.truncf %16 : vector<256x64xf32> to vector<256x64xbf16>
    %cst_14 = arith.constant dense<0.000000e+00> : vector<256x12xf32>
    %20 = tpu.matmul %19, %17, %cst_14 {dimension_numbers = #tpu.dot_dimension_numbers<[1], [0], [0], [1], [0, 0, 1, 1], [], []>} : vector<256x64xbf16>, vector<64x12xbf16>, vector<256x12xf32> -> vector<256x12xf32>
    %21 = vector.broadcast %18 : vector<1x12xf32> to vector<256x12xf32>
    %22 = arith.addf %20, %21 : vector<256x12xf32>
    %cst_15 = arith.constant 0.000000e+00 : f32
    %23 = vector.broadcast %cst_15 : f32 to vector<256x12xf32>
    %24 = arith.maximumf %22, %23 : vector<256x12xf32>
    %c0_16 = arith.constant 0 : index
    %c0_17 = arith.constant 0 : index
    %25 = vector.load %arg5[%c0_16, %c0_17] : memref<12x3xbf16, #tpu.memory_space<vmem>>, vector<12x3xbf16>
    %c0_18 = arith.constant 0 : index
    %c384 = arith.constant 384 : index
    %26 = vector.load %arg10[%c0_18, %c384] : memref<1x1792xf32, #tpu.memory_space<vmem>>, vector<1x3xf32>
    %27 = arith.truncf %24 : vector<256x12xf32> to vector<256x12xbf16>
    %cst_19 = arith.constant dense<0.000000e+00> : vector<256x3xf32>
    %28 = tpu.matmul %27, %25, %cst_19 {dimension_numbers = #tpu.dot_dimension_numbers<[1], [0], [0], [1], [0, 0, 1, 1], [], []>} : vector<256x12xbf16>, vector<12x3xbf16>, vector<256x3xf32> -> vector<256x3xf32>
    %29 = vector.broadcast %26 : vector<1x3xf32> to vector<256x3xf32>
    %30 = arith.addf %28, %29 : vector<256x3xf32>
    %c0_20 = arith.constant 0 : index
    %c0_21 = arith.constant 0 : index
    %31 = vector.load %arg6[%c0_20, %c0_21] : memref<3x12xbf16, #tpu.memory_space<vmem>>, vector<3x12xbf16>
    %c0_22 = arith.constant 0 : index
    %c512 = arith.constant 512 : index
    %32 = vector.load %arg10[%c0_22, %c512] : memref<1x1792xf32, #tpu.memory_space<vmem>>, vector<1x12xf32>
    %33 = arith.truncf %30 : vector<256x3xf32> to vector<256x3xbf16>
    %cst_23 = arith.constant dense<0.000000e+00> : vector<256x12xf32>
    %34 = tpu.matmul %33, %31, %cst_23 {dimension_numbers = #tpu.dot_dimension_numbers<[1], [0], [0], [1], [0, 0, 1, 1], [], []>} : vector<256x3xbf16>, vector<3x12xbf16>, vector<256x12xf32> -> vector<256x12xf32>
    %35 = vector.broadcast %32 : vector<1x12xf32> to vector<256x12xf32>
    %36 = arith.addf %34, %35 : vector<256x12xf32>
    %cst_24 = arith.constant 0.000000e+00 : f32
    %37 = vector.broadcast %cst_24 : f32 to vector<256x12xf32>
    %38 = arith.maximumf %36, %37 : vector<256x12xf32>
    %c0_25 = arith.constant 0 : index
    %c0_26 = arith.constant 0 : index
    %39 = vector.load %arg7[%c0_25, %c0_26] : memref<12x64xbf16, #tpu.memory_space<vmem>>, vector<12x64xbf16>
    %c0_27 = arith.constant 0 : index
    %c640 = arith.constant 640 : index
    %40 = vector.load %arg10[%c0_27, %c640] : memref<1x1792xf32, #tpu.memory_space<vmem>>, vector<1x64xf32>
    %41 = arith.truncf %38 : vector<256x12xf32> to vector<256x12xbf16>
    %cst_28 = arith.constant dense<0.000000e+00> : vector<256x64xf32>
    %42 = tpu.matmul %41, %39, %cst_28 {dimension_numbers = #tpu.dot_dimension_numbers<[1], [0], [0], [1], [0, 0, 1, 1], [], []>} : vector<256x12xbf16>, vector<12x64xbf16>, vector<256x64xf32> -> vector<256x64xf32>
    %43 = vector.broadcast %40 : vector<1x64xf32> to vector<256x64xf32>
    %44 = arith.addf %42, %43 : vector<256x64xf32>
    %cst_29 = arith.constant 0.000000e+00 : f32
    %45 = vector.broadcast %cst_29 : f32 to vector<256x64xf32>
    %46 = arith.maximumf %44, %45 : vector<256x64xf32>
    %c0_30 = arith.constant 0 : index
    %c0_31 = arith.constant 0 : index
    %47 = vector.load %arg8[%c0_30, %c0_31] : memref<64x128xbf16, #tpu.memory_space<vmem>>, vector<64x128xbf16>
    %c0_32 = arith.constant 0 : index
    %c768 = arith.constant 768 : index
    %48 = vector.load %arg10[%c0_32, %c768] : memref<1x1792xf32, #tpu.memory_space<vmem>>, vector<1x128xf32>
    %49 = arith.truncf %46 : vector<256x64xf32> to vector<256x64xbf16>
    %cst_33 = arith.constant dense<0.000000e+00> : vector<256x128xf32>
    %50 = tpu.matmul %49, %47, %cst_33 {dimension_numbers = #tpu.dot_dimension_numbers<[1], [0], [0], [1], [0, 0, 1, 1], [], []>} : vector<256x64xbf16>, vector<64x128xbf16>, vector<256x128xf32> -> vector<256x128xf32>
    %51 = vector.broadcast %48 : vector<1x128xf32> to vector<256x128xf32>
    %52 = arith.addf %50, %51 : vector<256x128xf32>
    %cst_34 = arith.constant 0.000000e+00 : f32
    %53 = vector.broadcast %cst_34 : f32 to vector<256x128xf32>
    %54 = arith.maximumf %52, %53 : vector<256x128xf32>
    %c0_35 = arith.constant 0 : index
    %c0_36 = arith.constant 0 : index
    %55 = vector.load %arg9[%c0_35, %c0_36] : memref<128x896xbf16, #tpu.memory_space<vmem>>, vector<128x896xbf16>
    %c0_37 = arith.constant 0 : index
    %c896 = arith.constant 896 : index
    %56 = vector.load %arg10[%c0_37, %c896] : memref<1x1792xf32, #tpu.memory_space<vmem>>, vector<1x896xf32>
    %57 = arith.truncf %54 : vector<256x128xf32> to vector<256x128xbf16>
    %cst_38 = arith.constant dense<0.000000e+00> : vector<256x896xf32>
    %58 = tpu.matmul %57, %55, %cst_38 {dimension_numbers = #tpu.dot_dimension_numbers<[1], [0], [0], [1], [0, 0, 1, 1], [], []>} : vector<256x128xbf16>, vector<128x896xbf16>, vector<256x896xf32> -> vector<256x896xf32>
    %59 = vector.broadcast %56 : vector<1x896xf32> to vector<256x896xf32>
    %60 = arith.addf %58, %59 : vector<256x896xf32>
    %61 = arith.negf %60 : vector<256x896xf32>
    %62 = math.exp %61 : vector<256x896xf32>
    %cst_39 = arith.constant 1.000000e+00 : f32
    %63 = vector.broadcast %cst_39 : f32 to vector<256x896xf32>
    %64 = arith.addf %63, %62 : vector<256x896xf32>
    %65 = arith.divf %63, %64 : vector<256x896xf32>
    %c0_40 = arith.constant 0 : index
    %c0_41 = arith.constant 0 : index
    %66 = vector.load %arg11[%c0_40, %c0_41] : memref<256x896xf32, #tpu.memory_space<vmem>>, vector<256x896xf32>
    tpu.vector_store %arg11[%c0_40, %c0_41], %65 {strides = array<i32>} : memref<256x896xf32, #tpu.memory_space<vmem>>, vector<256x896xf32>,
    return
  }
  func.func @transform_0(%arg0: i32) -> (i32, i32) {
    %c0_i32 = arith.constant 0 : i32
    %c0_i32_0 = arith.constant 0 : i32
    return %arg0, %c0_i32 : i32, i32
  }
  func.func @transform_1(%arg0: i32) -> (i32, i32) {
    %c0_i32 = arith.constant 0 : i32
    %c0_i32_0 = arith.constant 0 : i32
    %c0_i32_1 = arith.constant 0 : i32
    return %c0_i32, %c0_i32_0 : i32, i32
  }
  func.func @transform_2(%arg0: i32) -> (i32, i32) {
    %c0_i32 = arith.constant 0 : i32
    %c0_i32_0 = arith.constant 0 : i32
    %c0_i32_1 = arith.constant 0 : i32
    return %c0_i32, %c0_i32_0 : i32, i32
  }
  func.func @transform_3(%arg0: i32) -> (i32, i32) {
    %c0_i32 = arith.constant 0 : i32
    %c0_i32_0 = arith.constant 0 : i32
    %c0_i32_1 = arith.constant 0 : i32
    return %c0_i32, %c0_i32_0 : i32, i32
  }
  func.func @transform_4(%arg0: i32) -> (i32, i32) {
    %c0_i32 = arith.constant 0 : i32
    %c0_i32_0 = arith.constant 0 : i32
    %c0_i32_1 = arith.constant 0 : i32
    return %c0_i32, %c0_i32_0 : i32, i32
  }
  func.func @transform_5(%arg0: i32) -> (i32, i32) {
    %c0_i32 = arith.constant 0 : i32
    %c0_i32_0 = arith.constant 0 : i32
    %c0_i32_1 = arith.constant 0 : i32
    return %c0_i32, %c0_i32_0 : i32, i32
  }
  func.func @transform_6(%arg0: i32) -> (i32, i32) {
    %c0_i32 = arith.constant 0 : i32
    %c0_i32_0 = arith.constant 0 : i32
    %c0_i32_1 = arith.constant 0 : i32
    return %c0_i32, %c0_i32_0 : i32, i32
  }
  func.func @transform_7(%arg0: i32) -> (i32, i32) {
    %c0_i32 = arith.constant 0 : i32
    %c0_i32_0 = arith.constant 0 : i32
    %c0_i32_1 = arith.constant 0 : i32
    return %c0_i32, %c0_i32_0 : i32, i32
  }
  func.func @transform_8(%arg0: i32) -> (i32, i32) {
    %c0_i32 = arith.constant 0 : i32
    %c0_i32_0 = arith.constant 0 : i32
    %c0_i32_1 = arith.constant 0 : i32
    return %c0_i32, %c0_i32_0 : i32, i32
  }
  func.func @transform_9(%arg0: i32) -> (i32, i32) {
    %c0_i32 = arith.constant 0 : i32
    %c0_i32_0 = arith.constant 0 : i32
    %c0_i32_1 = arith.constant 0 : i32
    return %c0_i32, %c0_i32_0 : i32, i32
  }
  func.func @transform_10(%arg0: i32) -> (i32, i32) {
    %c0_i32 = arith.constant 0 : i32
    %c0_i32_0 = arith.constant 0 : i32
    return %arg0, %c0_i32 : i32, i32
  }
}

</mosaic_0001>

<llo_original>
// kernel: autoencoder_forward.1
$region0: #{autoencoder_forward.1}
  #allocation0 [shape = 'u32[]', space=smem, size = 0x4, offset = 0x4, fixed_abs, tag = 'smem constant byte address 0x4 - core index']
  #allocation1 [shape = 'u32[144,128]{1,0:T(1,128)}', space=vmem, size = 0x12000, scoped, tag = 'internal scratch']
  %s0 = inlined_call_operand.vmem [shape: f32[512,784], index: 0, kind: input, shape index: {}]
  %s1 = inlined_call_operand.vmem [shape: bf16[784,128], index: 1, kind: input, shape index: {}]
  %s2 = inlined_call_operand.vmem [shape: bf16[128,64], index: 2, kind: input, shape index: {}]
  %s3 = inlined_call_operand.vmem [shape: bf16[64,12], index: 3, kind: input, shape index: {}]
  %s4 = inlined_call_operand.vmem [shape: bf16[12,3], index: 4, kind: input, shape index: {}]
  %s5 = inlined_call_operand.vmem [shape: bf16[3,12], index: 5, kind: input, shape index: {}]
  %s6 = inlined_call_operand.vmem [shape: bf16[12,64], index: 6, kind: input, shape index: {}]
  %s7 = inlined_call_operand.vmem [shape: bf16[64,128], index: 7, kind: input, shape index: {}]
  %s8 = inlined_call_operand.vmem [shape: bf16[128,896], index: 8, kind: input, shape index: {}]
  %s9 = inlined_call_operand.vmem [shape: f32[1,1792], index: 9, kind: input, shape index: {}]
  %s10 = inlined_call_operand.vmem [shape: f32[512,896], index: 10, kind: output, shape index: {}]
  %s11 = sld [smem:[#allocation0]]
  $region73: #{autoencoder_forward.1} parent=0
    _
  %s13 = ssub.s32 1, %s11
  %s14 = scalar_select 0, %s13, %s11
  loop: start=0, step=1, limit=4
  $region2: #{autoencoder_forward.1} parent=0 // loop_pre_header
    _
  $region3: #{autoencoder_forward.1} parent=0 // loop_header
    %s16 = sphi 0, %s20
    %p17 = scmp.ge.s32.totalorder %s16, 4
    %s26 = sphi 0, %s28
    %s29 = sphi 0, %s26
    %s30 = sphi 0, %s29
    %s46 = sphi 0, %s30
    %s50 = sphi 0, %s50
    %s52 = sphi 0, %s50
    %s53 = sphi 0, %s52
    %s67 = sphi 0, %s53
    %s71 = sphi 0, %s71
    %s73 = sphi 0, %s71
    %s74 = sphi 0, %s73
    %s88 = sphi 0, %s74
    %s92 = sphi 0, %s92
    %s94 = sphi 0, %s92
    %s95 = sphi 0, %s94
    %s109 = sphi 0, %s95
    %s113 = sphi 0, %s113
    %s115 = sphi 0, %s113
    %s116 = sphi 0, %s115
    %s130 = sphi 0, %s116
    %s134 = sphi 0, %s134
    %s136 = sphi 0, %s134
    %s137 = sphi 0, %s136
    %s151 = sphi 0, %s137
    %s155 = sphi 0, %s155
    %s157 = sphi 0, %s155
    %s158 = sphi 0, %s157
    %s172 = sphi 0, %s158
    %s176 = sphi 0, %s176
    %s178 = sphi 0, %s176
    %s179 = sphi 0, %s178
    %s193 = sphi 0, %s179
    %s197 = sphi 0, %s197
    %s199 = sphi 0, %s197
    %s200 = sphi 0, %s199
    %s214 = sphi 0, %s200
    %s218 = sphi 0, %s218
    %s220 = sphi 0, %s218
    %s221 = sphi 0, %s220
    %s235 = sphi 0, %s221
    %s241 = sphi 0, %s243
    %s244 = sphi 0, %s241
    %s245 = sphi 0, %s244
    %s261 = sphi 0, %s245
  $region4: #{autoencoder_forward.1} parent=0 // loop_header_branch
    %19 = sbr.rel (%p17) target = $region8
  $region5: #{autoencoder_forward.1} parent=0 // loop_body
    %s21 = ssub.s32 %s16, 1
    %s22 = ssub.s32 %s16, 2
    %s23 = sadd.s32 %s16, 1
    %s24 = ssub.s32 %s16, %s23
    %p25 = scmp.eq.s32.totalorder %s24, 0
    %s27 = sadd.s32 %s26, 1
    %s28 = scalar_select %p25, %s26, %s27
    %p31 = pneg %p25
    %p32 = scmp.eq.s32.totalorder %s16, 1
    %p33 = por %p31, %p32
    %p34 = scmp.ne.s32.totalorder %s26, %s29
    %p35 = scmp.eq.s32.totalorder %s16, 0
    %p36 = por %p34, %p35
    %p37 = scmp.ne.s32.totalorder %s26, %s29
    %p38 = scmp.eq.s32.totalorder %s21, 1
    %p39 = por %p37, %p38
    %p40 = scmp.ne.s32.totalorder %s29, %s30
    %p41 = scmp.eq.s32.totalorder %s21, 0
    %p42 = por %p40, %p41
    %p43 = scmp.ne.s32.totalorder %s29, %s30
    %p44 = scmp.eq.s32.totalorder %s22, 1
    %p45 = por %p43, %p44
    %p47 = scmp.ne.s32.totalorder %s30, %s46
    %p48 = scmp.eq.s32.totalorder %s22, 0
    %p49 = por %p47, %p48
    %s51 = sadd.s32 %s50, 1
    %p54 = scmp.eq.s32.totalorder %s16, 1
    %p55 = scmp.ne.s32.totalorder %s50, %s52
    %p56 = scmp.eq.s32.totalorder %s16, 0
    %p57 = por %p55, %p56
    %p58 = scmp.ne.s32.totalorder %s50, %s52
    %p59 = scmp.eq.s32.totalorder %s21, 1
    %p60 = por %p58, %p59
    %p61 = scmp.ne.s32.totalorder %s52, %s53
    %p62 = scmp.eq.s32.totalorder %s21, 0
    %p63 = por %p61, %p62
    %p64 = scmp.ne.s32.totalorder %s52, %s53
    %p65 = scmp.eq.s32.totalorder %s22, 1
    %p66 = por %p64, %p65
    %p68 = scmp.ne.s32.totalorder %s53, %s67
    %p69 = scmp.eq.s32.totalorder %s22, 0
    %p70 = por %p68, %p69
    %s72 = sadd.s32 %s71, 1
    %p75 = scmp.eq.s32.totalorder %s16, 1
    %p76 = scmp.ne.s32.totalorder %s71, %s73
    %p77 = scmp.eq.s32.totalorder %s16, 0
    %p78 = por %p76, %p77
    %p79 = scmp.ne.s32.totalorder %s71, %s73
    %p80 = scmp.eq.s32.totalorder %s21, 1
    %p81 = por %p79, %p80
    %p82 = scmp.ne.s32.totalorder %s73, %s74
    %p83 = scmp.eq.s32.totalorder %s21, 0
    %p84 = por %p82, %p83
    %p85 = scmp.ne.s32.totalorder %s73, %s74
    %p86 = scmp.eq.s32.totalorder %s22, 1
    %p87 = por %p85, %p86
    %p89 = scmp.ne.s32.totalorder %s74, %s88
    %p90 = scmp.eq.s32.totalorder %s22, 0
    %p91 = por %p89, %p90
    %s93 = sadd.s32 %s92, 1
    %p96 = scmp.eq.s32.totalorder %s16, 1
    %p97 = scmp.ne.s32.totalorder %s92, %s94
    %p98 = scmp.eq.s32.totalorder %s16, 0
    %p99 = por %p97, %p98
    %p100 = scmp.ne.s32.totalorder %s92, %s94
    %p101 = scmp.eq.s32.totalorder %s21, 1
    %p102 = por %p100, %p101
    %p103 = scmp.ne.s32.totalorder %s94, %s95
    %p104 = scmp.eq.s32.totalorder %s21, 0
    %p105 = por %p103, %p104
    %p106 = scmp.ne.s32.totalorder %s94, %s95
    %p107 = scmp.eq.s32.totalorder %s22, 1
    %p108 = por %p106, %p107
    %p110 = scmp.ne.s32.totalorder %s95, %s109
    %p111 = scmp.eq.s32.totalorder %s22, 0
    %p112 = por %p110, %p111
    %s114 = sadd.s32 %s113, 1
    %p117 = scmp.eq.s32.totalorder %s16, 1
    %p118 = scmp.ne.s32.totalorder %s113, %s115
    %p119 = scmp.eq.s32.totalorder %s16, 0
    %p120 = por %p118, %p119
    %p121 = scmp.ne.s32.totalorder %s113, %s115
    %p122 = scmp.eq.s32.totalorder %s21, 1
    %p123 = por %p121, %p122
    %p124 = scmp.ne.s32.totalorder %s115, %s116
    %p125 = scmp.eq.s32.totalorder %s21, 0
    %p126 = por %p124, %p125
    %p127 = scmp.ne.s32.totalorder %s115, %s116
    %p128 = scmp.eq.s32.totalorder %s22, 1
    %p129 = por %p127, %p128
    %p131 = scmp.ne.s32.totalorder %s116, %s130
    %p132 = scmp.eq.s32.totalorder %s22, 0
    %p133 = por %p131, %p132
    %s135 = sadd.s32 %s134, 1
    %p138 = scmp.eq.s32.totalorder %s16, 1
    %p139 = scmp.ne.s32.totalorder %s134, %s136
    %p140 = scmp.eq.s32.totalorder %s16, 0
    %p141 = por %p139, %p140
    %p142 = scmp.ne.s32.totalorder %s134, %s136
    %p143 = scmp.eq.s32.totalorder %s21, 1
    %p144 = por %p142, %p143
    %p145 = scmp.ne.s32.totalorder %s136, %s137
    %p146 = scmp.eq.s32.totalorder %s21, 0
    %p147 = por %p145, %p146
    %p148 = scmp.ne.s32.totalorder %s136, %s137
    %p149 = scmp.eq.s32.totalorder %s22, 1
    %p150 = por %p148, %p149
    %p152 = scmp.ne.s32.totalorder %s137, %s151
    %p153 = scmp.eq.s32.totalorder %s22, 0
    %p154 = por %p152, %p153
    %s156 = sadd.s32 %s155, 1
    %p159 = scmp.eq.s32.totalorder %s16, 1
    %p160 = scmp.ne.s32.totalorder %s155, %s157
    %p161 = scmp.eq.s32.totalorder %s16, 0
    %p162 = por %p160, %p161
    %p163 = scmp.ne.s32.totalorder %s155, %s157
    %p164 = scmp.eq.s32.totalorder %s21, 1
    %p165 = por %p163, %p164
    %p166 = scmp.ne.s32.totalorder %s157, %s158
    %p167 = scmp.eq.s32.totalorder %s21, 0
    %p168 = por %p166, %p167
    %p169 = scmp.ne.s32.totalorder %s157, %s158
    %p170 = scmp.eq.s32.totalorder %s22, 1
    %p171 = por %p169, %p170
    %p173 = scmp.ne.s32.totalorder %s158, %s172
    %p174 = scmp.eq.s32.totalorder %s22, 0
    %p175 = por %p173, %p174
    %s177 = sadd.s32 %s176, 1
    %p180 = scmp.eq.s32.totalorder %s16, 1
    %p181 = scmp.ne.s32.totalorder %s176, %s178
    %p182 = scmp.eq.s32.totalorder %s16, 0
    %p183 = por %p181, %p182
    %p184 = scmp.ne.s32.totalorder %s176, %s178
    %p185 = scmp.eq.s32.totalorder %s21, 1
    %p186 = por %p184, %p185
    %p187 = scmp.ne.s32.totalorder %s178, %s179
    %p188 = scmp.eq.s32.totalorder %s21, 0
    %p189 = por %p187, %p188
    %p190 = scmp.ne.s32.totalorder %s178, %s179
    %p191 = scmp.eq.s32.totalorder %s22, 1
    %p192 = por %p190, %p191
    %p194 = scmp.ne.s32.totalorder %s179, %s193
    %p195 = scmp.eq.s32.totalorder %s22, 0
    %p196 = por %p194, %p195
    %s198 = sadd.s32 %s197, 1
    %p201 = scmp.eq.s32.totalorder %s16, 1
    %p202 = scmp.ne.s32.totalorder %s197, %s199
    %p203 = scmp.eq.s32.totalorder %s16, 0
    %p204 = por %p202, %p203
    %p205 = scmp.ne.s32.totalorder %s197, %s199
    %p206 = scmp.eq.s32.totalorder %s21, 1
    %p207 = por %p205, %p206
    %p208 = scmp.ne.s32.totalorder %s199, %s200
    %p209 = scmp.eq.s32.totalorder %s21, 0
    %p210 = por %p208, %p209
    %p211 = scmp.ne.s32.totalorder %s199, %s200
    %p212 = scmp.eq.s32.totalorder %s22, 1
    %p213 = por %p211, %p212
    %p215 = scmp.ne.s32.totalorder %s200, %s214
    %p216 = scmp.eq.s32.totalorder %s22, 0
    %p217 = por %p215, %p216
    %s219 = sadd.s32 %s218, 1
    %p222 = scmp.eq.s32.totalorder %s16, 1
    %p223 = scmp.ne.s32.totalorder %s218, %s220
    %p224 = scmp.eq.s32.totalorder %s16, 0
    %p225 = por %p223, %p224
    %p226 = scmp.ne.s32.totalorder %s218, %s220
    %p227 = scmp.eq.s32.totalorder %s21, 1
    %p228 = por %p226, %p227
    %p229 = scmp.ne.s32.totalorder %s220, %s221
    %p230 = scmp.eq.s32.totalorder %s21, 0
    %p231 = por %p229, %p230
    %p232 = scmp.ne.s32.totalorder %s220, %s221
    %p233 = scmp.eq.s32.totalorder %s22, 1
    %p234 = por %p232, %p233
    %p236 = scmp.ne.s32.totalorder %s221, %s235
    %p237 = scmp.eq.s32.totalorder %s22, 0
    %p238 = por %p236, %p237
    %s239 = ssub.s32 %s16, %s23
    %p240 = scmp.eq.s32.totalorder %s239, 0
    %s242 = sadd.s32 %s241, 1
    %s243 = scalar_select %p240, %s241, %s242
    %p246 = pneg %p240
    %p247 = scmp.eq.s32.totalorder %s16, 1
    %p248 = por %p246, %p247
    %p249 = scmp.ne.s32.totalorder %s241, %s244
    %p250 = scmp.eq.s32.totalorder %s16, 0
    %p251 = por %p249, %p250
    %p252 = scmp.ne.s32.totalorder %s241, %s244
    %p253 = scmp.eq.s32.totalorder %s21, 1
    %p254 = por %p252, %p253
    %p255 = scmp.ne.s32.totalorder %s244, %s245
    %p256 = scmp.eq.s32.totalorder %s21, 0
    %p257 = por %p255, %p256
    %p258 = scmp.ne.s32.totalorder %s244, %s245
    %p259 = scmp.eq.s32.totalorder %s22, 1
    %p260 = por %p258, %p259
    %p262 = scmp.ne.s32.totalorder %s245, %s261
    %p263 = scmp.eq.s32.totalorder %s22, 0
    %p264 = por %p262, %p263
    %p265 = scmp.le.s32.totalorder 1, %s16
    %p266 = scmp.lt.s32.totalorder %s16, 3
    %p267 = pnand %p265, %p266
    %p268 = pneg %p267
    // Predicated region
    $region9: #{autoencoder_forward.1} parent=5 // pred_check
      _
    $region10: #{autoencoder_forward.1} parent=5 // pred_check_branch
      %270 = sbr.rel (%p267) target = $region12
    $region11: #{autoencoder_forward.1} parent=5 // pred_region
      %s271 = ssub.s32 %s16, 1
      // Predicated region
      $region13: #{autoencoder_forward.1} parent=11 // pred_check
        %p272 = pneg %p63
      $region14: #{autoencoder_forward.1} parent=11 // pred_check_branch
        %274 = sbr.rel (%p272) target = $region16
      $region15: #{autoencoder_forward.1} parent=11 // pred_region
        _
      $region16: #{autoencoder_forward.1} parent=11 // pred_fallthru
        _
      // Predicated region
      $region17: #{autoencoder_forward.1} parent=11 // pred_check
        %p275 = pneg %p84
      $region18: #{autoencoder_forward.1} parent=11 // pred_check_branch
        %277 = sbr.rel (%p275) target = $region20
      $region19: #{autoencoder_forward.1} parent=11 // pred_region
        _
      $region20: #{autoencoder_forward.1} parent=11 // pred_fallthru
        _
      // Predicated region
      $region21: #{autoencoder_forward.1} parent=11 // pred_check
        %p278 = pneg %p105
      $region22: #{autoencoder_forward.1} parent=11 // pred_check_branch
        %280 = sbr.rel (%p278) target = $region24
      $region23: #{autoencoder_forward.1} parent=11 // pred_region
        _
      $region24: #{autoencoder_forward.1} parent=11 // pred_fallthru
        _
      // Predicated region
      $region25: #{autoencoder_forward.1} parent=11 // pred_check
        %p281 = pneg %p126
      $region26: #{autoencoder_forward.1} parent=11 // pred_check_branch
        %283 = sbr.rel (%p281) target = $region28
      $region27: #{autoencoder_forward.1} parent=11 // pred_region
        _
      $region28: #{autoencoder_forward.1} parent=11 // pred_fallthru
        _
      // Predicated region
      $region29: #{autoencoder_forward.1} parent=11 // pred_check
        %p284 = pneg %p147
      $region30: #{autoencoder_forward.1} parent=11 // pred_check_branch
        %286 = sbr.rel (%p284) target = $region32
      $region31: #{autoencoder_forward.1} parent=11 // pred_region
        _
      $region32: #{autoencoder_forward.1} parent=11 // pred_fallthru
        _
      // Predicated region
      $region33: #{autoencoder_forward.1} parent=11 // pred_check
        %p287 = pneg %p168
      $region34: #{autoencoder_forward.1} parent=11 // pred_check_branch
        %289 = sbr.rel (%p287) target = $region36
      $region35: #{autoencoder_forward.1} parent=11 // pred_region
        _
      $region36: #{autoencoder_forward.1} parent=11 // pred_fallthru
        _
      // Predicated region
      $region37: #{autoencoder_forward.1} parent=11 // pred_check
        %p290 = pneg %p189
      $region38: #{autoencoder_forward.1} parent=11 // pred_check_branch
        %292 = sbr.rel (%p290) target = $region40
      $region39: #{autoencoder_forward.1} parent=11 // pred_region
        _
      $region40: #{autoencoder_forward.1} parent=11 // pred_fallthru
        _
      // Predicated region
      $region41: #{autoencoder_forward.1} parent=11 // pred_check
        %p293 = pneg %p210
      $region42: #{autoencoder_forward.1} parent=11 // pred_check_branch
        %295 = sbr.rel (%p293) target = $region44
      $region43: #{autoencoder_forward.1} parent=11 // pred_region
        _
      $region44: #{autoencoder_forward.1} parent=11 // pred_fallthru
        _
      // Predicated region
      $region45: #{autoencoder_forward.1} parent=11 // pred_check
        %p296 = pneg %p231
      $region46: #{autoencoder_forward.1} parent=11 // pred_check_branch
        %298 = sbr.rel (%p296) target = $region48
      $region47: #{autoencoder_forward.1} parent=11 // pred_region
        _
      $region48: #{autoencoder_forward.1} parent=11 // pred_fallthru
        _
    $region12: #{autoencoder_forward.1} parent=5 // pred_fallthru
      _
    %p299 = scmp.lt.s32.totalorder %s16, 2
    // Predicated region
    $region49: #{autoencoder_forward.1} parent=5 // pred_check
      %p300 = pneg %p299
    $region50: #{autoencoder_forward.1} parent=5 // pred_check_branch
      %302 = sbr.rel (%p300) target = $region52
    $region51: #{autoencoder_forward.1} parent=5 // pred_region
      // Predicated region
      $region53: #{autoencoder_forward.1} parent=51 // pred_check
        %p303 = pneg %p36
      $region54: #{autoencoder_forward.1} parent=51 // pred_check_branch
        %305 = sbr.rel (%p303) target = $region56
      $region55: #{autoencoder_forward.1} parent=51 // pred_region
        %s306 = smul.u32 32, %s16
        %p307 = scmp.lt.s32.totalorder %s306, 63
        %s308 = scalar_select %p307, %s306, 63
        %s309 = smul.addr %s308, 7
        %s310 = smul.addr %s309, 8
        %s311 = scalar_lea.vmem %s0, %s310
        %s312 = smul.u32 32, %s16
      $region56: #{autoencoder_forward.1} parent=51 // pred_fallthru
        _
    $region52: #{autoencoder_forward.1} parent=5 // pred_fallthru
      _
    %p313 = scmp.le.s32.totalorder 1, %s16
    %p314 = scmp.lt.s32.totalorder %s16, 3
    %p315 = pnand %p313, %p314
    %p316 = pneg %p315
    // Predicated region
    $region57: #{autoencoder_forward.1} parent=5 // pred_check
      _
    $region58: #{autoencoder_forward.1} parent=5 // pred_check_branch
      %318 = sbr.rel (%p315) target = $region60
    $region59: #{autoencoder_forward.1} parent=5 // pred_region
      %s319 = ssub.s32 %s16, 1
      %s320 = smul.u32 32, %s21
      %p321 = scmp.lt.s32.totalorder %s320, 63
      %s322 = scalar_select %p321, %s320, 63
      %s323 = smul.addr %s322, 7
      %s324 = smul.addr %s323, 8
      %s325 = scalar_lea.vmem %s0, %s324
      %p326 = pneg %p42
      %p327 = pneg %p39
      %p328 = pneg %p63
      %p329 = pneg %p60
      %p330 = pneg %p84
      %p331 = pneg %p81
      %p332 = pneg %p105
      %p333 = pneg %p102
      %p334 = pneg %p126
      %p335 = pneg %p123
      %p336 = pneg %p147
      %p337 = pneg %p144
      %p338 = pneg %p168
      %p339 = pneg %p165
      %p340 = pneg %p189
      %p341 = pneg %p186
      %p342 = pneg %p210
      %p343 = pneg %p207
      %p344 = pneg %p231
      %p345 = pneg %p228
      %p346 = pneg %p257
      %p347 = pneg %p254
      %s348 = smul.u32 32, %s21
      %p349 = scmp.lt.s32.totalorder %s348, 63
      %s350 = scalar_select %p349, %s348, 63
      %s351 = smul.addr %s350, 7
      %s352 = smul.addr %s351, 8
      %s353 = scalar_lea.vmem %s10, %s352
      %s354 = smul.u32 32, %s21
      %p355 = scmp.lt.s32.totalorder %s354, 63
      %s356 = scalar_select %p355, %s354, 63
      %s357 = smul.addr %s356, 7
      %s358 = smul.addr %s357, 8
      %s359 = scalar_lea.vmem %s0, %s358
      %s360 = smul.u32 32, %s21
      %s361 = smul.u32 32, %s21
      %p362 = scmp.lt.s32.totalorder %s361, 63
      %s363 = scalar_select %p362, %s361, 63
      %s364 = smul.addr %s363, 7
      %s365 = smul.addr %s364, 8
      %s366 = scalar_lea.vmem %s10, %s365
      %s367 = smul.u32 32, %s21
      %v369 = vld [vmem:[%s359] sm:$0xff]
      %v370 = vld [vmem:[%s359 + $0x8] sm:$0xff]
      %v371 = vld [vmem:[%s359 + $0x10] sm:$0xff]
      %v372 = vld [vmem:[%s359 + $0x18] sm:$0xff]
      %v373 = vld [vmem:[%s359 + $0x20] sm:$0xff]
      %v374 = vld [vmem:[%s359 + $0x28] sm:$0xff]
      %v375 = vld [vmem:[%s359 + $0x30] sm:$0xff]
      %v376 = vld [vmem:[%s359 + $0x38] sm:$0xff]
      %v377 = vld [vmem:[%s359 + $0x40] sm:$0xff]
      %v378 = vld [vmem:[%s359 + $0x48] sm:$0xff]
      %v379 = vld [vmem:[%s359 + $0x50] sm:$0xff]
      %v380 = vld [vmem:[%s359 + $0x58] sm:$0xff]
      %v381 = vld [vmem:[%s359 + $0x60] sm:$0xff]
      %v382 = vld [vmem:[%s359 + $0x68] sm:$0xff]
      %v383 = vld [vmem:[%s359 + $0x70] sm:$0xff]
      %v384 = vld [vmem:[%s359 + $0x78] sm:$0xff]
      %v385 = vld [vmem:[%s359 + $0x80] sm:$0xff]
      %v386 = vld [vmem:[%s359 + $0x88] sm:$0xff]
      %v387 = vld [vmem:[%s359 + $0x90] sm:$0xff]
      %v388 = vld [vmem:[%s359 + $0x98] sm:$0xff]
      %v389 = vld [vmem:[%s359 + $0xa0] sm:$0xff]
      %v390 = vld [vmem:[%s359 + $0xa8] sm:$0xff]
      %v391 = vld [vmem:[%s359 + $0xb0] sm:$0xff]
      %v392 = vld [vmem:[%s359 + $0xb8] sm:$0xff]
      %v393 = vld [vmem:[%s359 + $0xc0] sm:$0xff]
      %v394 = vld [vmem:[%s359 + $0xc8] sm:$0xff]
      %v395 = vld [vmem:[%s359 + $0xd0] sm:$0xff]
      %v396 = vld [vmem:[%s359 + $0xd8] sm:$0xff]
      %v397 = vld [vmem:[%s359 + $0xe0] sm:$0xff]
      %v398 = vld [vmem:[%s359 + $0xe8] sm:$0xff]
      %v399 = vld [vmem:[%s359 + $0xf0] sm:$0xff]
      %v400 = vld [vmem:[%s359 + $0xf8] sm:$0xff]
      %v401 = vld [vmem:[%s359 + $0x100] sm:$0xff]
      %v402 = vld [vmem:[%s359 + $0x108] sm:$0xff]
      %v403 = vld [vmem:[%s359 + $0x110] sm:$0xff]
      %v404 = vld [vmem:[%s359 + $0x118] sm:$0xff]
      %v405 = vld [vmem:[%s359 + $0x120] sm:$0xff]
      %v406 = vld [vmem:[%s359 + $0x128] sm:$0xff]
      %v407 = vld [vmem:[%s359 + $0x130] sm:$0xff]
      %v408 = vld [vmem:[%s359 + $0x138] sm:$0xff]
      %v409 = vld [vmem:[%s359 + $0x140] sm:$0xff]
      %v410 = vld [vmem:[%s359 + $0x148] sm:$0xff]
      %v411 = vld [vmem:[%s359 + $0x150] sm:$0xff]
      %v412 = vld [vmem:[%s359 + $0x158] sm:$0xff]
      %v413 = vld [vmem:[%s359 + $0x160] sm:$0xff]
      %v414 = vld [vmem:[%s359 + $0x168] sm:$0xff]
      %v415 = vld [vmem:[%s359 + $0x170] sm:$0xff]
      %v416 = vld [vmem:[%s359 + $0x178] sm:$0xff]
      %v417 = vld [vmem:[%s359 + $0x180] sm:$0xff]
      %v418 = vld [vmem:[%s359 + $0x188] sm:$0xff]
      %v419 = vld [vmem:[%s359 + $0x190] sm:$0xff]
      %v420 = vld [vmem:[%s359 + $0x198] sm:$0xff]
      %v421 = vld [vmem:[%s359 + $0x1a0] sm:$0xff]
      %v422 = vld [vmem:[%s359 + $0x1a8] sm:$0xff]
      %v423 = vld [vmem:[%s359 + $0x1b0] sm:$0xff]
      %v424 = vld [vmem:[%s359 + $0x1b8] sm:$0xff]
      %v425 = vld [vmem:[%s359 + $0x1c0] sm:$0xff]
      %v426 = vld [vmem:[%s359 + $0x1c8] sm:$0xff]
      %v427 = vld [vmem:[%s359 + $0x1d0] sm:$0xff]
      %v428 = vld [vmem:[%s359 + $0x1d8] sm:$0xff]
      %v429 = vld [vmem:[%s359 + $0x1e0] sm:$0xff]
      %v430 = vld [vmem:[%s359 + $0x1e8] sm:$0xff]
      %v431 = vld [vmem:[%s359 + $0x1f0] sm:$0xff]
      %v432 = vld [vmem:[%s359 + $0x1f8] sm:$0xff]
      %v433 = vld [vmem:[%s359 + $0x200] sm:$0xff]
      %v434 = vld [vmem:[%s359 + $0x208] sm:$0xff]
      %v435 = vld [vmem:[%s359 + $0x210] sm:$0xff]
      %v436 = vld [vmem:[%s359 + $0x218] sm:$0xff]
      %v437 = vld [vmem:[%s359 + $0x220] sm:$0xff]
      %v438 = vld [vmem:[%s359 + $0x228] sm:$0xff]
      %v439 = vld [vmem:[%s359 + $0x230] sm:$0xff]
      %v440 = vld [vmem:[%s359 + $0x238] sm:$0xff]
      %v441 = vld [vmem:[%s359 + $0x240] sm:$0xff]
      %v442 = vld [vmem:[%s359 + $0x248] sm:$0xff]
      %v443 = vld [vmem:[%s359 + $0x250] sm:$0xff]
      %v444 = vld [vmem:[%s359 + $0x258] sm:$0xff]
      %v445 = vld [vmem:[%s359 + $0x260] sm:$0xff]
      %v446 = vld [vmem:[%s359 + $0x268] sm:$0xff]
      %v447 = vld [vmem:[%s359 + $0x270] sm:$0xff]
      %v448 = vld [vmem:[%s359 + $0x278] sm:$0xff]
      %v449 = vld [vmem:[%s359 + $0x280] sm:$0xff]
      %v450 = vld [vmem:[%s359 + $0x288] sm:$0xff]
      %v451 = vld [vmem:[%s359 + $0x290] sm:$0xff]
      %v452 = vld [vmem:[%s359 + $0x298] sm:$0xff]
      %v453 = vld [vmem:[%s359 + $0x2a0] sm:$0xff]
      %v454 = vld [vmem:[%s359 + $0x2a8] sm:$0xff]
      %v455 = vld [vmem:[%s359 + $0x2b0] sm:$0xff]
      %v456 = vld [vmem:[%s359 + $0x2b8] sm:$0xff]
      %v457 = vld [vmem:[%s359 + $0x2c0] sm:$0xff]
      %v458 = vld [vmem:[%s359 + $0x2c8] sm:$0xff]
      %v459 = vld [vmem:[%s359 + $0x2d0] sm:$0xff]
      %v460 = vld [vmem:[%s359 + $0x2d8] sm:$0xff]
      %v461 = vld [vmem:[%s359 + $0x2e0] sm:$0xff]
      %v462 = vld [vmem:[%s359 + $0x2e8] sm:$0xff]
      %v463 = vld [vmem:[%s359 + $0x2f0] sm:$0xff]
      %v464 = vld [vmem:[%s359 + $0x2f8] sm:$0xff]
      %v465 = vld [vmem:[%s359 + $0x300] sm:$0xff]
      %v466 = vld [vmem:[%s359 + $0x308] sm:$0xff]
      %v467 = vld [vmem:[%s359 + $0x310] sm:$0xff]
      %v468 = vld [vmem:[%s359 + $0x318] sm:$0xff]
      %v469 = vld [vmem:[%s359 + $0x320] sm:$0xff]
      %v470 = vld [vmem:[%s359 + $0x328] sm:$0xff]
      %v471 = vld [vmem:[%s359 + $0x330] sm:$0xff]
      %v472 = vld [vmem:[%s359 + $0x338] sm:$0xff]
      %v473 = vld [vmem:[%s359 + $0x340] sm:$0xff]
      %v474 = vld [vmem:[%s359 + $0x348] sm:$0xff]
      %v475 = vld [vmem:[%s359 + $0x350] sm:$0xff]
      %v476 = vld [vmem:[%s359 + $0x358] sm:$0xff]
      %v477 = vld [vmem:[%s359 + $0x360] sm:$0xff]
      %v478 = vld [vmem:[%s359 + $0x368] sm:$0xff]
      %v479 = vld [vmem:[%s359 + $0x370] sm:$0xff]
      %v480 = vld [vmem:[%s359 + $0x378] sm:$0xff]
      %v481 = vld [vmem:[%s359 + $0x380] sm:$0xff]
      %v482 = vld [vmem:[%s359 + $0x388] sm:$0xff]
      %v483 = vld [vmem:[%s359 + $0x390] sm:$0xff]
      %v484 = vld [vmem:[%s359 + $0x398] sm:$0xff]
      %v485 = vld [vmem:[%s359 + $0x3a0] sm:$0xff]
      %v486 = vld [vmem:[%s359 + $0x3a8] sm:$0xff]
      %v487 = vld [vmem:[%s359 + $0x3b0] sm:$0xff]
      %v488 = vld [vmem:[%s359 + $0x3b8] sm:$0xff]
      %v489 = vld [vmem:[%s359 + $0x3c0] sm:$0xff]
      %v490 = vld [vmem:[%s359 + $0x3c8] sm:$0xff]
      %v491 = vld [vmem:[%s359 + $0x3d0] sm:$0xff]
      %v492 = vld [vmem:[%s359 + $0x3d8] sm:$0xff]
      %v493 = vld [vmem:[%s359 + $0x3e0] sm:$0xff]
      %v494 = vld [vmem:[%s359 + $0x3e8] sm:$0xff]
      %v495 = vld [vmem:[%s359 + $0x3f0] sm:$0xff]
      %v496 = vld [vmem:[%s359 + $0x3f8] sm:$0xff]
      %v497 = vld [vmem:[%s359 + $0x400] sm:$0xff]
      %v498 = vld [vmem:[%s359 + $0x408] sm:$0xff]
      %v499 = vld [vmem:[%s359 + $0x410] sm:$0xff]
      %v500 = vld [vmem:[%s359 + $0x418] sm:$0xff]
      %v501 = vld [vmem:[%s359 + $0x420] sm:$0xff]
      %v502 = vld [vmem:[%s359 + $0x428] sm:$0xff]
      %v503 = vld [vmem:[%s359 + $0x430] sm:$0xff]
      %v504 = vld [vmem:[%s359 + $0x438] sm:$0xff]
      %v505 = vld [vmem:[%s359 + $0x440] sm:$0xff]
      %v506 = vld [vmem:[%s359 + $0x448] sm:$0xff]
      %v507 = vld [vmem:[%s359 + $0x450] sm:$0xff]
      %v508 = vld [vmem:[%s359 + $0x458] sm:$0xff]
      %v509 = vld [vmem:[%s359 + $0x460] sm:$0xff]
      %v510 = vld [vmem:[%s359 + $0x468] sm:$0xff]
      %v511 = vld [vmem:[%s359 + $0x470] sm:$0xff]
      %v512 = vld [vmem:[%s359 + $0x478] sm:$0xff]
      %v513 = vld [vmem:[%s359 + $0x480] sm:$0xff]
      %v514 = vld [vmem:[%s359 + $0x488] sm:$0xff]
      %v515 = vld [vmem:[%s359 + $0x490] sm:$0xff]
      %v516 = vld [vmem:[%s359 + $0x498] sm:$0xff]
      %v517 = vld [vmem:[%s359 + $0x4a0] sm:$0xff]
      %v518 = vld [vmem:[%s359 + $0x4a8] sm:$0xff]
      %v519 = vld [vmem:[%s359 + $0x4b0] sm:$0xff]
      %v520 = vld [vmem:[%s359 + $0x4b8] sm:$0xff]
      %v521 = vld [vmem:[%s359 + $0x4c0] sm:$0xff]
      %v522 = vld [vmem:[%s359 + $0x4c8] sm:$0xff]
      %v523 = vld [vmem:[%s359 + $0x4d0] sm:$0xff]
      %v524 = vld [vmem:[%s359 + $0x4d8] sm:$0xff]
      %v525 = vld [vmem:[%s359 + $0x4e0] sm:$0xff]
      %v526 = vld [vmem:[%s359 + $0x4e8] sm:$0xff]
      %v527 = vld [vmem:[%s359 + $0x4f0] sm:$0xff]
      %v528 = vld [vmem:[%s359 + $0x4f8] sm:$0xff]
      %v529 = vld [vmem:[%s359 + $0x500] sm:$0xff]
      %v530 = vld [vmem:[%s359 + $0x508] sm:$0xff]
      %v531 = vld [vmem:[%s359 + $0x510] sm:$0xff]
      %v532 = vld [vmem:[%s359 + $0x518] sm:$0xff]
      %v533 = vld [vmem:[%s359 + $0x520] sm:$0xff]
      %v534 = vld [vmem:[%s359 + $0x528] sm:$0xff]
      %v535 = vld [vmem:[%s359 + $0x530] sm:$0xff]
      %v536 = vld [vmem:[%s359 + $0x538] sm:$0xff]
      %v537 = vld [vmem:[%s359 + $0x540] sm:$0xff]
      %v538 = vld [vmem:[%s359 + $0x548] sm:$0xff]
      %v539 = vld [vmem:[%s359 + $0x550] sm:$0xff]
      %v540 = vld [vmem:[%s359 + $0x558] sm:$0xff]
      %v541 = vld [vmem:[%s359 + $0x560] sm:$0xff]
      %v542 = vld [vmem:[%s359 + $0x568] sm:$0xff]
      %v543 = vld [vmem:[%s359 + $0x570] sm:$0xff]
      %v544 = vld [vmem:[%s359 + $0x578] sm:$0xff]
      %v545 = vld [vmem:[%s359 + $0x580] sm:$0xff]
      %v546 = vld [vmem:[%s359 + $0x588] sm:$0xff]
      %v547 = vld [vmem:[%s359 + $0x590] sm:$0xff]
      %v548 = vld [vmem:[%s359 + $0x598] sm:$0xff]
      %v549 = vld [vmem:[%s359 + $0x5a0] sm:$0xff]
      %v550 = vld [vmem:[%s359 + $0x5a8] sm:$0xff]
      %v551 = vld [vmem:[%s359 + $0x5b0] sm:$0xff]
      %v552 = vld [vmem:[%s359 + $0x5b8] sm:$0xff]
      %v553 = vld [vmem:[%s359 + $0x5c0] sm:$0xff]
      %v554 = vld [vmem:[%s359 + $0x5c8] sm:$0xff]
      %v555 = vld [vmem:[%s359 + $0x5d0] sm:$0xff]
      %v556 = vld [vmem:[%s359 + $0x5d8] sm:$0xff]
      %v557 = vld [vmem:[%s359 + $0x5e0] sm:$0xff]
      %v558 = vld [vmem:[%s359 + $0x5e8] sm:$0xff]
      %v559 = vld [vmem:[%s359 + $0x5f0] sm:$0xff]
      %v560 = vld [vmem:[%s359 + $0x5f8] sm:$0xff]
      %v561 = vld [vmem:[%s359 + $0x600] sm:$0xff]
      %v562 = vld [vmem:[%s359 + $0x608] sm:$0xff]
      %v563 = vld [vmem:[%s359 + $0x610] sm:$0xff]
      %v564 = vld [vmem:[%s359 + $0x618] sm:$0xff]
      %v565 = vld [vmem:[%s359 + $0x620] sm:$0xff]
      %v566 = vld [vmem:[%s359 + $0x628] sm:$0xff]
      %v567 = vld [vmem:[%s359 + $0x630] sm:$0xff]
      %v568 = vld [vmem:[%s359 + $0x638] sm:$0xff]
      %v569 = vld [vmem:[%s359 + $0x640] sm:$0xff]
      %v570 = vld [vmem:[%s359 + $0x648] sm:$0xff]
      %v571 = vld [vmem:[%s359 + $0x650] sm:$0xff]
      %v572 = vld [vmem:[%s359 + $0x658] sm:$0xff]
      %v573 = vld [vmem:[%s359 + $0x660] sm:$0xff]
      %v574 = vld [vmem:[%s359 + $0x668] sm:$0xff]
      %v575 = vld [vmem:[%s359 + $0x670] sm:$0xff]
      %v576 = vld [vmem:[%s359 + $0x678] sm:$0xff]
      %v577 = vld [vmem:[%s359 + $0x680] sm:$0xff]
      %v578 = vld [vmem:[%s359 + $0x688] sm:$0xff]
      %v579 = vld [vmem:[%s359 + $0x690] sm:$0xff]
      %v580 = vld [vmem:[%s359 + $0x698] sm:$0xff]
      %v581 = vld [vmem:[%s359 + $0x6a0] sm:$0xff]
      %v582 = vld [vmem:[%s359 + $0x6a8] sm:$0xff]
      %v583 = vld [vmem:[%s359 + $0x6b0] sm:$0xff]
      %v584 = vld [vmem:[%s359 + $0x6b8] sm:$0xff]
      %v585 = vld [vmem:[%s359 + $0x6c0] sm:$0xff]
      %v586 = vld [vmem:[%s359 + $0x6c8] sm:$0xff]
      %v587 = vld [vmem:[%s359 + $0x6d0] sm:$0xff]
      %v588 = vld [vmem:[%s359 + $0x6d8] sm:$0xff]
      %v589 = vld [vmem:[%s359 + $0x6e0] sm:$0xff]
      %v590 = vld [vmem:[%s359 + $0x6e8] sm:$0xff]
      %v591 = vld [vmem:[%s359 + $0x6f0] sm:$0xff]
      %v592 = vld [vmem:[%s359 + $0x6f8] sm:$0xff]
      %v593 = vld [vmem:[%s1] sm:$0xf]
      %v594 = vld [vmem:[%s1 + $0x4] sm:$0xf]
      %v595 = vld [vmem:[%s1 + $0x8] sm:$0xf]
      %v596 = vld [vmem:[%s1 + $0xc] sm:$0xf]
      %v597 = vld [vmem:[%s1 + $0x10] sm:$0xf]
      %v598 = vld [vmem:[%s1 + $0x14] sm:$0xf]
      %v599 = vld [vmem:[%s1 + $0x18] sm:$0xf]
      %v600 = vld [vmem:[%s1 + $0x1c] sm:$0xf]
      %v601 = vld [vmem:[%s1 + $0x20] sm:$0xf]
      %v602 = vld [vmem:[%s1 + $0x24] sm:$0xf]
      %v603 = vld [vmem:[%s1 + $0x28] sm:$0xf]
      %v604 = vld [vmem:[%s1 + $0x2c] sm:$0xf]
      %v605 = vld [vmem:[%s1 + $0x30] sm:$0xf]
      %v606 = vld [vmem:[%s1 + $0x34] sm:$0xf]
      %v607 = vld [vmem:[%s1 + $0x38] sm:$0xf]
      %v608 = vld [vmem:[%s1 + $0x3c] sm:$0xf]
      %v609 = vld [vmem:[%s1 + $0x40] sm:$0xf]
      %v610 = vld [vmem:[%s1 + $0x44] sm:$0xf]
      %v611 = vld [vmem:[%s1 + $0x48] sm:$0xf]
      %v612 = vld [vmem:[%s1 + $0x4c] sm:$0xf]
      %v613 = vld [vmem:[%s1 + $0x50] sm:$0xf]
      %v614 = vld [vmem:[%s1 + $0x54] sm:$0xf]
      %v615 = vld [vmem:[%s1 + $0x58] sm:$0xf]
      %v616 = vld [vmem:[%s1 + $0x5c] sm:$0xf]
      %v617 = vld [vmem:[%s1 + $0x60] sm:$0xf]
      %v618 = vld [vmem:[%s1 + $0x64] sm:$0xf]
      %v619 = vld [vmem:[%s1 + $0x68] sm:$0xf]
      %v620 = vld [vmem:[%s1 + $0x6c] sm:$0xf]
      %v621 = vld [vmem:[%s1 + $0x70] sm:$0xf]
      %v622 = vld [vmem:[%s1 + $0x74] sm:$0xf]
      %v623 = vld [vmem:[%s1 + $0x78] sm:$0xf]
      %v624 = vld [vmem:[%s1 + $0x7c] sm:$0xf]
      %v625 = vld [vmem:[%s1 + $0x80] sm:$0xf]
      %v626 = vld [vmem:[%s1 + $0x84] sm:$0xf]
      %v627 = vld [vmem:[%s1 + $0x88] sm:$0xf]
      %v628 = vld [vmem:[%s1 + $0x8c] sm:$0xf]
      %v629 = vld [vmem:[%s1 + $0x90] sm:$0xf]
      %v630 = vld [vmem:[%s1 + $0x94] sm:$0xf]
      %v631 = vld [vmem:[%s1 + $0x98] sm:$0xf]
      %v632 = vld [vmem:[%s1 + $0x9c] sm:$0xf]
      %v633 = vld [vmem:[%s1 + $0xa0] sm:$0xf]
      %v634 = vld [vmem:[%s1 + $0xa4] sm:$0xf]
      %v635 = vld [vmem:[%s1 + $0xa8] sm:$0xf]
      %v636 = vld [vmem:[%s1 + $0xac] sm:$0xf]
      %v637 = vld [vmem:[%s1 + $0xb0] sm:$0xf]
      %v638 = vld [vmem:[%s1 + $0xb4] sm:$0xf]
      %v639 = vld [vmem:[%s1 + $0xb8] sm:$0xf]
      %v640 = vld [vmem:[%s1 + $0xbc] sm:$0xf]
      %v641 = vld [vmem:[%s1 + $0xc0] sm:$0xf]
      %v642 = vld [vmem:[%s1 + $0xc4] sm:$0xf]
      %v643 = vld [vmem:[%s1 + $0xc8] sm:$0xf]
      %v644 = vld [vmem:[%s1 + $0xcc] sm:$0xf]
      %v645 = vld [vmem:[%s1 + $0xd0] sm:$0xf]
      %v646 = vld [vmem:[%s1 + $0xd4] sm:$0xf]
      %v647 = vld [vmem:[%s1 + $0xd8] sm:$0xf]
      %v648 = vld [vmem:[%s1 + $0xdc] sm:$0xf]
      %v649 = vld [vmem:[%s1 + $0xe0] sm:$0xf]
      %v650 = vld [vmem:[%s1 + $0xe4] sm:$0xf]
      %v651 = vld [vmem:[%s1 + $0xe8] sm:$0xf]
      %v652 = vld [vmem:[%s1 + $0xec] sm:$0xf]
      %v653 = vld [vmem:[%s1 + $0xf0] sm:$0xf]
      %v654 = vld [vmem:[%s1 + $0xf4] sm:$0xf]
      %v655 = vld [vmem:[%s1 + $0xf8] sm:$0xf]
      %v656 = vld [vmem:[%s1 + $0xfc] sm:$0xf]
      %v657 = vld [vmem:[%s1 + $0x100] sm:$0xf]
      %v658 = vld [vmem:[%s1 + $0x104] sm:$0xf]
      %v659 = vld [vmem:[%s1 + $0x108] sm:$0xf]
      %v660 = vld [vmem:[%s1 + $0x10c] sm:$0xf]
      %v661 = vld [vmem:[%s1 + $0x110] sm:$0xf]
      %v662 = vld [vmem:[%s1 + $0x114] sm:$0xf]
      %v663 = vld [vmem:[%s1 + $0x118] sm:$0xf]
      %v664 = vld [vmem:[%s1 + $0x11c] sm:$0xf]
      %v665 = vld [vmem:[%s1 + $0x120] sm:$0xf]
      %v666 = vld [vmem:[%s1 + $0x124] sm:$0xf]
      %v667 = vld [vmem:[%s1 + $0x128] sm:$0xf]
      %v668 = vld [vmem:[%s1 + $0x12c] sm:$0xf]
      %v669 = vld [vmem:[%s1 + $0x130] sm:$0xf]
      %v670 = vld [vmem:[%s1 + $0x134] sm:$0xf]
      %v671 = vld [vmem:[%s1 + $0x138] sm:$0xf]
      %v672 = vld [vmem:[%s1 + $0x13c] sm:$0xf]
      %v673 = vld [vmem:[%s1 + $0x140] sm:$0xf]
      %v674 = vld [vmem:[%s1 + $0x144] sm:$0xf]
      %v675 = vld [vmem:[%s1 + $0x148] sm:$0xf]
      %v676 = vld [vmem:[%s1 + $0x14c] sm:$0xf]
      %v677 = vld [vmem:[%s1 + $0x150] sm:$0xf]
      %v678 = vld [vmem:[%s1 + $0x154] sm:$0xf]
      %v679 = vld [vmem:[%s1 + $0x158] sm:$0xf]
      %v680 = vld [vmem:[%s1 + $0x15c] sm:$0xf]
      %v681 = vld [vmem:[%s1 + $0x160] sm:$0xf]
      %v682 = vld [vmem:[%s1 + $0x164] sm:$0xf]
      %v683 = vld [vmem:[%s1 + $0x168] sm:$0xf]
      %v684 = vld [vmem:[%s1 + $0x16c] sm:$0xf]
      %v685 = vld [vmem:[%s1 + $0x170] sm:$0xf]
      %v686 = vld [vmem:[%s1 + $0x174] sm:$0xf]
      %v687 = vld [vmem:[%s1 + $0x178] sm:$0xf]
      %v688 = vld [vmem:[%s1 + $0x17c] sm:$0xf]
      %v689 = vld [vmem:[%s1 + $0x180] sm:$0xf]
      %v690 = vld [vmem:[%s1 + $0x184] sm:$0xf]
      %v691 = vld [vmem:[%s9] sm:$0x1]
      %v692 = vpack.c.bf16 %v376, %v369
      %v693 = vpack.c.bf16 %v377, %v370
      %v694 = vpack.c.bf16 %v378, %v371
      %v695 = vpack.c.bf16 %v379, %v372
      %v696 = vpack.c.bf16 %v380, %v373
      %v697 = vpack.c.bf16 %v381, %v374
      %v698 = vpack.c.bf16 %v382, %v375
      %v699 = vpack.c.bf16 %v390, %v383
      %v700 = vpack.c.bf16 %v391, %v384
      %v701 = vpack.c.bf16 %v392, %v385
      %v702 = vpack.c.bf16 %v393, %v386
      %v703 = vpack.c.bf16 %v394, %v387
      %v704 = vpack.c.bf16 %v395, %v388
      %v705 = vpack.c.bf16 %v396, %v389
      %v706 = vpack.c.bf16 %v404, %v397
      %v707 = vpack.c.bf16 %v405, %v398
      %v708 = vpack.c.bf16 %v406, %v399
      %v709 = vpack.c.bf16 %v407, %v400
      %v710 = vpack.c.bf16 %v408, %v401
      %v711 = vpack.c.bf16 %v409, %v402
      %v712 = vpack.c.bf16 %v410, %v403
      %v713 = vpack.c.bf16 %v418, %v411
      %v714 = vpack.c.bf16 %v419, %v412
      %v715 = vpack.c.bf16 %v420, %v413
      %v716 = vpack.c.bf16 %v421, %v414
      %v717 = vpack.c.bf16 %v422, %v415
      %v718 = vpack.c.bf16 %v423, %v416
      %v719 = vpack.c.bf16 %v424, %v417
      %v720 = vpack.c.bf16 %v432, %v425
      %v721 = vpack.c.bf16 %v433, %v426
      %v722 = vpack.c.bf16 %v434, %v427
      %v723 = vpack.c.bf16 %v435, %v428
      %v724 = vpack.c.bf16 %v436, %v429
      %v725 = vpack.c.bf16 %v437, %v430
      %v726 = vpack.c.bf16 %v438, %v431
      %v727 = vpack.c.bf16 %v446, %v439
      %v728 = vpack.c.bf16 %v447, %v440
      %v729 = vpack.c.bf16 %v448, %v441
      %v730 = vpack.c.bf16 %v449, %v442
      %v731 = vpack.c.bf16 %v450, %v443
      %v732 = vpack.c.bf16 %v451, %v444
      %v733 = vpack.c.bf16 %v452, %v445
      %v734 = vpack.c.bf16 %v460, %v453
      %v735 = vpack.c.bf16 %v461, %v454
      %v736 = vpack.c.bf16 %v462, %v455
      %v737 = vpack.c.bf16 %v463, %v456
      %v738 = vpack.c.bf16 %v464, %v457
      %v739 = vpack.c.bf16 %v465, %v458
      %v740 = vpack.c.bf16 %v466, %v459
      %v741 = vpack.c.bf16 %v474, %v467
      %v742 = vpack.c.bf16 %v475, %v468
      %v743 = vpack.c.bf16 %v476, %v469
      %v744 = vpack.c.bf16 %v477, %v470
      %v745 = vpack.c.bf16 %v478, %v471
      %v746 = vpack.c.bf16 %v479, %v472
      %v747 = vpack.c.bf16 %v480, %v473
      %v748 = vpack.c.bf16 %v488, %v481
      %v749 = vpack.c.bf16 %v489, %v482
      %v750 = vpack.c.bf16 %v490, %v483
      %v751 = vpack.c.bf16 %v491, %v484
      %v752 = vpack.c.bf16 %v492, %v485
      %v753 = vpack.c.bf16 %v493, %v486
      %v754 = vpack.c.bf16 %v494, %v487
      %v755 = vpack.c.bf16 %v502, %v495
      %v756 = vpack.c.bf16 %v503, %v496
      %v757 = vpack.c.bf16 %v504, %v497
      %v758 = vpack.c.bf16 %v505, %v498
      %v759 = vpack.c.bf16 %v506, %v499
      %v760 = vpack.c.bf16 %v507, %v500
      %v761 = vpack.c.bf16 %v508, %v501
      %v762 = vpack.c.bf16 %v516, %v509
      %v763 = vpack.c.bf16 %v517, %v510
      %v764 = vpack.c.bf16 %v518, %v511
      %v765 = vpack.c.bf16 %v519, %v512
      %v766 = vpack.c.bf16 %v520, %v513
      %v767 = vpack.c.bf16 %v521, %v514
      %v768 = vpack.c.bf16 %v522, %v515
      %v769 = vpack.c.bf16 %v530, %v523
      %v770 = vpack.c.bf16 %v531, %v524
      %v771 = vpack.c.bf16 %v532, %v525
      %v772 = vpack.c.bf16 %v533, %v526
      %v773 = vpack.c.bf16 %v534, %v527
      %v774 = vpack.c.bf16 %v535, %v528
      %v775 = vpack.c.bf16 %v536, %v529
      %v776 = vpack.c.bf16 %v544, %v537
      %v777 = vpack.c.bf16 %v545, %v538
      %v778 = vpack.c.bf16 %v546, %v539
      %v779 = vpack.c.bf16 %v547, %v540
      %v780 = vpack.c.bf16 %v548, %v541
      %v781 = vpack.c.bf16 %v549, %v542
      %v782 = vpack.c.bf16 %v550, %v543
      %v783 = vpack.c.bf16 %v558, %v551
      %v784 = vpack.c.bf16 %v559, %v552
      %v785 = vpack.c.bf16 %v560, %v553
      %v786 = vpack.c.bf16 %v561, %v554
      %v787 = vpack.c.bf16 %v562, %v555
      %v788 = vpack.c.bf16 %v563, %v556
      %v789 = vpack.c.bf16 %v564, %v557
      %v790 = vpack.c.bf16 %v572, %v565
      %v791 = vpack.c.bf16 %v573, %v566
      %v792 = vpack.c.bf16 %v574, %v567
      %v793 = vpack.c.bf16 %v575, %v568
      %v794 = vpack.c.bf16 %v576, %v569
      %v795 = vpack.c.bf16 %v577, %v570
      %v796 = vpack.c.bf16 %v578, %v571
      %v797 = vpack.c.bf16 %v586, %v579
      %v798 = vpack.c.bf16 %v587, %v580
      %v799 = vpack.c.bf16 %v588, %v581
      %v800 = vpack.c.bf16 %v589, %v582
      %v801 = vpack.c.bf16 %v590, %v583
      %v802 = vpack.c.bf16 %v591, %v584
      %v803 = vpack.c.bf16 %v592, %v585
      %v805 = vlaneseq
      %v806 = vshrl.u32 %v805, 7
      %v807 = vsub.s32 0, %v806
      %v808 = vrot.slane %v691, %v807
      %v908 = vunpack.c.l.b16 %v593
      %v909 = vunpack.c.l.b16 %v594
      %v910 = vunpack.c.l.b16 %v595
      %v911 = vunpack.c.l.b16 %v596
      %v912 = vunpack.c.l.b16 %v597
      %v913 = vunpack.c.l.b16 %v598
      %v914 = vunpack.c.l.b16 %v599
      %v915 = vunpack.c.l.b16 %v600
      %v916 = vunpack.c.l.b16 %v601
      %v917 = vunpack.c.l.b16 %v602
      %v918 = vunpack.c.l.b16 %v603
      %v919 = vunpack.c.l.b16 %v604
      %v920 = vunpack.c.l.b16 %v605
      %v921 = vunpack.c.l.b16 %v606
      %v922 = vunpack.c.l.b16 %v607
      %v923 = vunpack.c.l.b16 %v608
      %v924 = vunpack.c.l.b16 %v609
      %v925 = vunpack.c.l.b16 %v610
      %v926 = vunpack.c.l.b16 %v611
      %v927 = vunpack.c.l.b16 %v612
      %v928 = vunpack.c.l.b16 %v613
      %v929 = vunpack.c.l.b16 %v614
      %v930 = vunpack.c.l.b16 %v615
      %v931 = vunpack.c.l.b16 %v616
      %v932 = vunpack.c.l.b16 %v617
      %v933 = vunpack.c.l.b16 %v618
      %v934 = vunpack.c.l.b16 %v619
      %v935 = vunpack.c.l.b16 %v620
      %v936 = vunpack.c.l.b16 %v621
      %v937 = vunpack.c.l.b16 %v622
      %v938 = vunpack.c.l.b16 %v623
      %v939 = vunpack.c.l.b16 %v624
      %v940 = vunpack.c.l.b16 %v625
      %v941 = vunpack.c.l.b16 %v626
      %v942 = vunpack.c.l.b16 %v627
      %v943 = vunpack.c.l.b16 %v628
      %v944 = vunpack.c.l.b16 %v629
      %v945 = vunpack.c.l.b16 %v630
      %v946 = vunpack.c.l.b16 %v631
      %v947 = vunpack.c.l.b16 %v632
      %v948 = vunpack.c.l.b16 %v633
      %v949 = vunpack.c.l.b16 %v634
      %v950 = vunpack.c.l.b16 %v635
      %v951 = vunpack.c.l.b16 %v636
      %v952 = vunpack.c.l.b16 %v637
      %v953 = vunpack.c.l.b16 %v638
      %v954 = vunpack.c.l.b16 %v639
      %v955 = vunpack.c.l.b16 %v640
      %v956 = vunpack.c.l.b16 %v641
      %v957 = vunpack.c.l.b16 %v642
      %v958 = vunpack.c.l.b16 %v643
      %v959 = vunpack.c.l.b16 %v644
      %v960 = vunpack.c.l.b16 %v645
      %v961 = vunpack.c.l.b16 %v646
      %v962 = vunpack.c.l.b16 %v647
      %v963 = vunpack.c.l.b16 %v648
      %v964 = vunpack.c.l.b16 %v649
      %v965 = vunpack.c.l.b16 %v650
      %v966 = vunpack.c.l.b16 %v651
      %v967 = vunpack.c.l.b16 %v652
      %v968 = vunpack.c.l.b16 %v653
      %v969 = vunpack.c.l.b16 %v654
      %v970 = vunpack.c.l.b16 %v655
      %v971 = vunpack.c.l.b16 %v656
      %v972 = vunpack.c.l.b16 %v657
      %v973 = vunpack.c.l.b16 %v658
      %v974 = vunpack.c.l.b16 %v659
      %v975 = vunpack.c.l.b16 %v660
      %v976 = vunpack.c.l.b16 %v661
      %v977 = vunpack.c.l.b16 %v662
      %v978 = vunpack.c.l.b16 %v663
      %v979 = vunpack.c.l.b16 %v664
      %v980 = vunpack.c.l.b16 %v665
      %v981 = vunpack.c.l.b16 %v666
      %v982 = vunpack.c.l.b16 %v667
      %v983 = vunpack.c.l.b16 %v668
      %v984 = vunpack.c.l.b16 %v669
      %v985 = vunpack.c.l.b16 %v670
      %v986 = vunpack.c.l.b16 %v671
      %v987 = vunpack.c.l.b16 %v672
      %v988 = vunpack.c.l.b16 %v673
      %v989 = vunpack.c.l.b16 %v674
      %v990 = vunpack.c.l.b16 %v675
      %v991 = vunpack.c.l.b16 %v676
      %v992 = vunpack.c.l.b16 %v677
      %v993 = vunpack.c.l.b16 %v678
      %v994 = vunpack.c.l.b16 %v679
      %v995 = vunpack.c.l.b16 %v680
      %v996 = vunpack.c.l.b16 %v681
      %v997 = vunpack.c.l.b16 %v682
      %v998 = vunpack.c.l.b16 %v683
      %v999 = vunpack.c.l.b16 %v684
      %v1000 = vunpack.c.l.b16 %v685
      %v1001 = vunpack.c.l.b16 %v686
      %v1002 = vunpack.c.l.b16 %v687
      %v1003 = vunpack.c.l.b16 %v688
      %v1004 = vunpack.c.l.b16 %v689
      %v1005 = vunpack.c.l.b16 %v690
      %v1006 = vpack.c.b16 %v909, %v908
      %v1007 = vpack.c.b16 %v911, %v910
      %v1008 = vpack.c.b16 %v913, %v912
      %v1009 = vpack.c.b16 %v915, %v914
      %v1010 = vpack.c.b16 %v917, %v916
      %v1011 = vpack.c.b16 %v919, %v918
      %v1012 = vpack.c.b16 %v921, %v920
      %v1013 = vpack.c.b16 %v923, %v922
      %v1014 = vpack.c.b16 %v925, %v924
      %v1015 = vpack.c.b16 %v927, %v926
      %v1016 = vpack.c.b16 %v929, %v928
      %v1017 = vpack.c.b16 %v931, %v930
      %v1018 = vpack.c.b16 %v933, %v932
      %v1019 = vpack.c.b16 %v935, %v934
      %v1020 = vpack.c.b16 %v937, %v936
      %v1021 = vpack.c.b16 %v939, %v938
      %v1022 = vpack.c.b16 %v941, %v940
      %v1023 = vpack.c.b16 %v943, %v942
      %v1024 = vpack.c.b16 %v945, %v944
      %v1025 = vpack.c.b16 %v947, %v946
      %v1026 = vpack.c.b16 %v949, %v948
      %v1027 = vpack.c.b16 %v951, %v950
      %v1028 = vpack.c.b16 %v953, %v952
      %v1029 = vpack.c.b16 %v955, %v954
      %v1030 = vpack.c.b16 %v957, %v956
      %v1031 = vpack.c.b16 %v959, %v958
      %v1032 = vpack.c.b16 %v961, %v960
      %v1033 = vpack.c.b16 %v963, %v962
      %v1034 = vpack.c.b16 %v965, %v964
      %v1035 = vpack.c.b16 %v967, %v966
      %v1036 = vpack.c.b16 %v969, %v968
      %v1037 = vpack.c.b16 %v971, %v970
      %v1038 = vpack.c.b16 %v973, %v972
      %v1039 = vpack.c.b16 %v975, %v974
      %v1040 = vpack.c.b16 %v977, %v976
      %v1041 = vpack.c.b16 %v979, %v978
      %v1042 = vpack.c.b16 %v981, %v980
      %v1043 = vpack.c.b16 %v983, %v982
      %v1044 = vpack.c.b16 %v985, %v984
      %v1045 = vpack.c.b16 %v987, %v986
      %v1046 = vpack.c.b16 %v989, %v988
      %v1047 = vpack.c.b16 %v991, %v990
      %v1048 = vpack.c.b16 %v993, %v992
      %v1049 = vpack.c.b16 %v995, %v994
      %v1050 = vpack.c.b16 %v997, %v996
      %v1051 = vpack.c.b16 %v999, %v998
      %v1052 = vpack.c.b16 %v1001, %v1000
      %v1053 = vpack.c.b16 %v1003, %v1002
      %v1054 = vpack.c.b16 %v1005, %v1004
      %vm1104 = vcmask 130048
      %v1106 = vsel %vm1104, %v698, 0
      %v1109 = vsel %vm1104, %v705, 0
      %v1112 = vsel %vm1104, %v712, 0
      %v1115 = vsel %vm1104, %v719, 0
      %v1118 = vsel %vm1104, %v726, 0
      %v1121 = vsel %vm1104, %v733, 0
      %v1124 = vsel %vm1104, %v740, 0
      %v1127 = vsel %vm1104, %v747, 0
      %v1130 = vsel %vm1104, %v754, 0
      %v1133 = vsel %vm1104, %v761, 0
      %v1136 = vsel %vm1104, %v768, 0
      %v1139 = vsel %vm1104, %v775, 0
      %v1142 = vsel %vm1104, %v782, 0
      %v1145 = vsel %vm1104, %v789, 0
      %v1148 = vsel %vm1104, %v796, 0
      %v1151 = vsel %vm1104, %v803, 0
      %1153 = vmatprep.subr.bf16.mxu0 0
      %1154 = vmatpush1.bf16.msra.mxu0 %v1013
      %1155 = vmatprep.subr.bf16.mxu0 0
      %1156 = vmatpush1.bf16.msra.mxu0 %v1012
      %1157 = vmatprep.subr.bf16.mxu0 0
      %1158 = vmatpush1.bf16.msra.mxu0 %v1011
      %1159 = vmatprep.subr.bf16.mxu0 0
      %1160 = vmatpush1.bf16.msra.mxu0 %v1010
      %1161 = vmatprep.subr.bf16.mxu0 0
      %1162 = vmatpush1.bf16.msra.mxu0 %v1009
      %1163 = vmatprep.subr.bf16.mxu0 0
      %1164 = vmatpush1.bf16.msra.mxu0 %v1008
      %1165 = vmatprep.subr.bf16.mxu0 0
      %1166 = vmatpush1.bf16.msra.mxu0 %v1007
      %1167 = vmatprep.subr.bf16.mxu0 0
      %1168 = vmatpush1.bf16.msra.mxu0 %v1006
      %1169 = vmatprep.subr.bf16.mxu0 0
      %1170 = vmatpush2.bf16.msra.mxu0 %v1021
      %1171 = vmatprep.subr.bf16.mxu0 0
      %1172 = vmatpush2.bf16.msra.mxu0 %v1020
      %1173 = vmatprep.subr.bf16.mxu0 0
      %1174 = vmatpush2.bf16.msra.mxu0 %v1019
      %1175 = vmatprep.subr.bf16.mxu0 0
      %1176 = vmatpush2.bf16.msra.mxu0 %v1018
      %1177 = vmatprep.subr.bf16.mxu0 0
      %1178 = vmatpush2.bf16.msra.mxu0 %v1017
      %1179 = vmatprep.subr.bf16.mxu0 0
      %1180 = vmatpush2.bf16.msra.mxu0 %v1016
      %1181 = vmatprep.subr.bf16.mxu0 0
      %1182 = vmatpush2.bf16.msra.mxu0 %v1015
      %1183 = vmatprep.subr.bf16.mxu0 0
      %1184 = vmatpush2.bf16.msra.mxu0 %v1014
      %1185 = vmatprep.mubr.bf16.mxu0 %v693
      %1186 = vmatmul.mubr.bf16.gmra.mxu0 %v692
      %v1187 = vpop.f32.mrf.mxu0
      %v1188 = vadd.f32 %v808, %v1187
      %v1189 = vpop.f32.mrf.mxu0
      %v1190 = vpop.f32.mrf.mxu0
      %v1191 = vadd.f32 %v808, %v1190
      %v1192 = vpop.f32.mrf.mxu0
      %1193 = vmatprep.mubr.bf16.mxu0 %v700
      %1194 = vmatmul.mubr.bf16.gmra.mxu0 %v699
      %v1195 = vpop.f32.mrf.mxu0
      %v1196 = vadd.f32 %v808, %v1195
      %v1197 = vpop.f32.mrf.mxu0
      %v1198 = vpop.f32.mrf.mxu0
      %v1199 = vadd.f32 %v808, %v1198
      %v1200 = vpop.f32.mrf.mxu0
      %1201 = vmatprep.mubr.bf16.mxu0 %v707
      %1202 = vmatmul.mubr.bf16.gmra.mxu0 %v706
      %v1203 = vpop.f32.mrf.mxu0
      %v1204 = vadd.f32 %v808, %v1203
      %v1205 = vpop.f32.mrf.mxu0
      %v1206 = vpop.f32.mrf.mxu0
      %v1207 = vadd.f32 %v808, %v1206
      %v1208 = vpop.f32.mrf.mxu0
      %1209 = vmatprep.mubr.bf16.mxu0 %v714
      %1210 = vmatmul.mubr.bf16.gmra.mxu0 %v713
      %v1211 = vpop.f32.mrf.mxu0
      %v1212 = vadd.f32 %v808, %v1211
      %v1213 = vpop.f32.mrf.mxu0
      %v1214 = vpop.f32.mrf.mxu0
      %v1215 = vadd.f32 %v808, %v1214
      %v1216 = vpop.f32.mrf.mxu0
      %1217 = vmatprep.mubr.bf16.mxu0 %v721
      %1218 = vmatmul.mubr.bf16.gmra.mxu0 %v720
      %v1219 = vpop.f32.mrf.mxu0
      %v1220 = vadd.f32 %v808, %v1219
      %v1221 = vpop.f32.mrf.mxu0
      %v1222 = vpop.f32.mrf.mxu0
      %v1223 = vadd.f32 %v808, %v1222
      %v1224 = vpop.f32.mrf.mxu0
      %1225 = vmatprep.mubr.bf16.mxu0 %v728
      %1226 = vmatmul.mubr.bf16.gmra.mxu0 %v727
      %v1227 = vpop.f32.mrf.mxu0
      %v1228 = vadd.f32 %v808, %v1227
      %v1229 = vpop.f32.mrf.mxu0
      %v1230 = vpop.f32.mrf.mxu0
      %v1231 = vadd.f32 %v808, %v1230
      %v1232 = vpop.f32.mrf.mxu0
      %1233 = vmatprep.mubr.bf16.mxu0 %v735
      %1234 = vmatmul.mubr.bf16.gmra.mxu0 %v734
      %v1235 = vpop.f32.mrf.mxu0
      %v1236 = vadd.f32 %v808, %v1235
      %v1237 = vpop.f32.mrf.mxu0
      %v1238 = vpop.f32.mrf.mxu0
      %v1239 = vadd.f32 %v808, %v1238
      %v1240 = vpop.f32.mrf.mxu0
      %1241 = vmatprep.mubr.bf16.mxu0 %v742
      %1242 = vmatmul.mubr.bf16.gmra.mxu0 %v741
      %v1243 = vpop.f32.mrf.mxu0
      %v1244 = vadd.f32 %v808, %v1243
      %v1245 = vpop.f32.mrf.mxu0
      %v1246 = vpop.f32.mrf.mxu0
      %v1247 = vadd.f32 %v808, %v1246
      %v1248 = vpop.f32.mrf.mxu0
      %1249 = vmatprep.mubr.bf16.mxu0 %v749
      %1250 = vmatmul.mubr.bf16.gmra.mxu0 %v748
      %v1251 = vpop.f32.mrf.mxu0
      %v1252 = vadd.f32 %v808, %v1251
      %v1253 = vpop.f32.mrf.mxu0
      %v1254 = vpop.f32.mrf.mxu0
      %v1255 = vadd.f32 %v808, %v1254
      %v1256 = vpop.f32.mrf.mxu0
      %1257 = vmatprep.mubr.bf16.mxu0 %v756
      %1258 = vmatmul.mubr.bf16.gmra.mxu0 %v755
      %v1259 = vpop.f32.mrf.mxu0
      %v1260 = vadd.f32 %v808, %v1259
      %v1261 = vpop.f32.mrf.mxu0
      %v1262 = vpop.f32.mrf.mxu0
      %v1263 = vadd.f32 %v808, %v1262
      %v1264 = vpop.f32.mrf.mxu0
      %1265 = vmatprep.mubr.bf16.mxu0 %v763
      %1266 = vmatmul.mubr.bf16.gmra.mxu0 %v762
      %v1267 = vpop.f32.mrf.mxu0
      %v1268 = vadd.f32 %v808, %v1267
      %v1269 = vpop.f32.mrf.mxu0
      %v1270 = vpop.f32.mrf.mxu0
      %v1271 = vadd.f32 %v808, %v1270
      %v1272 = vpop.f32.mrf.mxu0
      %1273 = vmatprep.mubr.bf16.mxu0 %v770
      %1274 = vmatmul.mubr.bf16.gmra.mxu0 %v769
      %v1275 = vpop.f32.mrf.mxu0
      %v1276 = vadd.f32 %v808, %v1275
      %v1277 = vpop.f32.mrf.mxu0
      %v1278 = vpop.f32.mrf.mxu0
      %v1279 = vadd.f32 %v808, %v1278
      %v1280 = vpop.f32.mrf.mxu0
      %1281 = vmatprep.mubr.bf16.mxu0 %v777
      %1282 = vmatmul.mubr.bf16.gmra.mxu0 %v776
      %v1283 = vpop.f32.mrf.mxu0
      %v1284 = vadd.f32 %v808, %v1283
      %v1285 = vpop.f32.mrf.mxu0
      %v1286 = vpop.f32.mrf.mxu0
      %v1287 = vadd.f32 %v808, %v1286
      %v1288 = vpop.f32.mrf.mxu0
      %1289 = vmatprep.mubr.bf16.mxu0 %v784
      %1290 = vmatmul.mubr.bf16.gmra.mxu0 %v783
      %v1291 = vpop.f32.mrf.mxu0
      %v1292 = vadd.f32 %v808, %v1291
      %v1293 = vpop.f32.mrf.mxu0
      %v1294 = vpop.f32.mrf.mxu0
      %v1295 = vadd.f32 %v808, %v1294
      %v1296 = vpop.f32.mrf.mxu0
      %1297 = vmatprep.mubr.bf16.mxu0 %v791
      %1298 = vmatmul.mubr.bf16.gmra.mxu0 %v790
      %v1299 = vpop.f32.mrf.mxu0
      %v1300 = vadd.f32 %v808, %v1299
      %v1301 = vpop.f32.mrf.mxu0
      %v1302 = vpop.f32.mrf.mxu0
      %v1303 = vadd.f32 %v808, %v1302
      %v1304 = vpop.f32.mrf.mxu0
      %1305 = vmatprep.mubr.bf16.mxu0 %v798
      %1306 = vmatmul.mubr.bf16.gmra.mxu0 %v797
      %v1307 = vpop.f32.mrf.mxu0
      %v1308 = vadd.f32 %v808, %v1307
      %v1309 = vpop.f32.mrf.mxu0
      %v1310 = vpop.f32.mrf.mxu0
      %v1311 = vadd.f32 %v808, %v1310
      %v1312 = vpop.f32.mrf.mxu0
      %1313 = vdwg.mxu0
      %1314 = vmatprep.subr.bf16.mxu0 0
      %1315 = vmatpush1.bf16.msra.mxu0 %v1029
      %1316 = vmatprep.subr.bf16.mxu0 0
      %1317 = vmatpush1.bf16.msra.mxu0 %v1028
      %1318 = vmatprep.subr.bf16.mxu0 0
      %1319 = vmatpush1.bf16.msra.mxu0 %v1027
      %1320 = vmatprep.subr.bf16.mxu0 0
      %1321 = vmatpush1.bf16.msra.mxu0 %v1026
      %1322 = vmatprep.subr.bf16.mxu0 0
      %1323 = vmatpush1.bf16.msra.mxu0 %v1025
      %1324 = vmatprep.subr.bf16.mxu0 0
      %1325 = vmatpush1.bf16.msra.mxu0 %v1024
      %1326 = vmatprep.subr.bf16.mxu0 0
      %1327 = vmatpush1.bf16.msra.mxu0 %v1023
      %1328 = vmatprep.subr.bf16.mxu0 0
      %1329 = vmatpush1.bf16.msra.mxu0 %v1022
      %1330 = vmatprep.subr.bf16.mxu0 0
      %1331 = vmatpush2.bf16.msra.mxu0 %v1037
      %1332 = vmatprep.subr.bf16.mxu0 0
      %1333 = vmatpush2.bf16.msra.mxu0 %v1036
      %1334 = vmatprep.subr.bf16.mxu0 0
      %1335 = vmatpush2.bf16.msra.mxu0 %v1035
      %1336 = vmatprep.subr.bf16.mxu0 0
      %1337 = vmatpush2.bf16.msra.mxu0 %v1034
      %1338 = vmatprep.subr.bf16.mxu0 0
      %1339 = vmatpush2.bf16.msra.mxu0 %v1033
      %1340 = vmatprep.subr.bf16.mxu0 0
      %1341 = vmatpush2.bf16.msra.mxu0 %v1032
      %1342 = vmatprep.subr.bf16.mxu0 0
      %1343 = vmatpush2.bf16.msra.mxu0 %v1031
      %1344 = vmatprep.subr.bf16.mxu0 0
      %1345 = vmatpush2.bf16.msra.mxu0 %v1030
      %1346 = vmatprep.mubr.bf16.mxu0 %v695
      %1347 = vmatmul.mubr.bf16.gmra.mxu0 %v694
      %v1348 = vpop.f32.mrf.mxu0
      %v1349 = vadd.f32 %v1188, %v1348
      %v1350 = vpop.f32.mrf.mxu0
      %v1351 = vpop.f32.mrf.mxu0
      %v1352 = vadd.f32 %v1191, %v1351
      %v1353 = vpop.f32.mrf.mxu0
      %1354 = vmatprep.mubr.bf16.mxu0 %v702
      %1355 = vmatmul.mubr.bf16.gmra.mxu0 %v701
      %v1356 = vpop.f32.mrf.mxu0
      %v1357 = vadd.f32 %v1196, %v1356
      %v1358 = vpop.f32.mrf.mxu0
      %v1359 = vpop.f32.mrf.mxu0
      %v1360 = vadd.f32 %v1199, %v1359
      %v1361 = vpop.f32.mrf.mxu0
      %1362 = vmatprep.mubr.bf16.mxu0 %v709
      %1363 = vmatmul.mubr.bf16.gmra.mxu0 %v708
      %v1364 = vpop.f32.mrf.mxu0
      %v1365 = vadd.f32 %v1204, %v1364
      %v1366 = vpop.f32.mrf.mxu0
      %v1367 = vpop.f32.mrf.mxu0
      %v1368 = vadd.f32 %v1207, %v1367
      %v1369 = vpop.f32.mrf.mxu0
      %1370 = vmatprep.mubr.bf16.mxu0 %v716
      %1371 = vmatmul.mubr.bf16.gmra.mxu0 %v715
      %v1372 = vpop.f32.mrf.mxu0
      %v1373 = vadd.f32 %v1212, %v1372
      %v1374 = vpop.f32.mrf.mxu0
      %v1375 = vpop.f32.mrf.mxu0
      %v1376 = vadd.f32 %v1215, %v1375
      %v1377 = vpop.f32.mrf.mxu0
      %1378 = vmatprep.mubr.bf16.mxu0 %v723
      %1379 = vmatmul.mubr.bf16.gmra.mxu0 %v722
      %v1380 = vpop.f32.mrf.mxu0
      %v1381 = vadd.f32 %v1220, %v1380
      %v1382 = vpop.f32.mrf.mxu0
      %v1383 = vpop.f32.mrf.mxu0
      %v1384 = vadd.f32 %v1223, %v1383
      %v1385 = vpop.f32.mrf.mxu0
      %1386 = vmatprep.mubr.bf16.mxu0 %v730
      %1387 = vmatmul.mubr.bf16.gmra.mxu0 %v729
      %v1388 = vpop.f32.mrf.mxu0
      %v1389 = vadd.f32 %v1228, %v1388
      %v1390 = vpop.f32.mrf.mxu0
      %v1391 = vpop.f32.mrf.mxu0
      %v1392 = vadd.f32 %v1231, %v1391
      %v1393 = vpop.f32.mrf.mxu0
      %1394 = vmatprep.mubr.bf16.mxu0 %v737
      %1395 = vmatmul.mubr.bf16.gmra.mxu0 %v736
      %v1396 = vpop.f32.mrf.mxu0
      %v1397 = vadd.f32 %v1236, %v1396
      %v1398 = vpop.f32.mrf.mxu0
      %v1399 = vpop.f32.mrf.mxu0
      %v1400 = vadd.f32 %v1239, %v1399
      %v1401 = vpop.f32.mrf.mxu0
      %1402 = vmatprep.mubr.bf16.mxu0 %v744
      %1403 = vmatmul.mubr.bf16.gmra.mxu0 %v743
      %v1404 = vpop.f32.mrf.mxu0
      %v1405 = vadd.f32 %v1244, %v1404
      %v1406 = vpop.f32.mrf.mxu0
      %v1407 = vpop.f32.mrf.mxu0
      %v1408 = vadd.f32 %v1247, %v1407
      %v1409 = vpop.f32.mrf.mxu0
      %1410 = vmatprep.mubr.bf16.mxu0 %v751
      %1411 = vmatmul.mubr.bf16.gmra.mxu0 %v750
      %v1412 = vpop.f32.mrf.mxu0
      %v1413 = vadd.f32 %v1252, %v1412
      %v1414 = vpop.f32.mrf.mxu0
      %v1415 = vpop.f32.mrf.mxu0
      %v1416 = vadd.f32 %v1255, %v1415
      %v1417 = vpop.f32.mrf.mxu0
      %1418 = vmatprep.mubr.bf16.mxu0 %v758
      %1419 = vmatmul.mubr.bf16.gmra.mxu0 %v757
      %v1420 = vpop.f32.mrf.mxu0
      %v1421 = vadd.f32 %v1260, %v1420
      %v1422 = vpop.f32.mrf.mxu0
      %v1423 = vpop.f32.mrf.mxu0
      %v1424 = vadd.f32 %v1263, %v1423
      %v1425 = vpop.f32.mrf.mxu0
      %1426 = vmatprep.mubr.bf16.mxu0 %v765
      %1427 = vmatmul.mubr.bf16.gmra.mxu0 %v764
      %v1428 = vpop.f32.mrf.mxu0
      %v1429 = vadd.f32 %v1268, %v1428
      %v1430 = vpop.f32.mrf.mxu0
      %v1431 = vpop.f32.mrf.mxu0
      %v1432 = vadd.f32 %v1271, %v1431
      %v1433 = vpop.f32.mrf.mxu0
      %1434 = vmatprep.mubr.bf16.mxu0 %v772
      %1435 = vmatmul.mubr.bf16.gmra.mxu0 %v771
      %v1436 = vpop.f32.mrf.mxu0
      %v1437 = vadd.f32 %v1276, %v1436
      %v1438 = vpop.f32.mrf.mxu0
      %v1439 = vpop.f32.mrf.mxu0
      %v1440 = vadd.f32 %v1279, %v1439
      %v1441 = vpop.f32.mrf.mxu0
      %1442 = vmatprep.mubr.bf16.mxu0 %v779
      %1443 = vmatmul.mubr.bf16.gmra.mxu0 %v778
      %v1444 = vpop.f32.mrf.mxu0
      %v1445 = vadd.f32 %v1284, %v1444
      %v1446 = vpop.f32.mrf.mxu0
      %v1447 = vpop.f32.mrf.mxu0
      %v1448 = vadd.f32 %v1287, %v1447
      %v1449 = vpop.f32.mrf.mxu0
      %1450 = vmatprep.mubr.bf16.mxu0 %v786
      %1451 = vmatmul.mubr.bf16.gmra.mxu0 %v785
      %v1452 = vpop.f32.mrf.mxu0
      %v1453 = vadd.f32 %v1292, %v1452
      %v1454 = vpop.f32.mrf.mxu0
      %v1455 = vpop.f32.mrf.mxu0
      %v1456 = vadd.f32 %v1295, %v1455
      %v1457 = vpop.f32.mrf.mxu0
      %1458 = vmatprep.mubr.bf16.mxu0 %v793
      %1459 = vmatmul.mubr.bf16.gmra.mxu0 %v792
      %v1460 = vpop.f32.mrf.mxu0
      %v1461 = vadd.f32 %v1300, %v1460
      %v1462 = vpop.f32.mrf.mxu0
      %v1463 = vpop.f32.mrf.mxu0
      %v1464 = vadd.f32 %v1303, %v1463
      %v1465 = vpop.f32.mrf.mxu0
      %1466 = vmatprep.mubr.bf16.mxu0 %v800
      %1467 = vmatmul.mubr.bf16.gmra.mxu0 %v799
      %v1468 = vpop.f32.mrf.mxu0
      %v1469 = vadd.f32 %v1308, %v1468
      %v1470 = vpop.f32.mrf.mxu0
      %v1471 = vpop.f32.mrf.mxu0
      %v1472 = vadd.f32 %v1311, %v1471
      %v1473 = vpop.f32.mrf.mxu0
      %1474 = vdwg.mxu0
      %1475 = vmatprep.subr.bf16.mxu0 0
      %1476 = vmatpush1.bf16.msra.mxu0 %v1045
      %1477 = vmatprep.subr.bf16.mxu0 0
      %1478 = vmatpush1.bf16.msra.mxu0 %v1044
      %1479 = vmatprep.subr.bf16.mxu0 0
      %1480 = vmatpush1.bf16.msra.mxu0 %v1043
      %1481 = vmatprep.subr.bf16.mxu0 0
      %1482 = vmatpush1.bf16.msra.mxu0 %v1042
      %1483 = vmatprep.subr.bf16.mxu0 0
      %1484 = vmatpush1.bf16.msra.mxu0 %v1041
      %1485 = vmatprep.subr.bf16.mxu0 0
      %1486 = vmatpush1.bf16.msra.mxu0 %v1040
      %1487 = vmatprep.subr.bf16.mxu0 0
      %1488 = vmatpush1.bf16.msra.mxu0 %v1039
      %1489 = vmatprep.subr.bf16.mxu0 0
      %1490 = vmatpush1.bf16.msra.mxu0 %v1038
      %1491 = vmatprep.subr.bf16.mxu0 0
      %1492 = vmatpush2.bf16.msra.mxu0 %v1053
      %1493 = vmatprep.subr.bf16.mxu0 0
      %1494 = vmatpush2.bf16.msra.mxu0 %v1052
      %1495 = vmatprep.subr.bf16.mxu0 0
      %1496 = vmatpush2.bf16.msra.mxu0 %v1051
      %1497 = vmatprep.subr.bf16.mxu0 0
      %1498 = vmatpush2.bf16.msra.mxu0 %v1050
      %1499 = vmatprep.subr.bf16.mxu0 0
      %1500 = vmatpush2.bf16.msra.mxu0 %v1049
      %1501 = vmatprep.subr.bf16.mxu0 0
      %1502 = vmatpush2.bf16.msra.mxu0 %v1048
      %1503 = vmatprep.subr.bf16.mxu0 0
      %1504 = vmatpush2.bf16.msra.mxu0 %v1047
      %1505 = vmatprep.subr.bf16.mxu0 0
      %1506 = vmatpush2.bf16.msra.mxu0 %v1046
      %1507 = vmatprep.mubr.bf16.mxu0 %v697
      %1508 = vmatmul.mubr.bf16.gmra.mxu0 %v696
      %v1509 = vpop.f32.mrf.mxu0
      %v1510 = vadd.f32 %v1349, %v1509
      %v1511 = vpop.f32.mrf.mxu0
      %v1512 = vpop.f32.mrf.mxu0
      %v1513 = vadd.f32 %v1352, %v1512
      %v1514 = vpop.f32.mrf.mxu0
      %1515 = vmatprep.mubr.bf16.mxu0 %v704
      %1516 = vmatmul.mubr.bf16.gmra.mxu0 %v703
      %v1517 = vpop.f32.mrf.mxu0
      %v1518 = vadd.f32 %v1357, %v1517
      %v1519 = vpop.f32.mrf.mxu0
      %v1520 = vpop.f32.mrf.mxu0
      %v1521 = vadd.f32 %v1360, %v1520
      %v1522 = vpop.f32.mrf.mxu0
      %1523 = vmatprep.mubr.bf16.mxu0 %v711
      %1524 = vmatmul.mubr.bf16.gmra.mxu0 %v710
      %v1525 = vpop.f32.mrf.mxu0
      %v1526 = vadd.f32 %v1365, %v1525
      %v1527 = vpop.f32.mrf.mxu0
      %v1528 = vpop.f32.mrf.mxu0
      %v1529 = vadd.f32 %v1368, %v1528
      %v1530 = vpop.f32.mrf.mxu0
      %1531 = vmatprep.mubr.bf16.mxu0 %v718
      %1532 = vmatmul.mubr.bf16.gmra.mxu0 %v717
      %v1533 = vpop.f32.mrf.mxu0
      %v1534 = vadd.f32 %v1373, %v1533
      %v1535 = vpop.f32.mrf.mxu0
      %v1536 = vpop.f32.mrf.mxu0
      %v1537 = vadd.f32 %v1376, %v1536
      %v1538 = vpop.f32.mrf.mxu0
      %1539 = vmatprep.mubr.bf16.mxu0 %v725
      %1540 = vmatmul.mubr.bf16.gmra.mxu0 %v724
      %v1541 = vpop.f32.mrf.mxu0
      %v1542 = vadd.f32 %v1381, %v1541
      %v1543 = vpop.f32.mrf.mxu0
      %v1544 = vpop.f32.mrf.mxu0
      %v1545 = vadd.f32 %v1384, %v1544
      %v1546 = vpop.f32.mrf.mxu0
      %1547 = vmatprep.mubr.bf16.mxu0 %v732
      %1548 = vmatmul.mubr.bf16.gmra.mxu0 %v731
      %v1549 = vpop.f32.mrf.mxu0
      %v1550 = vadd.f32 %v1389, %v1549
      %v1551 = vpop.f32.mrf.mxu0
      %v1552 = vpop.f32.mrf.mxu0
      %v1553 = vadd.f32 %v1392, %v1552
      %v1554 = vpop.f32.mrf.mxu0
      %1555 = vmatprep.mubr.bf16.mxu0 %v739
      %1556 = vmatmul.mubr.bf16.gmra.mxu0 %v738
      %v1557 = vpop.f32.mrf.mxu0
      %v1558 = vadd.f32 %v1397, %v1557
      %v1559 = vpop.f32.mrf.mxu0
      %v1560 = vpop.f32.mrf.mxu0
      %v1561 = vadd.f32 %v1400, %v1560
      %v1562 = vpop.f32.mrf.mxu0
      %1563 = vmatprep.mubr.bf16.mxu0 %v746
      %1564 = vmatmul.mubr.bf16.gmra.mxu0 %v745
      %v1565 = vpop.f32.mrf.mxu0
      %v1566 = vadd.f32 %v1405, %v1565
      %v1567 = vpop.f32.mrf.mxu0
      %v1568 = vpop.f32.mrf.mxu0
      %v1569 = vadd.f32 %v1408, %v1568
      %v1570 = vpop.f32.mrf.mxu0
      %1571 = vmatprep.mubr.bf16.mxu0 %v753
      %1572 = vmatmul.mubr.bf16.gmra.mxu0 %v752
      %v1573 = vpop.f32.mrf.mxu0
      %v1574 = vadd.f32 %v1413, %v1573
      %v1575 = vpop.f32.mrf.mxu0
      %v1576 = vpop.f32.mrf.mxu0
      %v1577 = vadd.f32 %v1416, %v1576
      %v1578 = vpop.f32.mrf.mxu0
      %1579 = vmatprep.mubr.bf16.mxu0 %v760
      %1580 = vmatmul.mubr.bf16.gmra.mxu0 %v759
      %v1581 = vpop.f32.mrf.mxu0
      %v1582 = vadd.f32 %v1421, %v1581
      %v1583 = vpop.f32.mrf.mxu0
      %v1584 = vpop.f32.mrf.mxu0
      %v1585 = vadd.f32 %v1424, %v1584
      %v1586 = vpop.f32.mrf.mxu0
      %1587 = vmatprep.mubr.bf16.mxu0 %v767
      %1588 = vmatmul.mubr.bf16.gmra.mxu0 %v766
      %v1589 = vpop.f32.mrf.mxu0
      %v1590 = vadd.f32 %v1429, %v1589
      %v1591 = vpop.f32.mrf.mxu0
      %v1592 = vpop.f32.mrf.mxu0
      %v1593 = vadd.f32 %v1432, %v1592
      %v1594 = vpop.f32.mrf.mxu0
      %1595 = vmatprep.mubr.bf16.mxu0 %v774
      %1596 = vmatmul.mubr.bf16.gmra.mxu0 %v773
      %v1597 = vpop.f32.mrf.mxu0
      %v1598 = vadd.f32 %v1437, %v1597
      %v1599 = vpop.f32.mrf.mxu0
      %v1600 = vpop.f32.mrf.mxu0
      %v1601 = vadd.f32 %v1440, %v1600
      %v1602 = vpop.f32.mrf.mxu0
      %1603 = vmatprep.mubr.bf16.mxu0 %v781
      %1604 = vmatmul.mubr.bf16.gmra.mxu0 %v780
      %v1605 = vpop.f32.mrf.mxu0
      %v1606 = vadd.f32 %v1445, %v1605
      %v1607 = vpop.f32.mrf.mxu0
      %v1608 = vpop.f32.mrf.mxu0
      %v1609 = vadd.f32 %v1448, %v1608
      %v1610 = vpop.f32.mrf.mxu0
      %1611 = vmatprep.mubr.bf16.mxu0 %v788
      %1612 = vmatmul.mubr.bf16.gmra.mxu0 %v787
      %v1613 = vpop.f32.mrf.mxu0
      %v1614 = vadd.f32 %v1453, %v1613
      %v1615 = vpop.f32.mrf.mxu0
      %v1616 = vpop.f32.mrf.mxu0
      %v1617 = vadd.f32 %v1456, %v1616
      %v1618 = vpop.f32.mrf.mxu0
      %1619 = vmatprep.mubr.bf16.mxu0 %v795
      %1620 = vmatmul.mubr.bf16.gmra.mxu0 %v794
      %v1621 = vpop.f32.mrf.mxu0
      %v1622 = vadd.f32 %v1461, %v1621
      %v1623 = vpop.f32.mrf.mxu0
      %v1624 = vpop.f32.mrf.mxu0
      %v1625 = vadd.f32 %v1464, %v1624
      %v1626 = vpop.f32.mrf.mxu0
      %1627 = vmatprep.mubr.bf16.mxu0 %v802
      %1628 = vmatmul.mubr.bf16.gmra.mxu0 %v801
      %v1629 = vpop.f32.mrf.mxu0
      %v1630 = vadd.f32 %v1469, %v1629
      %v1631 = vpop.f32.mrf.mxu0
      %v1632 = vpop.f32.mrf.mxu0
      %v1633 = vadd.f32 %v1472, %v1632
      %v1634 = vpop.f32.mrf.mxu0
      %1635 = vdwg.mxu0
      %1636 = vmatprep.subr.bf16.mxu0 0
      %1637 = vmatpush1.bf16.msra.mxu0 0
      %1638 = vmatprep.subr.bf16.mxu0 0
      %1639 = vmatpush1.bf16.msra.mxu0 0
      %1640 = vmatprep.subr.bf16.mxu0 0
      %1641 = vmatpush1.bf16.msra.mxu0 0
      %1642 = vmatprep.subr.bf16.mxu0 0
      %1643 = vmatpush1.bf16.msra.mxu0 0
      %1644 = vmatprep.subr.bf16.mxu0 0
      %1645 = vmatpush1.bf16.msra.mxu0 0
      %1646 = vmatprep.subr.bf16.mxu0 0
      %1647 = vmatpush1.bf16.msra.mxu0 0
      %1648 = vmatprep.subr.bf16.mxu0 0
      %1649 = vmatpush1.bf16.msra.mxu0 0
      %1650 = vmatprep.subr.bf16.mxu0 0
      %1651 = vmatpush1.bf16.msra.mxu0 %v1054
      %1652 = vmatprep.subr.bf16.mxu0 0
      %1653 = vmatpush2.bf16.msra.mxu0 0
      %1654 = vmatprep.subr.bf16.mxu0 0
      %1655 = vmatpush2.bf16.msra.mxu0 0
      %1656 = vmatprep.subr.bf16.mxu0 0
      %1657 = vmatpush2.bf16.msra.mxu0 0
      %1658 = vmatprep.subr.bf16.mxu0 0
      %1659 = vmatpush2.bf16.msra.mxu0 0
      %1660 = vmatprep.subr.bf16.mxu0 0
      %1661 = vmatpush2.bf16.msra.mxu0 0
      %1662 = vmatprep.subr.bf16.mxu0 0
      %1663 = vmatpush2.bf16.msra.mxu0 0
      %1664 = vmatprep.subr.bf16.mxu0 0
      %1665 = vmatpush2.bf16.msra.mxu0 0
      %1666 = vmatprep.subr.bf16.mxu0 0
      %1667 = vmatpush2.bf16.msra.mxu0 0
      %1668 = vmatprep.mubr.bf16.mxu0 0
      %1669 = vmatmul.mubr.bf16.gmra.mxu0 %v1106
      %v1670 = vpop.f32.mrf.mxu0
      %v1671 = vadd.f32 %v1510, %v1670
      %v1672 = vpop.f32.mrf.mxu0
      %v1673 = vpop.f32.mrf.mxu0
      %v1674 = vadd.f32 %v1513, %v1673
      %v1675 = vpop.f32.mrf.mxu0
      %1676 = vmatprep.mubr.bf16.mxu0 0
      %1677 = vmatmul.mubr.bf16.gmra.mxu0 %v1109
      %v1678 = vpop.f32.mrf.mxu0
      %v1679 = vadd.f32 %v1518, %v1678
      %v1680 = vpop.f32.mrf.mxu0
      %v1681 = vpop.f32.mrf.mxu0
      %v1682 = vadd.f32 %v1521, %v1681
      %v1683 = vpop.f32.mrf.mxu0
      %1684 = vmatprep.mubr.bf16.mxu0 0
      %1685 = vmatmul.mubr.bf16.gmra.mxu0 %v1112
      %v1686 = vpop.f32.mrf.mxu0
      %v1687 = vadd.f32 %v1526, %v1686
      %v1688 = vpop.f32.mrf.mxu0
      %v1689 = vpop.f32.mrf.mxu0
      %v1690 = vadd.f32 %v1529, %v1689
      %v1691 = vpop.f32.mrf.mxu0
      %1692 = vmatprep.mubr.bf16.mxu0 0
      %1693 = vmatmul.mubr.bf16.gmra.mxu0 %v1115
      %v1694 = vpop.f32.mrf.mxu0
      %v1695 = vadd.f32 %v1534, %v1694
      %v1696 = vpop.f32.mrf.mxu0
      %v1697 = vpop.f32.mrf.mxu0
      %v1698 = vadd.f32 %v1537, %v1697
      %v1699 = vpop.f32.mrf.mxu0
      %1700 = vmatprep.mubr.bf16.mxu0 0
      %1701 = vmatmul.mubr.bf16.gmra.mxu0 %v1118
      %v1702 = vpop.f32.mrf.mxu0
      %v1703 = vadd.f32 %v1542, %v1702
      %v1704 = vpop.f32.mrf.mxu0
      %v1705 = vpop.f32.mrf.mxu0
      %v1706 = vadd.f32 %v1545, %v1705
      %v1707 = vpop.f32.mrf.mxu0
      %1708 = vmatprep.mubr.bf16.mxu0 0
      %1709 = vmatmul.mubr.bf16.gmra.mxu0 %v1121
      %v1710 = vpop.f32.mrf.mxu0
      %v1711 = vadd.f32 %v1550, %v1710
      %v1712 = vpop.f32.mrf.mxu0
      %v1713 = vpop.f32.mrf.mxu0
      %v1714 = vadd.f32 %v1553, %v1713
      %v1715 = vpop.f32.mrf.mxu0
      %1716 = vmatprep.mubr.bf16.mxu0 0
      %1717 = vmatmul.mubr.bf16.gmra.mxu0 %v1124
      %v1718 = vpop.f32.mrf.mxu0
      %v1719 = vadd.f32 %v1558, %v1718
      %v1720 = vpop.f32.mrf.mxu0
      %v1721 = vpop.f32.mrf.mxu0
      %v1722 = vadd.f32 %v1561, %v1721
      %v1723 = vpop.f32.mrf.mxu0
      %1724 = vmatprep.mubr.bf16.mxu0 0
      %1725 = vmatmul.mubr.bf16.gmra.mxu0 %v1127
      %v1726 = vpop.f32.mrf.mxu0
      %v1727 = vadd.f32 %v1566, %v1726
      %v1728 = vpop.f32.mrf.mxu0
      %v1729 = vpop.f32.mrf.mxu0
      %v1730 = vadd.f32 %v1569, %v1729
      %v1731 = vpop.f32.mrf.mxu0
      %1732 = vmatprep.mubr.bf16.mxu0 0
      %1733 = vmatmul.mubr.bf16.gmra.mxu0 %v1130
      %v1734 = vpop.f32.mrf.mxu0
      %v1735 = vadd.f32 %v1574, %v1734
      %v1736 = vpop.f32.mrf.mxu0
      %v1737 = vpop.f32.mrf.mxu0
      %v1738 = vadd.f32 %v1577, %v1737
      %v1739 = vpop.f32.mrf.mxu0
      %1740 = vmatprep.mubr.bf16.mxu0 0
      %1741 = vmatmul.mubr.bf16.gmra.mxu0 %v1133
      %v1742 = vpop.f32.mrf.mxu0
      %v1743 = vadd.f32 %v1582, %v1742
      %v1744 = vpop.f32.mrf.mxu0
      %v1745 = vpop.f32.mrf.mxu0
      %v1746 = vadd.f32 %v1585, %v1745
      %v1747 = vpop.f32.mrf.mxu0
      %1748 = vmatprep.mubr.bf16.mxu0 0
      %1749 = vmatmul.mubr.bf16.gmra.mxu0 %v1136
      %v1750 = vpop.f32.mrf.mxu0
      %v1751 = vadd.f32 %v1590, %v1750
      %v1752 = vpop.f32.mrf.mxu0
      %v1753 = vpop.f32.mrf.mxu0
      %v1754 = vadd.f32 %v1593, %v1753
      %v1755 = vpop.f32.mrf.mxu0
      %1756 = vmatprep.mubr.bf16.mxu0 0
      %1757 = vmatmul.mubr.bf16.gmra.mxu0 %v1139
      %v1758 = vpop.f32.mrf.mxu0
      %v1759 = vadd.f32 %v1598, %v1758
      %v1760 = vpop.f32.mrf.mxu0
      %v1761 = vpop.f32.mrf.mxu0
      %v1762 = vadd.f32 %v1601, %v1761
      %v1763 = vpop.f32.mrf.mxu0
      %1764 = vmatprep.mubr.bf16.mxu0 0
      %1765 = vmatmul.mubr.bf16.gmra.mxu0 %v1142
      %v1766 = vpop.f32.mrf.mxu0
      %v1767 = vadd.f32 %v1606, %v1766
      %v1768 = vpop.f32.mrf.mxu0
      %v1769 = vpop.f32.mrf.mxu0
      %v1770 = vadd.f32 %v1609, %v1769
      %v1771 = vpop.f32.mrf.mxu0
      %1772 = vmatprep.mubr.bf16.mxu0 0
      %1773 = vmatmul.mubr.bf16.gmra.mxu0 %v1145
      %v1774 = vpop.f32.mrf.mxu0
      %v1775 = vadd.f32 %v1614, %v1774
      %v1776 = vpop.f32.mrf.mxu0
      %v1777 = vpop.f32.mrf.mxu0
      %v1778 = vadd.f32 %v1617, %v1777
      %v1779 = vpop.f32.mrf.mxu0
      %1780 = vmatprep.mubr.bf16.mxu0 0
      %1781 = vmatmul.mubr.bf16.gmra.mxu0 %v1148
      %v1782 = vpop.f32.mrf.mxu0
      %v1783 = vadd.f32 %v1622, %v1782
      %v1784 = vpop.f32.mrf.mxu0
      %v1785 = vpop.f32.mrf.mxu0
      %v1786 = vadd.f32 %v1625, %v1785
      %v1787 = vpop.f32.mrf.mxu0
      %1788 = vmatprep.mubr.bf16.mxu0 0
      %1789 = vmatmul.mubr.bf16.gmra.mxu0 %v1151
      %v1790 = vpop.f32.mrf.mxu0
      %v1791 = vadd.f32 %v1630, %v1790
      %v1792 = vpop.f32.mrf.mxu0
      %v1793 = vpop.f32.mrf.mxu0
      %v1794 = vadd.f32 %v1633, %v1793
      %v1795 = vpop.f32.mrf.mxu0
      %1796 = vdwg.mxu0
      %v1797 = vmax.f32 %v1671, 0.0
      %v1798 = vmax.f32 %v1674, 0.0
      %v1799 = vmax.f32 %v1679, 0.0
      %v1800 = vmax.f32 %v1682, 0.0
      %v1801 = vmax.f32 %v1687, 0.0
      %v1802 = vmax.f32 %v1690, 0.0
      %v1803 = vmax.f32 %v1695, 0.0
      %v1804 = vmax.f32 %v1698, 0.0
      %v1805 = vmax.f32 %v1703, 0.0
      %v1806 = vmax.f32 %v1706, 0.0
      %v1807 = vmax.f32 %v1711, 0.0
      %v1808 = vmax.f32 %v1714, 0.0
      %v1809 = vmax.f32 %v1719, 0.0
      %v1810 = vmax.f32 %v1722, 0.0
      %v1811 = vmax.f32 %v1727, 0.0
      %v1812 = vmax.f32 %v1730, 0.0
      %v1813 = vmax.f32 %v1735, 0.0
      %v1814 = vmax.f32 %v1738, 0.0
      %v1815 = vmax.f32 %v1743, 0.0
      %v1816 = vmax.f32 %v1746, 0.0
      %v1817 = vmax.f32 %v1751, 0.0
      %v1818 = vmax.f32 %v1754, 0.0
      %v1819 = vmax.f32 %v1759, 0.0
      %v1820 = vmax.f32 %v1762, 0.0
      %v1821 = vmax.f32 %v1767, 0.0
      %v1822 = vmax.f32 %v1770, 0.0
      %v1823 = vmax.f32 %v1775, 0.0
      %v1824 = vmax.f32 %v1778, 0.0
      %v1825 = vmax.f32 %v1783, 0.0
      %v1826 = vmax.f32 %v1786, 0.0
      %v1827 = vmax.f32 %v1791, 0.0
      %v1828 = vmax.f32 %v1794, 0.0
      %v1829 = vld [vmem:[%s2] sm:$0xf]
      %v1830 = vld [vmem:[%s2 + $0x4] sm:$0xf]
      %v1831 = vld [vmem:[%s2 + $0x8] sm:$0xf]
      %v1832 = vld [vmem:[%s2 + $0xc] sm:$0xf]
      %v1833 = vld [vmem:[%s2 + $0x10] sm:$0xf]
      %v1834 = vld [vmem:[%s2 + $0x14] sm:$0xf]
      %v1835 = vld [vmem:[%s2 + $0x18] sm:$0xf]
      %v1836 = vld [vmem:[%s2 + $0x1c] sm:$0xf]
      %v1837 = vld [vmem:[%s2 + $0x20] sm:$0xf]
      %v1838 = vld [vmem:[%s2 + $0x24] sm:$0xf]
      %v1839 = vld [vmem:[%s2 + $0x28] sm:$0xf]
      %v1840 = vld [vmem:[%s2 + $0x2c] sm:$0xf]
      %v1841 = vld [vmem:[%s2 + $0x30] sm:$0xf]
      %v1842 = vld [vmem:[%s2 + $0x34] sm:$0xf]
      %v1843 = vld [vmem:[%s2 + $0x38] sm:$0xf]
      %v1844 = vld [vmem:[%s2 + $0x3c] sm:$0xf]
      %v1845 = vld [vmem:[%s9 + $0x1] sm:$0x1]
      %v1846 = vpack.c.bf16 %v1798, %v1797
      %v1847 = vpack.c.bf16 %v1800, %v1799
      %v1848 = vpack.c.bf16 %v1802, %v1801
      %v1849 = vpack.c.bf16 %v1804, %v1803
      %v1850 = vpack.c.bf16 %v1806, %v1805
      %v1851 = vpack.c.bf16 %v1808, %v1807
      %v1852 = vpack.c.bf16 %v1810, %v1809
      %v1853 = vpack.c.bf16 %v1812, %v1811
      %v1854 = vpack.c.bf16 %v1814, %v1813
      %v1855 = vpack.c.bf16 %v1816, %v1815
      %v1856 = vpack.c.bf16 %v1818, %v1817
      %v1857 = vpack.c.bf16 %v1820, %v1819
      %v1858 = vpack.c.bf16 %v1822, %v1821
      %v1859 = vpack.c.bf16 %v1824, %v1823
      %v1860 = vpack.c.bf16 %v1826, %v1825
      %v1861 = vpack.c.bf16 %v1828, %v1827
      %v1863 = vlaneseq
      %v1864 = vshrl.u32 %v1863, 7
      %v1865 = vsub.s32 0, %v1864
      %v1866 = vrot.slane %v1845, %v1865
      %v1884 = vunpack.c.l.b16 %v1829
      %v1885 = vunpack.c.l.b16 %v1830
      %v1886 = vunpack.c.l.b16 %v1831
      %v1887 = vunpack.c.l.b16 %v1832
      %v1888 = vunpack.c.l.b16 %v1833
      %v1889 = vunpack.c.l.b16 %v1834
      %v1890 = vunpack.c.l.b16 %v1835
      %v1891 = vunpack.c.l.b16 %v1836
      %v1892 = vunpack.c.l.b16 %v1837
      %v1893 = vunpack.c.l.b16 %v1838
      %v1894 = vunpack.c.l.b16 %v1839
      %v1895 = vunpack.c.l.b16 %v1840
      %v1896 = vunpack.c.l.b16 %v1841
      %v1897 = vunpack.c.l.b16 %v1842
      %v1898 = vunpack.c.l.b16 %v1843
      %v1899 = vunpack.c.l.b16 %v1844
      %v1900 = vpack.c.b16 %v1885, %v1884
      %v1901 = vpack.c.b16 %v1887, %v1886
      %v1902 = vpack.c.b16 %v1889, %v1888
      %v1903 = vpack.c.b16 %v1891, %v1890
      %v1904 = vpack.c.b16 %v1893, %v1892
      %v1905 = vpack.c.b16 %v1895, %v1894
      %v1906 = vpack.c.b16 %v1897, %v1896
      %v1907 = vpack.c.b16 %v1899, %v1898
      %1916 = vmatprep.subr.bf16.mxu0 0
      %1917 = vmatpush1.bf16.msra.mxu0 %v1907
      %1918 = vmatprep.subr.bf16.mxu0 0
      %1919 = vmatpush1.bf16.msra.mxu0 %v1906
      %1920 = vmatprep.subr.bf16.mxu0 0
      %1921 = vmatpush1.bf16.msra.mxu0 %v1905
      %1922 = vmatprep.subr.bf16.mxu0 0
      %1923 = vmatpush1.bf16.msra.mxu0 %v1904
      %1924 = vmatprep.subr.bf16.mxu0 0
      %1925 = vmatpush1.bf16.msra.mxu0 %v1903
      %1926 = vmatprep.subr.bf16.mxu0 0
      %1927 = vmatpush1.bf16.msra.mxu0 %v1902
      %1928 = vmatprep.subr.bf16.mxu0 0
      %1929 = vmatpush1.bf16.msra.mxu0 %v1901
      %1930 = vmatprep.subr.bf16.mxu0 0
      %1931 = vmatpush1.bf16.msra.mxu0 %v1900
      %1932 = vmatprep.subr.bf16.mxu0 0
      %1933 = vmatpush2.bf16.msra.mxu0 0
      %1934 = vmatprep.subr.bf16.mxu0 0
      %1935 = vmatpush2.bf16.msra.mxu0 0
      %1936 = vmatprep.subr.bf16.mxu0 0
      %1937 = vmatpush2.bf16.msra.mxu0 0
      %1938 = vmatprep.subr.bf16.mxu0 0
      %1939 = vmatpush2.bf16.msra.mxu0 0
      %1940 = vmatprep.subr.bf16.mxu0 0
      %1941 = vmatpush2.bf16.msra.mxu0 0
      %1942 = vmatprep.subr.bf16.mxu0 0
      %1943 = vmatpush2.bf16.msra.mxu0 0
      %1944 = vmatprep.subr.bf16.mxu0 0
      %1945 = vmatpush2.bf16.msra.mxu0 0
      %1946 = vmatprep.subr.bf16.mxu0 0
      %1947 = vmatpush2.bf16.msra.mxu0 0
      %1948 = vmatprep.mubr.bf16.mxu0 0
      %1949 = vmatmul.mubr.bf16.gmra.mxu0 %v1846
      %v1950 = vpop.f32.mrf.mxu0
      %v1951 = vadd.f32 %v1866, %v1950
      %v1952 = vpop.f32.mrf.mxu0
      %v1953 = vpop.f32.mrf.mxu0
      %v1954 = vadd.f32 %v1866, %v1953
      %v1955 = vpop.f32.mrf.mxu0
      %1956 = vmatprep.mubr.bf16.mxu0 0
      %1957 = vmatmul.mubr.bf16.gmra.mxu0 %v1847
      %v1958 = vpop.f32.mrf.mxu0
      %v1959 = vadd.f32 %v1866, %v1958
      %v1960 = vpop.f32.mrf.mxu0
      %v1961 = vpop.f32.mrf.mxu0
      %v1962 = vadd.f32 %v1866, %v1961
      %v1963 = vpop.f32.mrf.mxu0
      %1964 = vmatprep.mubr.bf16.mxu0 0
      %1965 = vmatmul.mubr.bf16.gmra.mxu0 %v1848
      %v1966 = vpop.f32.mrf.mxu0
      %v1967 = vadd.f32 %v1866, %v1966
      %v1968 = vpop.f32.mrf.mxu0
      %v1969 = vpop.f32.mrf.mxu0
      %v1970 = vadd.f32 %v1866, %v1969
      %v1971 = vpop.f32.mrf.mxu0
      %1972 = vmatprep.mubr.bf16.mxu0 0
      %1973 = vmatmul.mubr.bf16.gmra.mxu0 %v1849
      %v1974 = vpop.f32.mrf.mxu0
      %v1975 = vadd.f32 %v1866, %v1974
      %v1976 = vpop.f32.mrf.mxu0
      %v1977 = vpop.f32.mrf.mxu0
      %v1978 = vadd.f32 %v1866, %v1977
      %v1979 = vpop.f32.mrf.mxu0
      %1980 = vmatprep.mubr.bf16.mxu0 0
      %1981 = vmatmul.mubr.bf16.gmra.mxu0 %v1850
      %v1982 = vpop.f32.mrf.mxu0
      %v1983 = vadd.f32 %v1866, %v1982
      %v1984 = vpop.f32.mrf.mxu0
      %v1985 = vpop.f32.mrf.mxu0
      %v1986 = vadd.f32 %v1866, %v1985
      %v1987 = vpop.f32.mrf.mxu0
      %1988 = vmatprep.mubr.bf16.mxu0 0
      %1989 = vmatmul.mubr.bf16.gmra.mxu0 %v1851
      %v1990 = vpop.f32.mrf.mxu0
      %v1991 = vadd.f32 %v1866, %v1990
      %v1992 = vpop.f32.mrf.mxu0
      %v1993 = vpop.f32.mrf.mxu0
      %v1994 = vadd.f32 %v1866, %v1993
      %v1995 = vpop.f32.mrf.mxu0
      %1996 = vmatprep.mubr.bf16.mxu0 0
      %1997 = vmatmul.mubr.bf16.gmra.mxu0 %v1852
      %v1998 = vpop.f32.mrf.mxu0
      %v1999 = vadd.f32 %v1866, %v1998
      %v2000 = vpop.f32.mrf.mxu0
      %v2001 = vpop.f32.mrf.mxu0
      %v2002 = vadd.f32 %v1866, %v2001
      %v2003 = vpop.f32.mrf.mxu0
      %2004 = vmatprep.mubr.bf16.mxu0 0
      %2005 = vmatmul.mubr.bf16.gmra.mxu0 %v1853
      %v2006 = vpop.f32.mrf.mxu0
      %v2007 = vadd.f32 %v1866, %v2006
      %v2008 = vpop.f32.mrf.mxu0
      %v2009 = vpop.f32.mrf.mxu0
      %v2010 = vadd.f32 %v1866, %v2009
      %v2011 = vpop.f32.mrf.mxu0
      %2012 = vmatprep.mubr.bf16.mxu0 0
      %2013 = vmatmul.mubr.bf16.gmra.mxu0 %v1854
      %v2014 = vpop.f32.mrf.mxu0
      %v2015 = vadd.f32 %v1866, %v2014
      %v2016 = vpop.f32.mrf.mxu0
      %v2017 = vpop.f32.mrf.mxu0
      %v2018 = vadd.f32 %v1866, %v2017
      %v2019 = vpop.f32.mrf.mxu0
      %2020 = vmatprep.mubr.bf16.mxu0 0
      %2021 = vmatmul.mubr.bf16.gmra.mxu0 %v1855
      %v2022 = vpop.f32.mrf.mxu0
      %v2023 = vadd.f32 %v1866, %v2022
      %v2024 = vpop.f32.mrf.mxu0
      %v2025 = vpop.f32.mrf.mxu0
      %v2026 = vadd.f32 %v1866, %v2025
      %v2027 = vpop.f32.mrf.mxu0
      %2028 = vmatprep.mubr.bf16.mxu0 0
      %2029 = vmatmul.mubr.bf16.gmra.mxu0 %v1856
      %v2030 = vpop.f32.mrf.mxu0
      %v2031 = vadd.f32 %v1866, %v2030
      %v2032 = vpop.f32.mrf.mxu0
      %v2033 = vpop.f32.mrf.mxu0
      %v2034 = vadd.f32 %v1866, %v2033
      %v2035 = vpop.f32.mrf.mxu0
      %2036 = vmatprep.mubr.bf16.mxu0 0
      %2037 = vmatmul.mubr.bf16.gmra.mxu0 %v1857
      %v2038 = vpop.f32.mrf.mxu0
      %v2039 = vadd.f32 %v1866, %v2038
      %v2040 = vpop.f32.mrf.mxu0
      %v2041 = vpop.f32.mrf.mxu0
      %v2042 = vadd.f32 %v1866, %v2041
      %v2043 = vpop.f32.mrf.mxu0
      %2044 = vmatprep.mubr.bf16.mxu0 0
      %2045 = vmatmul.mubr.bf16.gmra.mxu0 %v1858
      %v2046 = vpop.f32.mrf.mxu0
      %v2047 = vadd.f32 %v1866, %v2046
      %v2048 = vpop.f32.mrf.mxu0
      %v2049 = vpop.f32.mrf.mxu0
      %v2050 = vadd.f32 %v1866, %v2049
      %v2051 = vpop.f32.mrf.mxu0
      %2052 = vmatprep.mubr.bf16.mxu0 0
      %2053 = vmatmul.mubr.bf16.gmra.mxu0 %v1859
      %v2054 = vpop.f32.mrf.mxu0
      %v2055 = vadd.f32 %v1866, %v2054
      %v2056 = vpop.f32.mrf.mxu0
      %v2057 = vpop.f32.mrf.mxu0
      %v2058 = vadd.f32 %v1866, %v2057
      %v2059 = vpop.f32.mrf.mxu0
      %2060 = vmatprep.mubr.bf16.mxu0 0
      %2061 = vmatmul.mubr.bf16.gmra.mxu0 %v1860
      %v2062 = vpop.f32.mrf.mxu0
      %v2063 = vadd.f32 %v1866, %v2062
      %v2064 = vpop.f32.mrf.mxu0
      %v2065 = vpop.f32.mrf.mxu0
      %v2066 = vadd.f32 %v1866, %v2065
      %v2067 = vpop.f32.mrf.mxu0
      %2068 = vmatprep.mubr.bf16.mxu0 0
      %2069 = vmatmul.mubr.bf16.gmra.mxu0 %v1861
      %v2070 = vpop.f32.mrf.mxu0
      %v2071 = vadd.f32 %v1866, %v2070
      %v2072 = vpop.f32.mrf.mxu0
      %v2073 = vpop.f32.mrf.mxu0
      %v2074 = vadd.f32 %v1866, %v2073
      %v2075 = vpop.f32.mrf.mxu0
      %2076 = vdwg.mxu0
      %v2077 = vmax.f32 %v1951, 0.0
      %v2078 = vmax.f32 %v1954, 0.0
      %v2079 = vmax.f32 %v1959, 0.0
      %v2080 = vmax.f32 %v1962, 0.0
      %v2081 = vmax.f32 %v1967, 0.0
      %v2082 = vmax.f32 %v1970, 0.0
      %v2083 = vmax.f32 %v1975, 0.0
      %v2084 = vmax.f32 %v1978, 0.0
      %v2085 = vmax.f32 %v1983, 0.0
      %v2086 = vmax.f32 %v1986, 0.0
      %v2087 = vmax.f32 %v1991, 0.0
      %v2088 = vmax.f32 %v1994, 0.0
      %v2089 = vmax.f32 %v1999, 0.0
      %v2090 = vmax.f32 %v2002, 0.0
      %v2091 = vmax.f32 %v2007, 0.0
      %v2092 = vmax.f32 %v2010, 0.0
      %v2093 = vmax.f32 %v2015, 0.0
      %v2094 = vmax.f32 %v2018, 0.0
      %v2095 = vmax.f32 %v2023, 0.0
      %v2096 = vmax.f32 %v2026, 0.0
      %v2097 = vmax.f32 %v2031, 0.0
      %v2098 = vmax.f32 %v2034, 0.0
      %v2099 = vmax.f32 %v2039, 0.0
      %v2100 = vmax.f32 %v2042, 0.0
      %v2101 = vmax.f32 %v2047, 0.0
      %v2102 = vmax.f32 %v2050, 0.0
      %v2103 = vmax.f32 %v2055, 0.0
      %v2104 = vmax.f32 %v2058, 0.0
      %v2105 = vmax.f32 %v2063, 0.0
      %v2106 = vmax.f32 %v2066, 0.0
      %v2107 = vmax.f32 %v2071, 0.0
      %v2108 = vmax.f32 %v2074, 0.0
      %v2109 = vld [vmem:[%s3] sm:$0xf]
      %v2110 = vld [vmem:[%s3 + $0x4] sm:$0xf]
      %v2111 = vld [vmem:[%s3 + $0x8] sm:$0xf]
      %v2112 = vld [vmem:[%s3 + $0xc] sm:$0xf]
      %v2113 = vld [vmem:[%s3 + $0x10] sm:$0xf]
      %v2114 = vld [vmem:[%s3 + $0x14] sm:$0xf]
      %v2115 = vld [vmem:[%s3 + $0x18] sm:$0xf]
      %v2116 = vld [vmem:[%s3 + $0x1c] sm:$0xf]
      %v2117 = vld [vmem:[%s9 + $0x2] sm:$0x1]
      %v2118 = vpack.c.bf16 %v2078, %v2077
      %v2119 = vpack.c.bf16 %v2080, %v2079
      %v2120 = vpack.c.bf16 %v2082, %v2081
      %v2121 = vpack.c.bf16 %v2084, %v2083
      %v2122 = vpack.c.bf16 %v2086, %v2085
      %v2123 = vpack.c.bf16 %v2088, %v2087
      %v2124 = vpack.c.bf16 %v2090, %v2089
      %v2125 = vpack.c.bf16 %v2092, %v2091
      %v2126 = vpack.c.bf16 %v2094, %v2093
      %v2127 = vpack.c.bf16 %v2096, %v2095
      %v2128 = vpack.c.bf16 %v2098, %v2097
      %v2129 = vpack.c.bf16 %v2100, %v2099
      %v2130 = vpack.c.bf16 %v2102, %v2101
      %v2131 = vpack.c.bf16 %v2104, %v2103
      %v2132 = vpack.c.bf16 %v2106, %v2105
      %v2133 = vpack.c.bf16 %v2108, %v2107
      %v2135 = vlaneseq
      %v2136 = vshrl.u32 %v2135, 7
      %v2137 = vsub.s32 0, %v2136
      %v2138 = vrot.slane %v2117, %v2137
      %v2148 = vunpack.c.l.b16 %v2109
      %v2149 = vunpack.c.l.b16 %v2110
      %v2150 = vunpack.c.l.b16 %v2111
      %v2151 = vunpack.c.l.b16 %v2112
      %v2152 = vunpack.c.l.b16 %v2113
      %v2153 = vunpack.c.l.b16 %v2114
      %v2154 = vunpack.c.l.b16 %v2115
      %v2155 = vunpack.c.l.b16 %v2116
      %v2156 = vpack.c.b16 %v2149, %v2148
      %v2157 = vpack.c.b16 %v2151, %v2150
      %v2158 = vpack.c.b16 %v2153, %v2152
      %v2159 = vpack.c.b16 %v2155, %v2154
      %vm2164 = vcmask 523264
      %v2166 = vsel %vm2164, %v2118, 0
      %v2169 = vsel %vm2164, %v2119, 0
      %v2172 = vsel %vm2164, %v2120, 0
      %v2175 = vsel %vm2164, %v2121, 0
      %v2178 = vsel %vm2164, %v2122, 0
      %v2181 = vsel %vm2164, %v2123, 0
      %v2184 = vsel %vm2164, %v2124, 0
      %v2187 = vsel %vm2164, %v2125, 0
      %v2190 = vsel %vm2164, %v2126, 0
      %v2193 = vsel %vm2164, %v2127, 0
      %v2196 = vsel %vm2164, %v2128, 0
      %v2199 = vsel %vm2164, %v2129, 0
      %v2202 = vsel %vm2164, %v2130, 0
      %v2205 = vsel %vm2164, %v2131, 0
      %v2208 = vsel %vm2164, %v2132, 0
      %v2211 = vsel %vm2164, %v2133, 0
      %2213 = vmatprep.subr.bf16.mxu0 0
      %2214 = vmatpush1.bf16.msra.mxu0 0
      %2215 = vmatprep.subr.bf16.mxu0 0
      %2216 = vmatpush1.bf16.msra.mxu0 0
      %2217 = vmatprep.subr.bf16.mxu0 0
      %2218 = vmatpush1.bf16.msra.mxu0 0
      %2219 = vmatprep.subr.bf16.mxu0 0
      %2220 = vmatpush1.bf16.msra.mxu0 0
      %2221 = vmatprep.subr.bf16.mxu0 0
      %2222 = vmatpush1.bf16.msra.mxu0 %v2159
      %2223 = vmatprep.subr.bf16.mxu0 0
      %2224 = vmatpush1.bf16.msra.mxu0 %v2158
      %2225 = vmatprep.subr.bf16.mxu0 0
      %2226 = vmatpush1.bf16.msra.mxu0 %v2157
      %2227 = vmatprep.subr.bf16.mxu0 0
      %2228 = vmatpush1.bf16.msra.mxu0 %v2156
      %2229 = vmatprep.subr.bf16.mxu0 0
      %2230 = vmatpush2.bf16.msra.mxu0 0
      %2231 = vmatprep.subr.bf16.mxu0 0
      %2232 = vmatpush2.bf16.msra.mxu0 0
      %2233 = vmatprep.subr.bf16.mxu0 0
      %2234 = vmatpush2.bf16.msra.mxu0 0
      %2235 = vmatprep.subr.bf16.mxu0 0
      %2236 = vmatpush2.bf16.msra.mxu0 0
      %2237 = vmatprep.subr.bf16.mxu0 0
      %2238 = vmatpush2.bf16.msra.mxu0 0
      %2239 = vmatprep.subr.bf16.mxu0 0
      %2240 = vmatpush2.bf16.msra.mxu0 0
      %2241 = vmatprep.subr.bf16.mxu0 0
      %2242 = vmatpush2.bf16.msra.mxu0 0
      %2243 = vmatprep.subr.bf16.mxu0 0
      %2244 = vmatpush2.bf16.msra.mxu0 0
      %2245 = vmatprep.mubr.bf16.mxu0 0
      %2246 = vmatmul.mubr.bf16.gmra.mxu0 %v2166
      %v2247 = vpop.f32.mrf.mxu0
      %v2248 = vadd.f32 %v2138, %v2247
      %v2249 = vpop.f32.mrf.mxu0
      %v2250 = vpop.f32.mrf.mxu0
      %v2251 = vadd.f32 %v2138, %v2250
      %v2252 = vpop.f32.mrf.mxu0
      %2253 = vmatprep.mubr.bf16.mxu0 0
      %2254 = vmatmul.mubr.bf16.gmra.mxu0 %v2169
      %v2255 = vpop.f32.mrf.mxu0
      %v2256 = vadd.f32 %v2138, %v2255
      %v2257 = vpop.f32.mrf.mxu0
      %v2258 = vpop.f32.mrf.mxu0
      %v2259 = vadd.f32 %v2138, %v2258
      %v2260 = vpop.f32.mrf.mxu0
      %2261 = vmatprep.mubr.bf16.mxu0 0
      %2262 = vmatmul.mubr.bf16.gmra.mxu0 %v2172
      %v2263 = vpop.f32.mrf.mxu0
      %v2264 = vadd.f32 %v2138, %v2263
      %v2265 = vpop.f32.mrf.mxu0
      %v2266 = vpop.f32.mrf.mxu0
      %v2267 = vadd.f32 %v2138, %v2266
      %v2268 = vpop.f32.mrf.mxu0
      %2269 = vmatprep.mubr.bf16.mxu0 0
      %2270 = vmatmul.mubr.bf16.gmra.mxu0 %v2175
      %v2271 = vpop.f32.mrf.mxu0
      %v2272 = vadd.f32 %v2138, %v2271
      %v2273 = vpop.f32.mrf.mxu0
      %v2274 = vpop.f32.mrf.mxu0
      %v2275 = vadd.f32 %v2138, %v2274
      %v2276 = vpop.f32.mrf.mxu0
      %2277 = vmatprep.mubr.bf16.mxu0 0
      %2278 = vmatmul.mubr.bf16.gmra.mxu0 %v2178
      %v2279 = vpop.f32.mrf.mxu0
      %v2280 = vadd.f32 %v2138, %v2279
      %v2281 = vpop.f32.mrf.mxu0
      %v2282 = vpop.f32.mrf.mxu0
      %v2283 = vadd.f32 %v2138, %v2282
      %v2284 = vpop.f32.mrf.mxu0
      %2285 = vmatprep.mubr.bf16.mxu0 0
      %2286 = vmatmul.mubr.bf16.gmra.mxu0 %v2181
      %v2287 = vpop.f32.mrf.mxu0
      %v2288 = vadd.f32 %v2138, %v2287
      %v2289 = vpop.f32.mrf.mxu0
      %v2290 = vpop.f32.mrf.mxu0
      %v2291 = vadd.f32 %v2138, %v2290
      %v2292 = vpop.f32.mrf.mxu0
      %2293 = vmatprep.mubr.bf16.mxu0 0
      %2294 = vmatmul.mubr.bf16.gmra.mxu0 %v2184
      %v2295 = vpop.f32.mrf.mxu0
      %v2296 = vadd.f32 %v2138, %v2295
      %v2297 = vpop.f32.mrf.mxu0
      %v2298 = vpop.f32.mrf.mxu0
      %v2299 = vadd.f32 %v2138, %v2298
      %v2300 = vpop.f32.mrf.mxu0
      %2301 = vmatprep.mubr.bf16.mxu0 0
      %2302 = vmatmul.mubr.bf16.gmra.mxu0 %v2187
      %v2303 = vpop.f32.mrf.mxu0
      %v2304 = vadd.f32 %v2138, %v2303
      %v2305 = vpop.f32.mrf.mxu0
      %v2306 = vpop.f32.mrf.mxu0
      %v2307 = vadd.f32 %v2138, %v2306
      %v2308 = vpop.f32.mrf.mxu0
      %2309 = vmatprep.mubr.bf16.mxu0 0
      %2310 = vmatmul.mubr.bf16.gmra.mxu0 %v2190
      %v2311 = vpop.f32.mrf.mxu0
      %v2312 = vadd.f32 %v2138, %v2311
      %v2313 = vpop.f32.mrf.mxu0
      %v2314 = vpop.f32.mrf.mxu0
      %v2315 = vadd.f32 %v2138, %v2314
      %v2316 = vpop.f32.mrf.mxu0
      %2317 = vmatprep.mubr.bf16.mxu0 0
      %2318 = vmatmul.mubr.bf16.gmra.mxu0 %v2193
      %v2319 = vpop.f32.mrf.mxu0
      %v2320 = vadd.f32 %v2138, %v2319
      %v2321 = vpop.f32.mrf.mxu0
      %v2322 = vpop.f32.mrf.mxu0
      %v2323 = vadd.f32 %v2138, %v2322
      %v2324 = vpop.f32.mrf.mxu0
      %2325 = vmatprep.mubr.bf16.mxu0 0
      %2326 = vmatmul.mubr.bf16.gmra.mxu0 %v2196
      %v2327 = vpop.f32.mrf.mxu0
      %v2328 = vadd.f32 %v2138, %v2327
      %v2329 = vpop.f32.mrf.mxu0
      %v2330 = vpop.f32.mrf.mxu0
      %v2331 = vadd.f32 %v2138, %v2330
      %v2332 = vpop.f32.mrf.mxu0
      %2333 = vmatprep.mubr.bf16.mxu0 0
      %2334 = vmatmul.mubr.bf16.gmra.mxu0 %v2199
      %v2335 = vpop.f32.mrf.mxu0
      %v2336 = vadd.f32 %v2138, %v2335
      %v2337 = vpop.f32.mrf.mxu0
      %v2338 = vpop.f32.mrf.mxu0
      %v2339 = vadd.f32 %v2138, %v2338
      %v2340 = vpop.f32.mrf.mxu0
      %2341 = vmatprep.mubr.bf16.mxu0 0
      %2342 = vmatmul.mubr.bf16.gmra.mxu0 %v2202
      %v2343 = vpop.f32.mrf.mxu0
      %v2344 = vadd.f32 %v2138, %v2343
      %v2345 = vpop.f32.mrf.mxu0
      %v2346 = vpop.f32.mrf.mxu0
      %v2347 = vadd.f32 %v2138, %v2346
      %v2348 = vpop.f32.mrf.mxu0
      %2349 = vmatprep.mubr.bf16.mxu0 0
      %2350 = vmatmul.mubr.bf16.gmra.mxu0 %v2205
      %v2351 = vpop.f32.mrf.mxu0
      %v2352 = vadd.f32 %v2138, %v2351
      %v2353 = vpop.f32.mrf.mxu0
      %v2354 = vpop.f32.mrf.mxu0
      %v2355 = vadd.f32 %v2138, %v2354
      %v2356 = vpop.f32.mrf.mxu0
      %2357 = vmatprep.mubr.bf16.mxu0 0
      %2358 = vmatmul.mubr.bf16.gmra.mxu0 %v2208
      %v2359 = vpop.f32.mrf.mxu0
      %v2360 = vadd.f32 %v2138, %v2359
      %v2361 = vpop.f32.mrf.mxu0
      %v2362 = vpop.f32.mrf.mxu0
      %v2363 = vadd.f32 %v2138, %v2362
      %v2364 = vpop.f32.mrf.mxu0
      %2365 = vmatprep.mubr.bf16.mxu0 0
      %2366 = vmatmul.mubr.bf16.gmra.mxu0 %v2211
      %v2367 = vpop.f32.mrf.mxu0
      %v2368 = vadd.f32 %v2138, %v2367
      %v2369 = vpop.f32.mrf.mxu0
      %v2370 = vpop.f32.mrf.mxu0
      %v2371 = vadd.f32 %v2138, %v2370
      %v2372 = vpop.f32.mrf.mxu0
      %2373 = vdwg.mxu0
      %v2374 = vmax.f32 %v2248, 0.0
      %v2375 = vmax.f32 %v2251, 0.0
      %v2376 = vmax.f32 %v2256, 0.0
      %v2377 = vmax.f32 %v2259, 0.0
      %v2378 = vmax.f32 %v2264, 0.0
      %v2379 = vmax.f32 %v2267, 0.0
      %v2380 = vmax.f32 %v2272, 0.0
      %v2381 = vmax.f32 %v2275, 0.0
      %v2382 = vmax.f32 %v2280, 0.0
      %v2383 = vmax.f32 %v2283, 0.0
      %v2384 = vmax.f32 %v2288, 0.0
      %v2385 = vmax.f32 %v2291, 0.0
      %v2386 = vmax.f32 %v2296, 0.0
      %v2387 = vmax.f32 %v2299, 0.0
      %v2388 = vmax.f32 %v2304, 0.0
      %v2389 = vmax.f32 %v2307, 0.0
      %v2390 = vmax.f32 %v2312, 0.0
      %v2391 = vmax.f32 %v2315, 0.0
      %v2392 = vmax.f32 %v2320, 0.0
      %v2393 = vmax.f32 %v2323, 0.0
      %v2394 = vmax.f32 %v2328, 0.0
      %v2395 = vmax.f32 %v2331, 0.0
      %v2396 = vmax.f32 %v2336, 0.0
      %v2397 = vmax.f32 %v2339, 0.0
      %v2398 = vmax.f32 %v2344, 0.0
      %v2399 = vmax.f32 %v2347, 0.0
      %v2400 = vmax.f32 %v2352, 0.0
      %v2401 = vmax.f32 %v2355, 0.0
      %v2402 = vmax.f32 %v2360, 0.0
      %v2403 = vmax.f32 %v2363, 0.0
      %v2404 = vmax.f32 %v2368, 0.0
      %v2405 = vmax.f32 %v2371, 0.0
      %v2406 = vld [vmem:[%s4] sm:$0xf]
      %v2407 = vld [vmem:[%s4 + $0x4] sm:$0x3]
      %v2408 = vld [vmem:[%s9 + $0x3] sm:$0x1]
      %v2409 = vpack.c.bf16 %v2375, %v2374
      %v2410 = vpack.c.bf16 %v2377, %v2376
      %v2411 = vpack.c.bf16 %v2379, %v2378
      %v2412 = vpack.c.bf16 %v2381, %v2380
      %v2413 = vpack.c.bf16 %v2383, %v2382
      %v2414 = vpack.c.bf16 %v2385, %v2384
      %v2415 = vpack.c.bf16 %v2387, %v2386
      %v2416 = vpack.c.bf16 %v2389, %v2388
      %v2417 = vpack.c.bf16 %v2391, %v2390
      %v2418 = vpack.c.bf16 %v2393, %v2392
      %v2419 = vpack.c.bf16 %v2395, %v2394
      %v2420 = vpack.c.bf16 %v2397, %v2396
      %v2421 = vpack.c.bf16 %v2399, %v2398
      %v2422 = vpack.c.bf16 %v2401, %v2400
      %v2423 = vpack.c.bf16 %v2403, %v2402
      %v2424 = vpack.c.bf16 %v2405, %v2404
      %v2426 = vlaneseq
      %v2427 = vshrl.u32 %v2426, 7
      %v2428 = vsub.s32 0, %v2427
      %v2429 = vrot.slane %v2408, %v2428
      %v2433 = vunpack.c.l.b16 %v2406
      %v2434 = vunpack.c.l.b16 %v2407
      %v2435 = vpack.c.b16 %v2434, %v2433
      %vm2436 = vcmask 97280
      %v2438 = vsel %vm2436, %v2409, 0
      %v2441 = vsel %vm2436, %v2410, 0
      %v2444 = vsel %vm2436, %v2411, 0
      %v2447 = vsel %vm2436, %v2412, 0
      %v2450 = vsel %vm2436, %v2413, 0
      %v2453 = vsel %vm2436, %v2414, 0
      %v2456 = vsel %vm2436, %v2415, 0
      %v2459 = vsel %vm2436, %v2416, 0
      %v2462 = vsel %vm2436, %v2417, 0
      %v2465 = vsel %vm2436, %v2418, 0
      %v2468 = vsel %vm2436, %v2419, 0
      %v2471 = vsel %vm2436, %v2420, 0
      %v2474 = vsel %vm2436, %v2421, 0
      %v2477 = vsel %vm2436, %v2422, 0
      %v2480 = vsel %vm2436, %v2423, 0
      %v2483 = vsel %vm2436, %v2424, 0
      %vm2485 = vcmask 1045504
      %v2487 = vsel %vm2485, %v2435, 0
      %2489 = vmatprep.subr.bf16.mxu0 0
      %2490 = vmatpush1.bf16.msra.mxu0 0
      %2491 = vmatprep.subr.bf16.mxu0 0
      %2492 = vmatpush1.bf16.msra.mxu0 0
      %2493 = vmatprep.subr.bf16.mxu0 0
      %2494 = vmatpush1.bf16.msra.mxu0 0
      %2495 = vmatprep.subr.bf16.mxu0 0
      %2496 = vmatpush1.bf16.msra.mxu0 0
      %2497 = vmatprep.subr.bf16.mxu0 0
      %2498 = vmatpush1.bf16.msra.mxu0 0
      %2499 = vmatprep.subr.bf16.mxu0 0
      %2500 = vmatpush1.bf16.msra.mxu0 0
      %2501 = vmatprep.subr.bf16.mxu0 0
      %2502 = vmatpush1.bf16.msra.mxu0 0
      %2503 = vmatprep.subr.bf16.mxu0 0
      %2504 = vmatpush1.bf16.msra.mxu0 %v2487
      %2505 = vmatprep.subr.bf16.mxu0 0
      %2506 = vmatpush2.bf16.msra.mxu0 0
      %2507 = vmatprep.subr.bf16.mxu0 0
      %2508 = vmatpush2.bf16.msra.mxu0 0
      %2509 = vmatprep.subr.bf16.mxu0 0
      %2510 = vmatpush2.bf16.msra.mxu0 0
      %2511 = vmatprep.subr.bf16.mxu0 0
      %2512 = vmatpush2.bf16.msra.mxu0 0
      %2513 = vmatprep.subr.bf16.mxu0 0
      %2514 = vmatpush2.bf16.msra.mxu0 0
      %2515 = vmatprep.subr.bf16.mxu0 0
      %2516 = vmatpush2.bf16.msra.mxu0 0
      %2517 = vmatprep.subr.bf16.mxu0 0
      %2518 = vmatpush2.bf16.msra.mxu0 0
      %2519 = vmatprep.subr.bf16.mxu0 0
      %2520 = vmatpush2.bf16.msra.mxu0 0
      %2521 = vmatprep.mubr.bf16.mxu0 0
      %2522 = vmatmul.mubr.bf16.gmra.mxu0 %v2438
      %v2523 = vpop.f32.mrf.mxu0
      %v2524 = vadd.f32 %v2429, %v2523
      %v2525 = vpop.f32.mrf.mxu0
      %v2526 = vpop.f32.mrf.mxu0
      %v2527 = vadd.f32 %v2429, %v2526
      %v2528 = vpop.f32.mrf.mxu0
      %2529 = vmatprep.mubr.bf16.mxu0 0
      %2530 = vmatmul.mubr.bf16.gmra.mxu0 %v2441
      %v2531 = vpop.f32.mrf.mxu0
      %v2532 = vadd.f32 %v2429, %v2531
      %v2533 = vpop.f32.mrf.mxu0
      %v2534 = vpop.f32.mrf.mxu0
      %v2535 = vadd.f32 %v2429, %v2534
      %v2536 = vpop.f32.mrf.mxu0
      %2537 = vmatprep.mubr.bf16.mxu0 0
      %2538 = vmatmul.mubr.bf16.gmra.mxu0 %v2444
      %v2539 = vpop.f32.mrf.mxu0
      %v2540 = vadd.f32 %v2429, %v2539
      %v2541 = vpop.f32.mrf.mxu0
      %v2542 = vpop.f32.mrf.mxu0
      %v2543 = vadd.f32 %v2429, %v2542
      %v2544 = vpop.f32.mrf.mxu0
      %2545 = vmatprep.mubr.bf16.mxu0 0
      %2546 = vmatmul.mubr.bf16.gmra.mxu0 %v2447
      %v2547 = vpop.f32.mrf.mxu0
      %v2548 = vadd.f32 %v2429, %v2547
      %v2549 = vpop.f32.mrf.mxu0
      %v2550 = vpop.f32.mrf.mxu0
      %v2551 = vadd.f32 %v2429, %v2550
      %v2552 = vpop.f32.mrf.mxu0
      %2553 = vmatprep.mubr.bf16.mxu0 0
      %2554 = vmatmul.mubr.bf16.gmra.mxu0 %v2450
      %v2555 = vpop.f32.mrf.mxu0
      %v2556 = vadd.f32 %v2429, %v2555
      %v2557 = vpop.f32.mrf.mxu0
      %v2558 = vpop.f32.mrf.mxu0
      %v2559 = vadd.f32 %v2429, %v2558
      %v2560 = vpop.f32.mrf.mxu0
      %2561 = vmatprep.mubr.bf16.mxu0 0
      %2562 = vmatmul.mubr.bf16.gmra.mxu0 %v2453
      %v2563 = vpop.f32.mrf.mxu0
      %v2564 = vadd.f32 %v2429, %v2563
      %v2565 = vpop.f32.mrf.mxu0
      %v2566 = vpop.f32.mrf.mxu0
      %v2567 = vadd.f32 %v2429, %v2566
      %v2568 = vpop.f32.mrf.mxu0
      %2569 = vmatprep.mubr.bf16.mxu0 0
      %2570 = vmatmul.mubr.bf16.gmra.mxu0 %v2456
      %v2571 = vpop.f32.mrf.mxu0
      %v2572 = vadd.f32 %v2429, %v2571
      %v2573 = vpop.f32.mrf.mxu0
      %v2574 = vpop.f32.mrf.mxu0
      %v2575 = vadd.f32 %v2429, %v2574
      %v2576 = vpop.f32.mrf.mxu0
      %2577 = vmatprep.mubr.bf16.mxu0 0
      %2578 = vmatmul.mubr.bf16.gmra.mxu0 %v2459
      %v2579 = vpop.f32.mrf.mxu0
      %v2580 = vadd.f32 %v2429, %v2579
      %v2581 = vpop.f32.mrf.mxu0
      %v2582 = vpop.f32.mrf.mxu0
      %v2583 = vadd.f32 %v2429, %v2582
      %v2584 = vpop.f32.mrf.mxu0
      %2585 = vmatprep.mubr.bf16.mxu0 0
      %2586 = vmatmul.mubr.bf16.gmra.mxu0 %v2462
      %v2587 = vpop.f32.mrf.mxu0
      %v2588 = vadd.f32 %v2429, %v2587
      %v2589 = vpop.f32.mrf.mxu0
      %v2590 = vpop.f32.mrf.mxu0
      %v2591 = vadd.f32 %v2429, %v2590
      %v2592 = vpop.f32.mrf.mxu0
      %2593 = vmatprep.mubr.bf16.mxu0 0
      %2594 = vmatmul.mubr.bf16.gmra.mxu0 %v2465
      %v2595 = vpop.f32.mrf.mxu0
      %v2596 = vadd.f32 %v2429, %v2595
      %v2597 = vpop.f32.mrf.mxu0
      %v2598 = vpop.f32.mrf.mxu0
      %v2599 = vadd.f32 %v2429, %v2598
      %v2600 = vpop.f32.mrf.mxu0
      %2601 = vmatprep.mubr.bf16.mxu0 0
      %2602 = vmatmul.mubr.bf16.gmra.mxu0 %v2468
      %v2603 = vpop.f32.mrf.mxu0
      %v2604 = vadd.f32 %v2429, %v2603
      %v2605 = vpop.f32.mrf.mxu0
      %v2606 = vpop.f32.mrf.mxu0
      %v2607 = vadd.f32 %v2429, %v2606
      %v2608 = vpop.f32.mrf.mxu0
      %2609 = vmatprep.mubr.bf16.mxu0 0
      %2610 = vmatmul.mubr.bf16.gmra.mxu0 %v2471
      %v2611 = vpop.f32.mrf.mxu0
      %v2612 = vadd.f32 %v2429, %v2611
      %v2613 = vpop.f32.mrf.mxu0
      %v2614 = vpop.f32.mrf.mxu0
      %v2615 = vadd.f32 %v2429, %v2614
      %v2616 = vpop.f32.mrf.mxu0
      %2617 = vmatprep.mubr.bf16.mxu0 0
      %2618 = vmatmul.mubr.bf16.gmra.mxu0 %v2474
      %v2619 = vpop.f32.mrf.mxu0
      %v2620 = vadd.f32 %v2429, %v2619
      %v2621 = vpop.f32.mrf.mxu0
      %v2622 = vpop.f32.mrf.mxu0
      %v2623 = vadd.f32 %v2429, %v2622
      %v2624 = vpop.f32.mrf.mxu0
      %2625 = vmatprep.mubr.bf16.mxu0 0
      %2626 = vmatmul.mubr.bf16.gmra.mxu0 %v2477
      %v2627 = vpop.f32.mrf.mxu0
      %v2628 = vadd.f32 %v2429, %v2627
      %v2629 = vpop.f32.mrf.mxu0
      %v2630 = vpop.f32.mrf.mxu0
      %v2631 = vadd.f32 %v2429, %v2630
      %v2632 = vpop.f32.mrf.mxu0
      %2633 = vmatprep.mubr.bf16.mxu0 0
      %2634 = vmatmul.mubr.bf16.gmra.mxu0 %v2480
      %v2635 = vpop.f32.mrf.mxu0
      %v2636 = vadd.f32 %v2429, %v2635
      %v2637 = vpop.f32.mrf.mxu0
      %v2638 = vpop.f32.mrf.mxu0
      %v2639 = vadd.f32 %v2429, %v2638
      %v2640 = vpop.f32.mrf.mxu0
      %2641 = vmatprep.mubr.bf16.mxu0 0
      %2642 = vmatmul.mubr.bf16.gmra.mxu0 %v2483
      %v2643 = vpop.f32.mrf.mxu0
      %v2644 = vadd.f32 %v2429, %v2643
      %v2645 = vpop.f32.mrf.mxu0
      %v2646 = vpop.f32.mrf.mxu0
      %v2647 = vadd.f32 %v2429, %v2646
      %v2648 = vpop.f32.mrf.mxu0
      %2649 = vdwg.mxu0
      %v2650 = vld [vmem:[%s5] sm:$0x3]
      %v2651 = vld [vmem:[%s9 + $0x4] sm:$0x1]
      %v2652 = vpack.c.bf16 %v2527, %v2524
      %v2653 = vpack.c.bf16 %v2535, %v2532
      %v2654 = vpack.c.bf16 %v2543, %v2540
      %v2655 = vpack.c.bf16 %v2551, %v2548
      %v2656 = vpack.c.bf16 %v2559, %v2556
      %v2657 = vpack.c.bf16 %v2567, %v2564
      %v2658 = vpack.c.bf16 %v2575, %v2572
      %v2659 = vpack.c.bf16 %v2583, %v2580
      %v2660 = vpack.c.bf16 %v2591, %v2588
      %v2661 = vpack.c.bf16 %v2599, %v2596
      %v2662 = vpack.c.bf16 %v2607, %v2604
      %v2663 = vpack.c.bf16 %v2615, %v2612
      %v2664 = vpack.c.bf16 %v2623, %v2620
      %v2665 = vpack.c.bf16 %v2631, %v2628
      %v2666 = vpack.c.bf16 %v2639, %v2636
      %v2667 = vpack.c.bf16 %v2647, %v2644
      %v2669 = vlaneseq
      %v2670 = vshrl.u32 %v2669, 7
      %v2671 = vsub.s32 0, %v2670
      %v2672 = vrot.slane %v2651, %v2671
      %vm2674 = vcmask 23552
      %v2676 = vsel %vm2674, %v2652, 0
      %v2679 = vsel %vm2674, %v2653, 0
      %v2682 = vsel %vm2674, %v2654, 0
      %v2685 = vsel %vm2674, %v2655, 0
      %v2688 = vsel %vm2674, %v2656, 0
      %v2691 = vsel %vm2674, %v2657, 0
      %v2694 = vsel %vm2674, %v2658, 0
      %v2697 = vsel %vm2674, %v2659, 0
      %v2700 = vsel %vm2674, %v2660, 0
      %v2703 = vsel %vm2674, %v2661, 0
      %v2706 = vsel %vm2674, %v2662, 0
      %v2709 = vsel %vm2674, %v2663, 0
      %v2712 = vsel %vm2674, %v2664, 0
      %v2715 = vsel %vm2674, %v2665, 0
      %v2718 = vsel %vm2674, %v2666, 0
      %v2721 = vsel %vm2674, %v2667, 0
      %vm2723 = vcmask 1040384
      %vm2724 = vcmask 1041408
      %v2725 = vsel %vm2723, 4294967295, 65535
      %v2726 = vsel %vm2724, %v2725, 0
      %v2728 = vand.u32 %v2650, %v2726
      %2730 = vmatprep.subr.bf16.mxu0 0
      %2731 = vmatpush1.bf16.msra.mxu0 0
      %2732 = vmatprep.subr.bf16.mxu0 0
      %2733 = vmatpush1.bf16.msra.mxu0 0
      %2734 = vmatprep.subr.bf16.mxu0 0
      %2735 = vmatpush1.bf16.msra.mxu0 0
      %2736 = vmatprep.subr.bf16.mxu0 0
      %2737 = vmatpush1.bf16.msra.mxu0 0
      %2738 = vmatprep.subr.bf16.mxu0 0
      %2739 = vmatpush1.bf16.msra.mxu0 0
      %2740 = vmatprep.subr.bf16.mxu0 0
      %2741 = vmatpush1.bf16.msra.mxu0 0
      %2742 = vmatprep.subr.bf16.mxu0 0
      %2743 = vmatpush1.bf16.msra.mxu0 0
      %2744 = vmatprep.subr.bf16.mxu0 0
      %2745 = vmatpush1.bf16.msra.mxu0 %v2728
      %2746 = vmatprep.subr.bf16.mxu0 0
      %2747 = vmatpush2.bf16.msra.mxu0 0
      %2748 = vmatprep.subr.bf16.mxu0 0
      %2749 = vmatpush2.bf16.msra.mxu0 0
      %2750 = vmatprep.subr.bf16.mxu0 0
      %2751 = vmatpush2.bf16.msra.mxu0 0
      %2752 = vmatprep.subr.bf16.mxu0 0
      %2753 = vmatpush2.bf16.msra.mxu0 0
      %2754 = vmatprep.subr.bf16.mxu0 0
      %2755 = vmatpush2.bf16.msra.mxu0 0
      %2756 = vmatprep.subr.bf16.mxu0 0
      %2757 = vmatpush2.bf16.msra.mxu0 0
      %2758 = vmatprep.subr.bf16.mxu0 0
      %2759 = vmatpush2.bf16.msra.mxu0 0
      %2760 = vmatprep.subr.bf16.mxu0 0
      %2761 = vmatpush2.bf16.msra.mxu0 0
      %2762 = vmatprep.mubr.bf16.mxu0 0
      %2763 = vmatmul.mubr.bf16.gmra.mxu0 %v2676
      %v2764 = vpop.f32.mrf.mxu0
      %v2765 = vadd.f32 %v2672, %v2764
      %v2766 = vpop.f32.mrf.mxu0
      %v2767 = vpop.f32.mrf.mxu0
      %v2768 = vadd.f32 %v2672, %v2767
      %v2769 = vpop.f32.mrf.mxu0
      %2770 = vmatprep.mubr.bf16.mxu0 0
      %2771 = vmatmul.mubr.bf16.gmra.mxu0 %v2679
      %v2772 = vpop.f32.mrf.mxu0
      %v2773 = vadd.f32 %v2672, %v2772
      %v2774 = vpop.f32.mrf.mxu0
      %v2775 = vpop.f32.mrf.mxu0
      %v2776 = vadd.f32 %v2672, %v2775
      %v2777 = vpop.f32.mrf.mxu0
      %2778 = vmatprep.mubr.bf16.mxu0 0
      %2779 = vmatmul.mubr.bf16.gmra.mxu0 %v2682
      %v2780 = vpop.f32.mrf.mxu0
      %v2781 = vadd.f32 %v2672, %v2780
      %v2782 = vpop.f32.mrf.mxu0
      %v2783 = vpop.f32.mrf.mxu0
      %v2784 = vadd.f32 %v2672, %v2783
      %v2785 = vpop.f32.mrf.mxu0
      %2786 = vmatprep.mubr.bf16.mxu0 0
      %2787 = vmatmul.mubr.bf16.gmra.mxu0 %v2685
      %v2788 = vpop.f32.mrf.mxu0
      %v2789 = vadd.f32 %v2672, %v2788
      %v2790 = vpop.f32.mrf.mxu0
      %v2791 = vpop.f32.mrf.mxu0
      %v2792 = vadd.f32 %v2672, %v2791
      %v2793 = vpop.f32.mrf.mxu0
      %2794 = vmatprep.mubr.bf16.mxu0 0
      %2795 = vmatmul.mubr.bf16.gmra.mxu0 %v2688
      %v2796 = vpop.f32.mrf.mxu0
      %v2797 = vadd.f32 %v2672, %v2796
      %v2798 = vpop.f32.mrf.mxu0
      %v2799 = vpop.f32.mrf.mxu0
      %v2800 = vadd.f32 %v2672, %v2799
      %v2801 = vpop.f32.mrf.mxu0
      %2802 = vmatprep.mubr.bf16.mxu0 0
      %2803 = vmatmul.mubr.bf16.gmra.mxu0 %v2691
      %v2804 = vpop.f32.mrf.mxu0
      %v2805 = vadd.f32 %v2672, %v2804
      %v2806 = vpop.f32.mrf.mxu0
      %v2807 = vpop.f32.mrf.mxu0
      %v2808 = vadd.f32 %v2672, %v2807
      %v2809 = vpop.f32.mrf.mxu0
      %2810 = vmatprep.mubr.bf16.mxu0 0
      %2811 = vmatmul.mubr.bf16.gmra.mxu0 %v2694
      %v2812 = vpop.f32.mrf.mxu0
      %v2813 = vadd.f32 %v2672, %v2812
      %v2814 = vpop.f32.mrf.mxu0
      %v2815 = vpop.f32.mrf.mxu0
      %v2816 = vadd.f32 %v2672, %v2815
      %v2817 = vpop.f32.mrf.mxu0
      %2818 = vmatprep.mubr.bf16.mxu0 0
      %2819 = vmatmul.mubr.bf16.gmra.mxu0 %v2697
      %v2820 = vpop.f32.mrf.mxu0
      %v2821 = vadd.f32 %v2672, %v2820
      %v2822 = vpop.f32.mrf.mxu0
      %v2823 = vpop.f32.mrf.mxu0
      %v2824 = vadd.f32 %v2672, %v2823
      %v2825 = vpop.f32.mrf.mxu0
      %2826 = vmatprep.mubr.bf16.mxu0 0
      %2827 = vmatmul.mubr.bf16.gmra.mxu0 %v2700
      %v2828 = vpop.f32.mrf.mxu0
      %v2829 = vadd.f32 %v2672, %v2828
      %v2830 = vpop.f32.mrf.mxu0
      %v2831 = vpop.f32.mrf.mxu0
      %v2832 = vadd.f32 %v2672, %v2831
      %v2833 = vpop.f32.mrf.mxu0
      %2834 = vmatprep.mubr.bf16.mxu0 0
      %2835 = vmatmul.mubr.bf16.gmra.mxu0 %v2703
      %v2836 = vpop.f32.mrf.mxu0
      %v2837 = vadd.f32 %v2672, %v2836
      %v2838 = vpop.f32.mrf.mxu0
      %v2839 = vpop.f32.mrf.mxu0
      %v2840 = vadd.f32 %v2672, %v2839
      %v2841 = vpop.f32.mrf.mxu0
      %2842 = vmatprep.mubr.bf16.mxu0 0
      %2843 = vmatmul.mubr.bf16.gmra.mxu0 %v2706
      %v2844 = vpop.f32.mrf.mxu0
      %v2845 = vadd.f32 %v2672, %v2844
      %v2846 = vpop.f32.mrf.mxu0
      %v2847 = vpop.f32.mrf.mxu0
      %v2848 = vadd.f32 %v2672, %v2847
      %v2849 = vpop.f32.mrf.mxu0
      %2850 = vmatprep.mubr.bf16.mxu0 0
      %2851 = vmatmul.mubr.bf16.gmra.mxu0 %v2709
      %v2852 = vpop.f32.mrf.mxu0
      %v2853 = vadd.f32 %v2672, %v2852
      %v2854 = vpop.f32.mrf.mxu0
      %v2855 = vpop.f32.mrf.mxu0
      %v2856 = vadd.f32 %v2672, %v2855
      %v2857 = vpop.f32.mrf.mxu0
      %2858 = vmatprep.mubr.bf16.mxu0 0
      %2859 = vmatmul.mubr.bf16.gmra.mxu0 %v2712
      %v2860 = vpop.f32.mrf.mxu0
      %v2861 = vadd.f32 %v2672, %v2860
      %v2862 = vpop.f32.mrf.mxu0
      %v2863 = vpop.f32.mrf.mxu0
      %v2864 = vadd.f32 %v2672, %v2863
      %v2865 = vpop.f32.mrf.mxu0
      %2866 = vmatprep.mubr.bf16.mxu0 0
      %2867 = vmatmul.mubr.bf16.gmra.mxu0 %v2715
      %v2868 = vpop.f32.mrf.mxu0
      %v2869 = vadd.f32 %v2672, %v2868
      %v2870 = vpop.f32.mrf.mxu0
      %v2871 = vpop.f32.mrf.mxu0
      %v2872 = vadd.f32 %v2672, %v2871
      %v2873 = vpop.f32.mrf.mxu0
      %2874 = vmatprep.mubr.bf16.mxu0 0
      %2875 = vmatmul.mubr.bf16.gmra.mxu0 %v2718
      %v2876 = vpop.f32.mrf.mxu0
      %v2877 = vadd.f32 %v2672, %v2876
      %v2878 = vpop.f32.mrf.mxu0
      %v2879 = vpop.f32.mrf.mxu0
      %v2880 = vadd.f32 %v2672, %v2879
      %v2881 = vpop.f32.mrf.mxu0
      %2882 = vmatprep.mubr.bf16.mxu0 0
      %2883 = vmatmul.mubr.bf16.gmra.mxu0 %v2721
      %v2884 = vpop.f32.mrf.mxu0
      %v2885 = vadd.f32 %v2672, %v2884
      %v2886 = vpop.f32.mrf.mxu0
      %v2887 = vpop.f32.mrf.mxu0
      %v2888 = vadd.f32 %v2672, %v2887
      %v2889 = vpop.f32.mrf.mxu0
      %2890 = vdwg.mxu0
      %v2891 = vmax.f32 %v2765, 0.0
      %v2892 = vmax.f32 %v2768, 0.0
      %v2893 = vmax.f32 %v2773, 0.0
      %v2894 = vmax.f32 %v2776, 0.0
      %v2895 = vmax.f32 %v2781, 0.0
      %v2896 = vmax.f32 %v2784, 0.0
      %v2897 = vmax.f32 %v2789, 0.0
      %v2898 = vmax.f32 %v2792, 0.0
      %v2899 = vmax.f32 %v2797, 0.0
      %v2900 = vmax.f32 %v2800, 0.0
      %v2901 = vmax.f32 %v2805, 0.0
      %v2902 = vmax.f32 %v2808, 0.0
      %v2903 = vmax.f32 %v2813, 0.0
      %v2904 = vmax.f32 %v2816, 0.0
      %v2905 = vmax.f32 %v2821, 0.0
      %v2906 = vmax.f32 %v2824, 0.0
      %v2907 = vmax.f32 %v2829, 0.0
      %v2908 = vmax.f32 %v2832, 0.0
      %v2909 = vmax.f32 %v2837, 0.0
      %v2910 = vmax.f32 %v2840, 0.0
      %v2911 = vmax.f32 %v2845, 0.0
      %v2912 = vmax.f32 %v2848, 0.0
      %v2913 = vmax.f32 %v2853, 0.0
      %v2914 = vmax.f32 %v2856, 0.0
      %v2915 = vmax.f32 %v2861, 0.0
      %v2916 = vmax.f32 %v2864, 0.0
      %v2917 = vmax.f32 %v2869, 0.0
      %v2918 = vmax.f32 %v2872, 0.0
      %v2919 = vmax.f32 %v2877, 0.0
      %v2920 = vmax.f32 %v2880, 0.0
      %v2921 = vmax.f32 %v2885, 0.0
      %v2922 = vmax.f32 %v2888, 0.0
      %v2923 = vld [vmem:[%s6] sm:$0xf]
      %v2924 = vld [vmem:[%s6 + $0x4] sm:$0x3]
      %v2925 = vld [vmem:[%s9 + $0x5] sm:$0x1]
      %v2926 = vpack.c.bf16 %v2892, %v2891
      %v2927 = vpack.c.bf16 %v2894, %v2893
      %v2928 = vpack.c.bf16 %v2896, %v2895
      %v2929 = vpack.c.bf16 %v2898, %v2897
      %v2930 = vpack.c.bf16 %v2900, %v2899
      %v2931 = vpack.c.bf16 %v2902, %v2901
      %v2932 = vpack.c.bf16 %v2904, %v2903
      %v2933 = vpack.c.bf16 %v2906, %v2905
      %v2934 = vpack.c.bf16 %v2908, %v2907
      %v2935 = vpack.c.bf16 %v2910, %v2909
      %v2936 = vpack.c.bf16 %v2912, %v2911
      %v2937 = vpack.c.bf16 %v2914, %v2913
      %v2938 = vpack.c.bf16 %v2916, %v2915
      %v2939 = vpack.c.bf16 %v2918, %v2917
      %v2940 = vpack.c.bf16 %v2920, %v2919
      %v2941 = vpack.c.bf16 %v2922, %v2921
      %v2943 = vlaneseq
      %v2944 = vshrl.u32 %v2943, 7
      %v2945 = vsub.s32 0, %v2944
      %v2946 = vrot.slane %v2925, %v2945
      %v2950 = vunpack.c.l.b16 %v2923
      %v2951 = vunpack.c.l.b16 %v2924
      %v2952 = vpack.c.b16 %v2951, %v2950
      %v2954 = vsel %vm2436, %v2926, 0
      %v2957 = vsel %vm2436, %v2927, 0
      %v2960 = vsel %vm2436, %v2928, 0
      %v2963 = vsel %vm2436, %v2929, 0
      %v2966 = vsel %vm2436, %v2930, 0
      %v2969 = vsel %vm2436, %v2931, 0
      %v2972 = vsel %vm2436, %v2932, 0
      %v2975 = vsel %vm2436, %v2933, 0
      %v2978 = vsel %vm2436, %v2934, 0
      %v2981 = vsel %vm2436, %v2935, 0
      %v2984 = vsel %vm2436, %v2936, 0
      %v2987 = vsel %vm2436, %v2937, 0
      %v2990 = vsel %vm2436, %v2938, 0
      %v2993 = vsel %vm2436, %v2939, 0
      %v2996 = vsel %vm2436, %v2940, 0
      %v2999 = vsel %vm2436, %v2941, 0
      %v3002 = vsel %vm2485, %v2952, 0
      %3004 = vmatprep.subr.bf16.mxu0 0
      %3005 = vmatpush1.bf16.msra.mxu0 0
      %3006 = vmatprep.subr.bf16.mxu0 0
      %3007 = vmatpush1.bf16.msra.mxu0 0
      %3008 = vmatprep.subr.bf16.mxu0 0
      %3009 = vmatpush1.bf16.msra.mxu0 0
      %3010 = vmatprep.subr.bf16.mxu0 0
      %3011 = vmatpush1.bf16.msra.mxu0 0
      %3012 = vmatprep.subr.bf16.mxu0 0
      %3013 = vmatpush1.bf16.msra.mxu0 0
      %3014 = vmatprep.subr.bf16.mxu0 0
      %3015 = vmatpush1.bf16.msra.mxu0 0
      %3016 = vmatprep.subr.bf16.mxu0 0
      %3017 = vmatpush1.bf16.msra.mxu0 0
      %3018 = vmatprep.subr.bf16.mxu0 0
      %3019 = vmatpush1.bf16.msra.mxu0 %v3002
      %3020 = vmatprep.subr.bf16.mxu0 0
      %3021 = vmatpush2.bf16.msra.mxu0 0
      %3022 = vmatprep.subr.bf16.mxu0 0
      %3023 = vmatpush2.bf16.msra.mxu0 0
      %3024 = vmatprep.subr.bf16.mxu0 0
      %3025 = vmatpush2.bf16.msra.mxu0 0
      %3026 = vmatprep.subr.bf16.mxu0 0
      %3027 = vmatpush2.bf16.msra.mxu0 0
      %3028 = vmatprep.subr.bf16.mxu0 0
      %3029 = vmatpush2.bf16.msra.mxu0 0
      %3030 = vmatprep.subr.bf16.mxu0 0
      %3031 = vmatpush2.bf16.msra.mxu0 0
      %3032 = vmatprep.subr.bf16.mxu0 0
      %3033 = vmatpush2.bf16.msra.mxu0 0
      %3034 = vmatprep.subr.bf16.mxu0 0
      %3035 = vmatpush2.bf16.msra.mxu0 0
      %3036 = vmatprep.mubr.bf16.mxu0 0
      %3037 = vmatmul.mubr.bf16.gmra.mxu0 %v2954
      %v3038 = vpop.f32.mrf.mxu0
      %v3039 = vadd.f32 %v2946, %v3038
      %v3040 = vpop.f32.mrf.mxu0
      %v3041 = vpop.f32.mrf.mxu0
      %v3042 = vadd.f32 %v2946, %v3041
      %v3043 = vpop.f32.mrf.mxu0
      %3044 = vmatprep.mubr.bf16.mxu0 0
      %3045 = vmatmul.mubr.bf16.gmra.mxu0 %v2957
      %v3046 = vpop.f32.mrf.mxu0
      %v3047 = vadd.f32 %v2946, %v3046
      %v3048 = vpop.f32.mrf.mxu0
      %v3049 = vpop.f32.mrf.mxu0
      %v3050 = vadd.f32 %v2946, %v3049
      %v3051 = vpop.f32.mrf.mxu0
      %3052 = vmatprep.mubr.bf16.mxu0 0
      %3053 = vmatmul.mubr.bf16.gmra.mxu0 %v2960
      %v3054 = vpop.f32.mrf.mxu0
      %v3055 = vadd.f32 %v2946, %v3054
      %v3056 = vpop.f32.mrf.mxu0
      %v3057 = vpop.f32.mrf.mxu0
      %v3058 = vadd.f32 %v2946, %v3057
      %v3059 = vpop.f32.mrf.mxu0
      %3060 = vmatprep.mubr.bf16.mxu0 0
      %3061 = vmatmul.mubr.bf16.gmra.mxu0 %v2963
      %v3062 = vpop.f32.mrf.mxu0
      %v3063 = vadd.f32 %v2946, %v3062
      %v3064 = vpop.f32.mrf.mxu0
      %v3065 = vpop.f32.mrf.mxu0
      %v3066 = vadd.f32 %v2946, %v3065
      %v3067 = vpop.f32.mrf.mxu0
      %3068 = vmatprep.mubr.bf16.mxu0 0
      %3069 = vmatmul.mubr.bf16.gmra.mxu0 %v2966
      %v3070 = vpop.f32.mrf.mxu0
      %v3071 = vadd.f32 %v2946, %v3070
      %v3072 = vpop.f32.mrf.mxu0
      %v3073 = vpop.f32.mrf.mxu0
      %v3074 = vadd.f32 %v2946, %v3073
      %v3075 = vpop.f32.mrf.mxu0
      %3076 = vmatprep.mubr.bf16.mxu0 0
      %3077 = vmatmul.mubr.bf16.gmra.mxu0 %v2969
      %v3078 = vpop.f32.mrf.mxu0
      %v3079 = vadd.f32 %v2946, %v3078
      %v3080 = vpop.f32.mrf.mxu0
      %v3081 = vpop.f32.mrf.mxu0
      %v3082 = vadd.f32 %v2946, %v3081
      %v3083 = vpop.f32.mrf.mxu0
      %3084 = vmatprep.mubr.bf16.mxu0 0
      %3085 = vmatmul.mubr.bf16.gmra.mxu0 %v2972
      %v3086 = vpop.f32.mrf.mxu0
      %v3087 = vadd.f32 %v2946, %v3086
      %v3088 = vpop.f32.mrf.mxu0
      %v3089 = vpop.f32.mrf.mxu0
      %v3090 = vadd.f32 %v2946, %v3089
      %v3091 = vpop.f32.mrf.mxu0
      %3092 = vmatprep.mubr.bf16.mxu0 0
      %3093 = vmatmul.mubr.bf16.gmra.mxu0 %v2975
      %v3094 = vpop.f32.mrf.mxu0
      %v3095 = vadd.f32 %v2946, %v3094
      %v3096 = vpop.f32.mrf.mxu0
      %v3097 = vpop.f32.mrf.mxu0
      %v3098 = vadd.f32 %v2946, %v3097
      %v3099 = vpop.f32.mrf.mxu0
      %3100 = vmatprep.mubr.bf16.mxu0 0
      %3101 = vmatmul.mubr.bf16.gmra.mxu0 %v2978
      %v3102 = vpop.f32.mrf.mxu0
      %v3103 = vadd.f32 %v2946, %v3102
      %v3104 = vpop.f32.mrf.mxu0
      %v3105 = vpop.f32.mrf.mxu0
      %v3106 = vadd.f32 %v2946, %v3105
      %v3107 = vpop.f32.mrf.mxu0
      %3108 = vmatprep.mubr.bf16.mxu0 0
      %3109 = vmatmul.mubr.bf16.gmra.mxu0 %v2981
      %v3110 = vpop.f32.mrf.mxu0
      %v3111 = vadd.f32 %v2946, %v3110
      %v3112 = vpop.f32.mrf.mxu0
      %v3113 = vpop.f32.mrf.mxu0
      %v3114 = vadd.f32 %v2946, %v3113
      %v3115 = vpop.f32.mrf.mxu0
      %3116 = vmatprep.mubr.bf16.mxu0 0
      %3117 = vmatmul.mubr.bf16.gmra.mxu0 %v2984
      %v3118 = vpop.f32.mrf.mxu0
      %v3119 = vadd.f32 %v2946, %v3118
      %v3120 = vpop.f32.mrf.mxu0
      %v3121 = vpop.f32.mrf.mxu0
      %v3122 = vadd.f32 %v2946, %v3121
      %v3123 = vpop.f32.mrf.mxu0
      %3124 = vmatprep.mubr.bf16.mxu0 0
      %3125 = vmatmul.mubr.bf16.gmra.mxu0 %v2987
      %v3126 = vpop.f32.mrf.mxu0
      %v3127 = vadd.f32 %v2946, %v3126
      %v3128 = vpop.f32.mrf.mxu0
      %v3129 = vpop.f32.mrf.mxu0
      %v3130 = vadd.f32 %v2946, %v3129
      %v3131 = vpop.f32.mrf.mxu0
      %3132 = vmatprep.mubr.bf16.mxu0 0
      %3133 = vmatmul.mubr.bf16.gmra.mxu0 %v2990
      %v3134 = vpop.f32.mrf.mxu0
      %v3135 = vadd.f32 %v2946, %v3134
      %v3136 = vpop.f32.mrf.mxu0
      %v3137 = vpop.f32.mrf.mxu0
      %v3138 = vadd.f32 %v2946, %v3137
      %v3139 = vpop.f32.mrf.mxu0
      %3140 = vmatprep.mubr.bf16.mxu0 0
      %3141 = vmatmul.mubr.bf16.gmra.mxu0 %v2993
      %v3142 = vpop.f32.mrf.mxu0
      %v3143 = vadd.f32 %v2946, %v3142
      %v3144 = vpop.f32.mrf.mxu0
      %v3145 = vpop.f32.mrf.mxu0
      %v3146 = vadd.f32 %v2946, %v3145
      %v3147 = vpop.f32.mrf.mxu0
      %3148 = vmatprep.mubr.bf16.mxu0 0
      %3149 = vmatmul.mubr.bf16.gmra.mxu0 %v2996
      %v3150 = vpop.f32.mrf.mxu0
      %v3151 = vadd.f32 %v2946, %v3150
      %v3152 = vpop.f32.mrf.mxu0
      %v3153 = vpop.f32.mrf.mxu0
      %v3154 = vadd.f32 %v2946, %v3153
      %v3155 = vpop.f32.mrf.mxu0
      %3156 = vmatprep.mubr.bf16.mxu0 0
      %3157 = vmatmul.mubr.bf16.gmra.mxu0 %v2999
      %v3158 = vpop.f32.mrf.mxu0
      %v3159 = vadd.f32 %v2946, %v3158
      %v3160 = vpop.f32.mrf.mxu0
      %v3161 = vpop.f32.mrf.mxu0
      %v3162 = vadd.f32 %v2946, %v3161
      %v3163 = vpop.f32.mrf.mxu0
      %3164 = vdwg.mxu0
      %v3165 = vmax.f32 %v3039, 0.0
      %v3166 = vmax.f32 %v3042, 0.0
      %v3167 = vmax.f32 %v3047, 0.0
      %v3168 = vmax.f32 %v3050, 0.0
      %v3169 = vmax.f32 %v3055, 0.0
      %v3170 = vmax.f32 %v3058, 0.0
      %v3171 = vmax.f32 %v3063, 0.0
      %v3172 = vmax.f32 %v3066, 0.0
      %v3173 = vmax.f32 %v3071, 0.0
      %v3174 = vmax.f32 %v3074, 0.0
      %v3175 = vmax.f32 %v3079, 0.0
      %v3176 = vmax.f32 %v3082, 0.0
      %v3177 = vmax.f32 %v3087, 0.0
      %v3178 = vmax.f32 %v3090, 0.0
      %v3179 = vmax.f32 %v3095, 0.0
      %v3180 = vmax.f32 %v3098, 0.0
      %v3181 = vmax.f32 %v3103, 0.0
      %v3182 = vmax.f32 %v3106, 0.0
      %v3183 = vmax.f32 %v3111, 0.0
      %v3184 = vmax.f32 %v3114, 0.0
      %v3185 = vmax.f32 %v3119, 0.0
      %v3186 = vmax.f32 %v3122, 0.0
      %v3187 = vmax.f32 %v3127, 0.0
      %v3188 = vmax.f32 %v3130, 0.0
      %v3189 = vmax.f32 %v3135, 0.0
      %v3190 = vmax.f32 %v3138, 0.0
      %v3191 = vmax.f32 %v3143, 0.0
      %v3192 = vmax.f32 %v3146, 0.0
      %v3193 = vmax.f32 %v3151, 0.0
      %v3194 = vmax.f32 %v3154, 0.0
      %v3195 = vmax.f32 %v3159, 0.0
      %v3196 = vmax.f32 %v3162, 0.0
      %v3197 = vld [vmem:[%s7] sm:$0xf]
      %v3198 = vld [vmem:[%s7 + $0x4] sm:$0xf]
      %v3199 = vld [vmem:[%s7 + $0x8] sm:$0xf]
      %v3200 = vld [vmem:[%s7 + $0xc] sm:$0xf]
      %v3201 = vld [vmem:[%s7 + $0x10] sm:$0xf]
      %v3202 = vld [vmem:[%s7 + $0x14] sm:$0xf]
      %v3203 = vld [vmem:[%s7 + $0x18] sm:$0xf]
      %v3204 = vld [vmem:[%s7 + $0x1c] sm:$0xf]
      %v3205 = vld [vmem:[%s9 + $0x6] sm:$0x1]
      %v3206 = vpack.c.bf16 %v3166, %v3165
      %v3207 = vpack.c.bf16 %v3168, %v3167
      %v3208 = vpack.c.bf16 %v3170, %v3169
      %v3209 = vpack.c.bf16 %v3172, %v3171
      %v3210 = vpack.c.bf16 %v3174, %v3173
      %v3211 = vpack.c.bf16 %v3176, %v3175
      %v3212 = vpack.c.bf16 %v3178, %v3177
      %v3213 = vpack.c.bf16 %v3180, %v3179
      %v3214 = vpack.c.bf16 %v3182, %v3181
      %v3215 = vpack.c.bf16 %v3184, %v3183
      %v3216 = vpack.c.bf16 %v3186, %v3185
      %v3217 = vpack.c.bf16 %v3188, %v3187
      %v3218 = vpack.c.bf16 %v3190, %v3189
      %v3219 = vpack.c.bf16 %v3192, %v3191
      %v3220 = vpack.c.bf16 %v3194, %v3193
      %v3221 = vpack.c.bf16 %v3196, %v3195
      %v3223 = vlaneseq
      %v3224 = vshrl.u32 %v3223, 7
      %v3225 = vsub.s32 0, %v3224
      %v3226 = vrot.slane %v3205, %v3225
      %v3236 = vunpack.c.l.b16 %v3197
      %v3237 = vunpack.c.l.b16 %v3198
      %v3238 = vunpack.c.l.b16 %v3199
      %v3239 = vunpack.c.l.b16 %v3200
      %v3240 = vunpack.c.l.b16 %v3201
      %v3241 = vunpack.c.l.b16 %v3202
      %v3242 = vunpack.c.l.b16 %v3203
      %v3243 = vunpack.c.l.b16 %v3204
      %v3244 = vpack.c.b16 %v3237, %v3236
      %v3245 = vpack.c.b16 %v3239, %v3238
      %v3246 = vpack.c.b16 %v3241, %v3240
      %v3247 = vpack.c.b16 %v3243, %v3242
      %v3253 = vsel %vm2164, %v3206, 0
      %v3256 = vsel %vm2164, %v3207, 0
      %v3259 = vsel %vm2164, %v3208, 0
      %v3262 = vsel %vm2164, %v3209, 0
      %v3265 = vsel %vm2164, %v3210, 0
      %v3268 = vsel %vm2164, %v3211, 0
      %v3271 = vsel %vm2164, %v3212, 0
      %v3274 = vsel %vm2164, %v3213, 0
      %v3277 = vsel %vm2164, %v3214, 0
      %v3280 = vsel %vm2164, %v3215, 0
      %v3283 = vsel %vm2164, %v3216, 0
      %v3286 = vsel %vm2164, %v3217, 0
      %v3289 = vsel %vm2164, %v3218, 0
      %v3292 = vsel %vm2164, %v3219, 0
      %v3295 = vsel %vm2164, %v3220, 0
      %v3298 = vsel %vm2164, %v3221, 0
      %3300 = vmatprep.subr.bf16.mxu0 0
      %3301 = vmatpush1.bf16.msra.mxu0 0
      %3302 = vmatprep.subr.bf16.mxu0 0
      %3303 = vmatpush1.bf16.msra.mxu0 0
      %3304 = vmatprep.subr.bf16.mxu0 0
      %3305 = vmatpush1.bf16.msra.mxu0 0
      %3306 = vmatprep.subr.bf16.mxu0 0
      %3307 = vmatpush1.bf16.msra.mxu0 0
      %3308 = vmatprep.subr.bf16.mxu0 0
      %3309 = vmatpush1.bf16.msra.mxu0 %v3247
      %3310 = vmatprep.subr.bf16.mxu0 0
      %3311 = vmatpush1.bf16.msra.mxu0 %v3246
      %3312 = vmatprep.subr.bf16.mxu0 0
      %3313 = vmatpush1.bf16.msra.mxu0 %v3245
      %3314 = vmatprep.subr.bf16.mxu0 0
      %3315 = vmatpush1.bf16.msra.mxu0 %v3244
      %3316 = vmatprep.subr.bf16.mxu0 0
      %3317 = vmatpush2.bf16.msra.mxu0 0
      %3318 = vmatprep.subr.bf16.mxu0 0
      %3319 = vmatpush2.bf16.msra.mxu0 0
      %3320 = vmatprep.subr.bf16.mxu0 0
      %3321 = vmatpush2.bf16.msra.mxu0 0
      %3322 = vmatprep.subr.bf16.mxu0 0
      %3323 = vmatpush2.bf16.msra.mxu0 0
      %3324 = vmatprep.subr.bf16.mxu0 0
      %3325 = vmatpush2.bf16.msra.mxu0 0
      %3326 = vmatprep.subr.bf16.mxu0 0
      %3327 = vmatpush2.bf16.msra.mxu0 0
      %3328 = vmatprep.subr.bf16.mxu0 0
      %3329 = vmatpush2.bf16.msra.mxu0 0
      %3330 = vmatprep.subr.bf16.mxu0 0
      %3331 = vmatpush2.bf16.msra.mxu0 0
      %3332 = vmatprep.mubr.bf16.mxu0 0
      %3333 = vmatmul.mubr.bf16.gmra.mxu0 %v3253
      %v3334 = vpop.f32.mrf.mxu0
      %v3335 = vadd.f32 %v3226, %v3334
      %v3336 = vpop.f32.mrf.mxu0
      %v3337 = vpop.f32.mrf.mxu0
      %v3338 = vadd.f32 %v3226, %v3337
      %v3339 = vpop.f32.mrf.mxu0
      %3340 = vmatprep.mubr.bf16.mxu0 0
      %3341 = vmatmul.mubr.bf16.gmra.mxu0 %v3256
      %v3342 = vpop.f32.mrf.mxu0
      %v3343 = vadd.f32 %v3226, %v3342
      %v3344 = vpop.f32.mrf.mxu0
      %v3345 = vpop.f32.mrf.mxu0
      %v3346 = vadd.f32 %v3226, %v3345
      %v3347 = vpop.f32.mrf.mxu0
      %3348 = vmatprep.mubr.bf16.mxu0 0
      %3349 = vmatmul.mubr.bf16.gmra.mxu0 %v3259
      %v3350 = vpop.f32.mrf.mxu0
      %v3351 = vadd.f32 %v3226, %v3350
      %v3352 = vpop.f32.mrf.mxu0
      %v3353 = vpop.f32.mrf.mxu0
      %v3354 = vadd.f32 %v3226, %v3353
      %v3355 = vpop.f32.mrf.mxu0
      %3356 = vmatprep.mubr.bf16.mxu0 0
      %3357 = vmatmul.mubr.bf16.gmra.mxu0 %v3262
      %v3358 = vpop.f32.mrf.mxu0
      %v3359 = vadd.f32 %v3226, %v3358
      %v3360 = vpop.f32.mrf.mxu0
      %v3361 = vpop.f32.mrf.mxu0
      %v3362 = vadd.f32 %v3226, %v3361
      %v3363 = vpop.f32.mrf.mxu0
      %3364 = vmatprep.mubr.bf16.mxu0 0
      %3365 = vmatmul.mubr.bf16.gmra.mxu0 %v3265
      %v3366 = vpop.f32.mrf.mxu0
      %v3367 = vadd.f32 %v3226, %v3366
      %v3368 = vpop.f32.mrf.mxu0
      %v3369 = vpop.f32.mrf.mxu0
      %v3370 = vadd.f32 %v3226, %v3369
      %v3371 = vpop.f32.mrf.mxu0
      %3372 = vmatprep.mubr.bf16.mxu0 0
      %3373 = vmatmul.mubr.bf16.gmra.mxu0 %v3268
      %v3374 = vpop.f32.mrf.mxu0
      %v3375 = vadd.f32 %v3226, %v3374
      %v3376 = vpop.f32.mrf.mxu0
      %v3377 = vpop.f32.mrf.mxu0
      %v3378 = vadd.f32 %v3226, %v3377
      %v3379 = vpop.f32.mrf.mxu0
      %3380 = vmatprep.mubr.bf16.mxu0 0
      %3381 = vmatmul.mubr.bf16.gmra.mxu0 %v3271
      %v3382 = vpop.f32.mrf.mxu0
      %v3383 = vadd.f32 %v3226, %v3382
      %v3384 = vpop.f32.mrf.mxu0
      %v3385 = vpop.f32.mrf.mxu0
      %v3386 = vadd.f32 %v3226, %v3385
      %v3387 = vpop.f32.mrf.mxu0
      %3388 = vmatprep.mubr.bf16.mxu0 0
      %3389 = vmatmul.mubr.bf16.gmra.mxu0 %v3274
      %v3390 = vpop.f32.mrf.mxu0
      %v3391 = vadd.f32 %v3226, %v3390
      %v3392 = vpop.f32.mrf.mxu0
      %v3393 = vpop.f32.mrf.mxu0
      %v3394 = vadd.f32 %v3226, %v3393
      %v3395 = vpop.f32.mrf.mxu0
      %3396 = vmatprep.mubr.bf16.mxu0 0
      %3397 = vmatmul.mubr.bf16.gmra.mxu0 %v3277
      %v3398 = vpop.f32.mrf.mxu0
      %v3399 = vadd.f32 %v3226, %v3398
      %v3400 = vpop.f32.mrf.mxu0
      %v3401 = vpop.f32.mrf.mxu0
      %v3402 = vadd.f32 %v3226, %v3401
      %v3403 = vpop.f32.mrf.mxu0
      %3404 = vmatprep.mubr.bf16.mxu0 0
      %3405 = vmatmul.mubr.bf16.gmra.mxu0 %v3280
      %v3406 = vpop.f32.mrf.mxu0
      %v3407 = vadd.f32 %v3226, %v3406
      %v3408 = vpop.f32.mrf.mxu0
      %v3409 = vpop.f32.mrf.mxu0
      %v3410 = vadd.f32 %v3226, %v3409
      %v3411 = vpop.f32.mrf.mxu0
      %3412 = vmatprep.mubr.bf16.mxu0 0
      %3413 = vmatmul.mubr.bf16.gmra.mxu0 %v3283
      %v3414 = vpop.f32.mrf.mxu0
      %v3415 = vadd.f32 %v3226, %v3414
      %v3416 = vpop.f32.mrf.mxu0
      %v3417 = vpop.f32.mrf.mxu0
      %v3418 = vadd.f32 %v3226, %v3417
      %v3419 = vpop.f32.mrf.mxu0
      %3420 = vmatprep.mubr.bf16.mxu0 0
      %3421 = vmatmul.mubr.bf16.gmra.mxu0 %v3286
      %v3422 = vpop.f32.mrf.mxu0
      %v3423 = vadd.f32 %v3226, %v3422
      %v3424 = vpop.f32.mrf.mxu0
      %v3425 = vpop.f32.mrf.mxu0
      %v3426 = vadd.f32 %v3226, %v3425
      %v3427 = vpop.f32.mrf.mxu0
      %3428 = vmatprep.mubr.bf16.mxu0 0
      %3429 = vmatmul.mubr.bf16.gmra.mxu0 %v3289
      %v3430 = vpop.f32.mrf.mxu0
      %v3431 = vadd.f32 %v3226, %v3430
      %v3432 = vpop.f32.mrf.mxu0
      %v3433 = vpop.f32.mrf.mxu0
      %v3434 = vadd.f32 %v3226, %v3433
      %v3435 = vpop.f32.mrf.mxu0
      %3436 = vmatprep.mubr.bf16.mxu0 0
      %3437 = vmatmul.mubr.bf16.gmra.mxu0 %v3292
      %v3438 = vpop.f32.mrf.mxu0
      %v3439 = vadd.f32 %v3226, %v3438
      %v3440 = vpop.f32.mrf.mxu0
      %v3441 = vpop.f32.mrf.mxu0
      %v3442 = vadd.f32 %v3226, %v3441
      %v3443 = vpop.f32.mrf.mxu0
      %3444 = vmatprep.mubr.bf16.mxu0 0
      %3445 = vmatmul.mubr.bf16.gmra.mxu0 %v3295
      %v3446 = vpop.f32.mrf.mxu0
      %v3447 = vadd.f32 %v3226, %v3446
      %v3448 = vpop.f32.mrf.mxu0
      %v3449 = vpop.f32.mrf.mxu0
      %v3450 = vadd.f32 %v3226, %v3449
      %v3451 = vpop.f32.mrf.mxu0
      %3452 = vmatprep.mubr.bf16.mxu0 0
      %3453 = vmatmul.mubr.bf16.gmra.mxu0 %v3298
      %v3454 = vpop.f32.mrf.mxu0
      %v3455 = vadd.f32 %v3226, %v3454
      %v3456 = vpop.f32.mrf.mxu0
      %v3457 = vpop.f32.mrf.mxu0
      %v3458 = vadd.f32 %v3226, %v3457
      %v3459 = vpop.f32.mrf.mxu0
      %3460 = vdwg.mxu0
      %v3461 = vmax.f32 %v3335, 0.0
      %v3462 = vmax.f32 %v3338, 0.0
      %v3463 = vmax.f32 %v3343, 0.0
      %v3464 = vmax.f32 %v3346, 0.0
      %v3465 = vmax.f32 %v3351, 0.0
      %v3466 = vmax.f32 %v3354, 0.0
      %v3467 = vmax.f32 %v3359, 0.0
      %v3468 = vmax.f32 %v3362, 0.0
      %v3469 = vmax.f32 %v3367, 0.0
      %v3470 = vmax.f32 %v3370, 0.0
      %v3471 = vmax.f32 %v3375, 0.0
      %v3472 = vmax.f32 %v3378, 0.0
      %v3473 = vmax.f32 %v3383, 0.0
      %v3474 = vmax.f32 %v3386, 0.0
      %v3475 = vmax.f32 %v3391, 0.0
      %v3476 = vmax.f32 %v3394, 0.0
      %v3477 = vmax.f32 %v3399, 0.0
      %v3478 = vmax.f32 %v3402, 0.0
      %v3479 = vmax.f32 %v3407, 0.0
      %v3480 = vmax.f32 %v3410, 0.0
      %v3481 = vmax.f32 %v3415, 0.0
      %v3482 = vmax.f32 %v3418, 0.0
      %v3483 = vmax.f32 %v3423, 0.0
      %v3484 = vmax.f32 %v3426, 0.0
      %v3485 = vmax.f32 %v3431, 0.0
      %v3486 = vmax.f32 %v3434, 0.0
      %v3487 = vmax.f32 %v3439, 0.0
      %v3488 = vmax.f32 %v3442, 0.0
      %v3489 = vmax.f32 %v3447, 0.0
      %v3490 = vmax.f32 %v3450, 0.0
      %v3491 = vmax.f32 %v3455, 0.0
      %v3492 = vmax.f32 %v3458, 0.0
      %v3493 = vld [vmem:[%s8] sm:$0xff]
      %v3494 = vld [vmem:[%s8 + $0x8] sm:$0xff]
      %v3495 = vld [vmem:[%s8 + $0x10] sm:$0xff]
      %v3496 = vld [vmem:[%s8 + $0x18] sm:$0xf]
      %v3497 = vld [vmem:[%s8 + $0x1c] sm:$0xff]
      %v3498 = vld [vmem:[%s8 + $0x24] sm:$0xff]
      %v3499 = vld [vmem:[%s8 + $0x2c] sm:$0xff]
      %v3500 = vld [vmem:[%s8 + $0x34] sm:$0xf]
      %v3501 = vld [vmem:[%s8 + $0x38] sm:$0xff]
      %v3502 = vld [vmem:[%s8 + $0x40] sm:$0xff]
      %v3503 = vld [vmem:[%s8 + $0x48] sm:$0xff]
      %v3504 = vld [vmem:[%s8 + $0x50] sm:$0xf]
      %v3505 = vld [vmem:[%s8 + $0x54] sm:$0xff]
      %v3506 = vld [vmem:[%s8 + $0x5c] sm:$0xff]
      %v3507 = vld [vmem:[%s8 + $0x64] sm:$0xff]
      %v3508 = vld [vmem:[%s8 + $0x6c] sm:$0xf]
      %v3509 = vld [vmem:[%s8 + $0x70] sm:$0xff]
      %v3510 = vld [vmem:[%s8 + $0x78] sm:$0xff]
      %v3511 = vld [vmem:[%s8 + $0x80] sm:$0xff]
      %v3512 = vld [vmem:[%s8 + $0x88] sm:$0xf]
      %v3513 = vld [vmem:[%s8 + $0x8c] sm:$0xff]
      %v3514 = vld [vmem:[%s8 + $0x94] sm:$0xff]
      %v3515 = vld [vmem:[%s8 + $0x9c] sm:$0xff]
      %v3516 = vld [vmem:[%s8 + $0xa4] sm:$0xf]
      %v3517 = vld [vmem:[%s8 + $0xa8] sm:$0xff]
      %v3518 = vld [vmem:[%s8 + $0xb0] sm:$0xff]
      %v3519 = vld [vmem:[%s8 + $0xb8] sm:$0xff]
      %v3520 = vld [vmem:[%s8 + $0xc0] sm:$0xf]
      %v3521 = vld [vmem:[%s8 + $0xc4] sm:$0xff]
      %v3522 = vld [vmem:[%s8 + $0xcc] sm:$0xff]
      %v3523 = vld [vmem:[%s8 + $0xd4] sm:$0xff]
      %v3524 = vld [vmem:[%s8 + $0xdc] sm:$0xf]
      %v3525 = vld [vmem:[%s8 + $0xe0] sm:$0xff]
      %v3526 = vld [vmem:[%s8 + $0xe8] sm:$0xff]
      %v3527 = vld [vmem:[%s8 + $0xf0] sm:$0xff]
      %v3528 = vld [vmem:[%s8 + $0xf8] sm:$0xf]
      %v3529 = vld [vmem:[%s8 + $0xfc] sm:$0xff]
      %v3530 = vld [vmem:[%s8 + $0x104] sm:$0xff]
      %v3531 = vld [vmem:[%s8 + $0x10c] sm:$0xff]
      %v3532 = vld [vmem:[%s8 + $0x114] sm:$0xf]
      %v3533 = vld [vmem:[%s8 + $0x118] sm:$0xff]
      %v3534 = vld [vmem:[%s8 + $0x120] sm:$0xff]
      %v3535 = vld [vmem:[%s8 + $0x128] sm:$0xff]
      %v3536 = vld [vmem:[%s8 + $0x130] sm:$0xf]
      %v3537 = vld [vmem:[%s8 + $0x134] sm:$0xff]
      %v3538 = vld [vmem:[%s8 + $0x13c] sm:$0xff]
      %v3539 = vld [vmem:[%s8 + $0x144] sm:$0xff]
      %v3540 = vld [vmem:[%s8 + $0x14c] sm:$0xf]
      %v3541 = vld [vmem:[%s8 + $0x150] sm:$0xff]
      %v3542 = vld [vmem:[%s8 + $0x158] sm:$0xff]
      %v3543 = vld [vmem:[%s8 + $0x160] sm:$0xff]
      %v3544 = vld [vmem:[%s8 + $0x168] sm:$0xf]
      %v3545 = vld [vmem:[%s8 + $0x16c] sm:$0xff]
      %v3546 = vld [vmem:[%s8 + $0x174] sm:$0xff]
      %v3547 = vld [vmem:[%s8 + $0x17c] sm:$0xff]
      %v3548 = vld [vmem:[%s8 + $0x184] sm:$0xf]
      %v3549 = vld [vmem:[%s8 + $0x188] sm:$0xff]
      %v3550 = vld [vmem:[%s8 + $0x190] sm:$0xff]
      %v3551 = vld [vmem:[%s8 + $0x198] sm:$0xff]
      %v3552 = vld [vmem:[%s8 + $0x1a0] sm:$0xf]
      %v3553 = vld [vmem:[%s8 + $0x1a4] sm:$0xff]
      %v3554 = vld [vmem:[%s8 + $0x1ac] sm:$0xff]
      %v3555 = vld [vmem:[%s8 + $0x1b4] sm:$0xff]
      %v3556 = vld [vmem:[%s8 + $0x1bc] sm:$0xf]
      %v3557 = vld [vmem:[%s9 + $0x7] sm:$0xff]
      %v3558 = vpack.c.bf16 %v3462, %v3461
      %v3559 = vpack.c.bf16 %v3464, %v3463
      %v3560 = vpack.c.bf16 %v3466, %v3465
      %v3561 = vpack.c.bf16 %v3468, %v3467
      %v3562 = vpack.c.bf16 %v3470, %v3469
      %v3563 = vpack.c.bf16 %v3472, %v3471
      %v3564 = vpack.c.bf16 %v3474, %v3473
      %v3565 = vpack.c.bf16 %v3476, %v3475
      %v3566 = vpack.c.bf16 %v3478, %v3477
      %v3567 = vpack.c.bf16 %v3480, %v3479
      %v3568 = vpack.c.bf16 %v3482, %v3481
      %v3569 = vpack.c.bf16 %v3484, %v3483
      %v3570 = vpack.c.bf16 %v3486, %v3485
      %v3571 = vpack.c.bf16 %v3488, %v3487
      %v3572 = vpack.c.bf16 %v3490, %v3489
      %v3573 = vpack.c.bf16 %v3492, %v3491
      %v3575 = vlaneseq
      %v3576 = vshrl.u32 %v3575, 7
      %v3577 = vsub.s32 0, %v3576
      %v3578 = vrot.slane %v3557, %v3577
      %v3579 = vlaneseq
      %v3580 = vshrl.u32 %v3579, 7
      %v3581 = vsub.s32 1, %v3580
      %v3582 = vrot.slane %v3557, %v3581
      %v3583 = vlaneseq
      %v3584 = vshrl.u32 %v3583, 7
      %v3585 = vsub.s32 2, %v3584
      %v3586 = vrot.slane %v3557, %v3585
      %v3587 = vlaneseq
      %v3588 = vshrl.u32 %v3587, 7
      %v3589 = vsub.s32 3, %v3588
      %v3590 = vrot.slane %v3557, %v3589
      %v3591 = vlaneseq
      %v3592 = vshrl.u32 %v3591, 7
      %v3593 = vsub.s32 4, %v3592
      %v3594 = vrot.slane %v3557, %v3593
      %v3595 = vlaneseq
      %v3596 = vshrl.u32 %v3595, 7
      %v3597 = vsub.s32 5, %v3596
      %v3598 = vrot.slane %v3557, %v3597
      %v3599 = vlaneseq
      %v3600 = vshrl.u32 %v3599, 7
      %v3601 = vsub.s32 6, %v3600
      %v3602 = vrot.slane %v3557, %v3601
      %v3674 = vunpack.c.l.b16 %v3493
      %v3675 = vunpack.c.h.b16 %v3493
      %v3676 = vunpack.c.l.b16 %v3494
      %v3677 = vunpack.c.h.b16 %v3494
      %v3678 = vunpack.c.l.b16 %v3495
      %v3679 = vunpack.c.h.b16 %v3495
      %v3680 = vunpack.c.l.b16 %v3496
      %v3681 = vunpack.c.l.b16 %v3497
      %v3682 = vunpack.c.h.b16 %v3497
      %v3683 = vunpack.c.l.b16 %v3498
      %v3684 = vunpack.c.h.b16 %v3498
      %v3685 = vunpack.c.l.b16 %v3499
      %v3686 = vunpack.c.h.b16 %v3499
      %v3687 = vunpack.c.l.b16 %v3500
      %v3688 = vunpack.c.l.b16 %v3501
      %v3689 = vunpack.c.h.b16 %v3501
      %v3690 = vunpack.c.l.b16 %v3502
      %v3691 = vunpack.c.h.b16 %v3502
      %v3692 = vunpack.c.l.b16 %v3503
      %v3693 = vunpack.c.h.b16 %v3503
      %v3694 = vunpack.c.l.b16 %v3504
      %v3695 = vunpack.c.l.b16 %v3505
      %v3696 = vunpack.c.h.b16 %v3505
      %v3697 = vunpack.c.l.b16 %v3506
      %v3698 = vunpack.c.h.b16 %v3506
      %v3699 = vunpack.c.l.b16 %v3507
      %v3700 = vunpack.c.h.b16 %v3507
      %v3701 = vunpack.c.l.b16 %v3508
      %v3702 = vunpack.c.l.b16 %v3509
      %v3703 = vunpack.c.h.b16 %v3509
      %v3704 = vunpack.c.l.b16 %v3510
      %v3705 = vunpack.c.h.b16 %v3510
      %v3706 = vunpack.c.l.b16 %v3511
      %v3707 = vunpack.c.h.b16 %v3511
      %v3708 = vunpack.c.l.b16 %v3512
      %v3709 = vunpack.c.l.b16 %v3513
      %v3710 = vunpack.c.h.b16 %v3513
      %v3711 = vunpack.c.l.b16 %v3514
      %v3712 = vunpack.c.h.b16 %v3514
      %v3713 = vunpack.c.l.b16 %v3515
      %v3714 = vunpack.c.h.b16 %v3515
      %v3715 = vunpack.c.l.b16 %v3516
      %v3716 = vunpack.c.l.b16 %v3517
      %v3717 = vunpack.c.h.b16 %v3517
      %v3718 = vunpack.c.l.b16 %v3518
      %v3719 = vunpack.c.h.b16 %v3518
      %v3720 = vunpack.c.l.b16 %v3519
      %v3721 = vunpack.c.h.b16 %v3519
      %v3722 = vunpack.c.l.b16 %v3520
      %v3723 = vunpack.c.l.b16 %v3521
      %v3724 = vunpack.c.h.b16 %v3521
      %v3725 = vunpack.c.l.b16 %v3522
      %v3726 = vunpack.c.h.b16 %v3522
      %v3727 = vunpack.c.l.b16 %v3523
      %v3728 = vunpack.c.h.b16 %v3523
      %v3729 = vunpack.c.l.b16 %v3524
      %v3730 = vunpack.c.l.b16 %v3525
      %v3731 = vunpack.c.h.b16 %v3525
      %v3732 = vunpack.c.l.b16 %v3526
      %v3733 = vunpack.c.h.b16 %v3526
      %v3734 = vunpack.c.l.b16 %v3527
      %v3735 = vunpack.c.h.b16 %v3527
      %v3736 = vunpack.c.l.b16 %v3528
      %v3737 = vunpack.c.l.b16 %v3529
      %v3738 = vunpack.c.h.b16 %v3529
      %v3739 = vunpack.c.l.b16 %v3530
      %v3740 = vunpack.c.h.b16 %v3530
      %v3741 = vunpack.c.l.b16 %v3531
      %v3742 = vunpack.c.h.b16 %v3531
      %v3743 = vunpack.c.l.b16 %v3532
      %v3744 = vunpack.c.l.b16 %v3533
      %v3745 = vunpack.c.h.b16 %v3533
      %v3746 = vunpack.c.l.b16 %v3534
      %v3747 = vunpack.c.h.b16 %v3534
      %v3748 = vunpack.c.l.b16 %v3535
      %v3749 = vunpack.c.h.b16 %v3535
      %v3750 = vunpack.c.l.b16 %v3536
      %v3751 = vunpack.c.l.b16 %v3537
      %v3752 = vunpack.c.h.b16 %v3537
      %v3753 = vunpack.c.l.b16 %v3538
      %v3754 = vunpack.c.h.b16 %v3538
      %v3755 = vunpack.c.l.b16 %v3539
      %v3756 = vunpack.c.h.b16 %v3539
      %v3757 = vunpack.c.l.b16 %v3540
      %v3758 = vunpack.c.l.b16 %v3541
      %v3759 = vunpack.c.h.b16 %v3541
      %v3760 = vunpack.c.l.b16 %v3542
      %v3761 = vunpack.c.h.b16 %v3542
      %v3762 = vunpack.c.l.b16 %v3543
      %v3763 = vunpack.c.h.b16 %v3543
      %v3764 = vunpack.c.l.b16 %v3544
      %v3765 = vunpack.c.l.b16 %v3545
      %v3766 = vunpack.c.h.b16 %v3545
      %v3767 = vunpack.c.l.b16 %v3546
      %v3768 = vunpack.c.h.b16 %v3546
      %v3769 = vunpack.c.l.b16 %v3547
      %v3770 = vunpack.c.h.b16 %v3547
      %v3771 = vunpack.c.l.b16 %v3548
      %v3772 = vunpack.c.l.b16 %v3549
      %v3773 = vunpack.c.h.b16 %v3549
      %v3774 = vunpack.c.l.b16 %v3550
      %v3775 = vunpack.c.h.b16 %v3550
      %v3776 = vunpack.c.l.b16 %v3551
      %v3777 = vunpack.c.h.b16 %v3551
      %v3778 = vunpack.c.l.b16 %v3552
      %v3779 = vunpack.c.l.b16 %v3553
      %v3780 = vunpack.c.h.b16 %v3553
      %v3781 = vunpack.c.l.b16 %v3554
      %v3782 = vunpack.c.h.b16 %v3554
      %v3783 = vunpack.c.l.b16 %v3555
      %v3784 = vunpack.c.h.b16 %v3555
      %v3785 = vunpack.c.l.b16 %v3556
      %v3786 = vpack.c.b16 %v3681, %v3674
      %v3787 = vpack.c.b16 %v3682, %v3675
      %v3788 = vpack.c.b16 %v3683, %v3676
      %v3789 = vpack.c.b16 %v3684, %v3677
      %v3790 = vpack.c.b16 %v3685, %v3678
      %v3791 = vpack.c.b16 %v3686, %v3679
      %v3792 = vpack.c.b16 %v3687, %v3680
      %v3793 = vpack.c.b16 %v3695, %v3688
      %v3794 = vpack.c.b16 %v3696, %v3689
      %v3795 = vpack.c.b16 %v3697, %v3690
      %v3796 = vpack.c.b16 %v3698, %v3691
      %v3797 = vpack.c.b16 %v3699, %v3692
      %v3798 = vpack.c.b16 %v3700, %v3693
      %v3799 = vpack.c.b16 %v3701, %v3694
      %v3800 = vpack.c.b16 %v3709, %v3702
      %v3801 = vpack.c.b16 %v3710, %v3703
      %v3802 = vpack.c.b16 %v3711, %v3704
      %v3803 = vpack.c.b16 %v3712, %v3705
      %v3804 = vpack.c.b16 %v3713, %v3706
      %v3805 = vpack.c.b16 %v3714, %v3707
      %v3806 = vpack.c.b16 %v3715, %v3708
      %v3807 = vpack.c.b16 %v3723, %v3716
      %v3808 = vpack.c.b16 %v3724, %v3717
      %v3809 = vpack.c.b16 %v3725, %v3718
      %v3810 = vpack.c.b16 %v3726, %v3719
      %v3811 = vpack.c.b16 %v3727, %v3720
      %v3812 = vpack.c.b16 %v3728, %v3721
      %v3813 = vpack.c.b16 %v3729, %v3722
      %v3814 = vpack.c.b16 %v3737, %v3730
      %v3815 = vpack.c.b16 %v3738, %v3731
      %v3816 = vpack.c.b16 %v3739, %v3732
      %v3817 = vpack.c.b16 %v3740, %v3733
      %v3818 = vpack.c.b16 %v3741, %v3734
      %v3819 = vpack.c.b16 %v3742, %v3735
      %v3820 = vpack.c.b16 %v3743, %v3736
      %v3821 = vpack.c.b16 %v3751, %v3744
      %v3822 = vpack.c.b16 %v3752, %v3745
      %v3823 = vpack.c.b16 %v3753, %v3746
      %v3824 = vpack.c.b16 %v3754, %v3747
      %v3825 = vpack.c.b16 %v3755, %v3748
      %v3826 = vpack.c.b16 %v3756, %v3749
      %v3827 = vpack.c.b16 %v3757, %v3750
      %v3828 = vpack.c.b16 %v3765, %v3758
      %v3829 = vpack.c.b16 %v3766, %v3759
      %v3830 = vpack.c.b16 %v3767, %v3760
      %v3831 = vpack.c.b16 %v3768, %v3761
      %v3832 = vpack.c.b16 %v3769, %v3762
      %v3833 = vpack.c.b16 %v3770, %v3763
      %v3834 = vpack.c.b16 %v3771, %v3764
      %v3835 = vpack.c.b16 %v3779, %v3772
      %v3836 = vpack.c.b16 %v3780, %v3773
      %v3837 = vpack.c.b16 %v3781, %v3774
      %v3838 = vpack.c.b16 %v3782, %v3775
      %v3839 = vpack.c.b16 %v3783, %v3776
      %v3840 = vpack.c.b16 %v3784, %v3777
      %v3841 = vpack.c.b16 %v3785, %v3778
      %3898 = vmatprep.subr.bf16.mxu0 %v3836
      %3899 = vmatpush1.bf16.msra.mxu0 %v3835
      %3900 = vmatprep.subr.bf16.mxu0 %v3829
      %3901 = vmatpush1.bf16.msra.mxu0 %v3828
      %3902 = vmatprep.subr.bf16.mxu0 %v3822
      %3903 = vmatpush1.bf16.msra.mxu0 %v3821
      %3904 = vmatprep.subr.bf16.mxu0 %v3815
      %3905 = vmatpush1.bf16.msra.mxu0 %v3814
      %3906 = vmatprep.subr.bf16.mxu0 %v3808
      %3907 = vmatpush1.bf16.msra.mxu0 %v3807
      %3908 = vmatprep.subr.bf16.mxu0 %v3801
      %3909 = vmatpush1.bf16.msra.mxu0 %v3800
      %3910 = vmatprep.subr.bf16.mxu0 %v3794
      %3911 = vmatpush1.bf16.msra.mxu0 %v3793
      %3912 = vmatprep.subr.bf16.mxu0 %v3787
      %3913 = vmatpush1.bf16.msra.mxu0 %v3786
      %3914 = vmatprep.subr.bf16.mxu0 0
      %3915 = vmatpush2.bf16.msra.mxu0 0
      %3916 = vmatprep.subr.bf16.mxu0 0
      %3917 = vmatpush2.bf16.msra.mxu0 0
      %3918 = vmatprep.subr.bf16.mxu0 0
      %3919 = vmatpush2.bf16.msra.mxu0 0
      %3920 = vmatprep.subr.bf16.mxu0 0
      %3921 = vmatpush2.bf16.msra.mxu0 0
      %3922 = vmatprep.subr.bf16.mxu0 0
      %3923 = vmatpush2.bf16.msra.mxu0 0
      %3924 = vmatprep.subr.bf16.mxu0 0
      %3925 = vmatpush2.bf16.msra.mxu0 0
      %3926 = vmatprep.subr.bf16.mxu0 0
      %3927 = vmatpush2.bf16.msra.mxu0 0
      %3928 = vmatprep.subr.bf16.mxu0 0
      %3929 = vmatpush2.bf16.msra.mxu0 0
      %3930 = vmatprep.mubr.bf16.mxu0 0
      %3931 = vmatmul.mubr.bf16.gmra.mxu0 %v3558
      %v3932 = vpop.f32.mrf.mxu0
      %v3933 = vadd.f32 %v3578, %v3932
      %v3934 = vpop.f32.mrf.mxu0
      %v3935 = vadd.f32 %v3582, %v3934
      %v3936 = vpop.f32.mrf.mxu0
      %v3937 = vadd.f32 %v3578, %v3936
      %v3938 = vpop.f32.mrf.mxu0
      %v3939 = vadd.f32 %v3582, %v3938
      %3940 = vmatprep.mubr.bf16.mxu0 0
      %3941 = vmatmul.mubr.bf16.gmra.mxu0 %v3559
      %v3942 = vpop.f32.mrf.mxu0
      %v3943 = vadd.f32 %v3578, %v3942
      %v3944 = vpop.f32.mrf.mxu0
      %v3945 = vadd.f32 %v3582, %v3944
      %v3946 = vpop.f32.mrf.mxu0
      %v3947 = vadd.f32 %v3578, %v3946
      %v3948 = vpop.f32.mrf.mxu0
      %v3949 = vadd.f32 %v3582, %v3948
      %3950 = vmatprep.mubr.bf16.mxu0 0
      %3951 = vmatmul.mubr.bf16.gmra.mxu0 %v3560
      %v3952 = vpop.f32.mrf.mxu0
      %v3953 = vadd.f32 %v3578, %v3952
      %v3954 = vpop.f32.mrf.mxu0
      %v3955 = vadd.f32 %v3582, %v3954
      %v3956 = vpop.f32.mrf.mxu0
      %v3957 = vadd.f32 %v3578, %v3956
      %v3958 = vpop.f32.mrf.mxu0
      %v3959 = vadd.f32 %v3582, %v3958
      %3960 = vmatprep.mubr.bf16.mxu0 0
      %3961 = vmatmul.mubr.bf16.gmra.mxu0 %v3561
      %v3962 = vpop.f32.mrf.mxu0
      %v3963 = vadd.f32 %v3578, %v3962
      %v3964 = vpop.f32.mrf.mxu0
      %v3965 = vadd.f32 %v3582, %v3964
      %v3966 = vpop.f32.mrf.mxu0
      %v3967 = vadd.f32 %v3578, %v3966
      %v3968 = vpop.f32.mrf.mxu0
      %v3969 = vadd.f32 %v3582, %v3968
      %3970 = vmatprep.mubr.bf16.mxu0 0
      %3971 = vmatmul.mubr.bf16.gmra.mxu0 %v3562
      %v3972 = vpop.f32.mrf.mxu0
      %v3973 = vadd.f32 %v3578, %v3972
      %v3974 = vpop.f32.mrf.mxu0
      %v3975 = vadd.f32 %v3582, %v3974
      %v3976 = vpop.f32.mrf.mxu0
      %v3977 = vadd.f32 %v3578, %v3976
      %v3978 = vpop.f32.mrf.mxu0
      %v3979 = vadd.f32 %v3582, %v3978
      %3980 = vmatprep.mubr.bf16.mxu0 0
      %3981 = vmatmul.mubr.bf16.gmra.mxu0 %v3563
      %v3982 = vpop.f32.mrf.mxu0
      %v3983 = vadd.f32 %v3578, %v3982
      %v3984 = vpop.f32.mrf.mxu0
      %v3985 = vadd.f32 %v3582, %v3984
      %v3986 = vpop.f32.mrf.mxu0
      %v3987 = vadd.f32 %v3578, %v3986
      %v3988 = vpop.f32.mrf.mxu0
      %v3989 = vadd.f32 %v3582, %v3988
      %3990 = vmatprep.mubr.bf16.mxu0 0
      %3991 = vmatmul.mubr.bf16.gmra.mxu0 %v3564
      %v3992 = vpop.f32.mrf.mxu0
      %v3993 = vadd.f32 %v3578, %v3992
      %v3994 = vpop.f32.mrf.mxu0
      %v3995 = vadd.f32 %v3582, %v3994
      %v3996 = vpop.f32.mrf.mxu0
      %v3997 = vadd.f32 %v3578, %v3996
      %v3998 = vpop.f32.mrf.mxu0
      %v3999 = vadd.f32 %v3582, %v3998
      %4000 = vmatprep.mubr.bf16.mxu0 0
      %4001 = vmatmul.mubr.bf16.gmra.mxu0 %v3565
      %v4002 = vpop.f32.mrf.mxu0
      %v4003 = vadd.f32 %v3578, %v4002
      %v4004 = vpop.f32.mrf.mxu0
      %v4005 = vadd.f32 %v3582, %v4004
      %v4006 = vpop.f32.mrf.mxu0
      %v4007 = vadd.f32 %v3578, %v4006
      %v4008 = vpop.f32.mrf.mxu0
      %v4009 = vadd.f32 %v3582, %v4008
      %4010 = vmatprep.mubr.bf16.mxu0 0
      %4011 = vmatmul.mubr.bf16.gmra.mxu0 %v3566
      %v4012 = vpop.f32.mrf.mxu0
      %v4013 = vadd.f32 %v3578, %v4012
      %v4014 = vpop.f32.mrf.mxu0
      %v4015 = vadd.f32 %v3582, %v4014
      %v4016 = vpop.f32.mrf.mxu0
      %v4017 = vadd.f32 %v3578, %v4016
      %v4018 = vpop.f32.mrf.mxu0
      %v4019 = vadd.f32 %v3582, %v4018
      %4020 = vmatprep.mubr.bf16.mxu0 0
      %4021 = vmatmul.mubr.bf16.gmra.mxu0 %v3567
      %v4022 = vpop.f32.mrf.mxu0
      %v4023 = vadd.f32 %v3578, %v4022
      %v4024 = vpop.f32.mrf.mxu0
      %v4025 = vadd.f32 %v3582, %v4024
      %v4026 = vpop.f32.mrf.mxu0
      %v4027 = vadd.f32 %v3578, %v4026
      %v4028 = vpop.f32.mrf.mxu0
      %v4029 = vadd.f32 %v3582, %v4028
      %4030 = vmatprep.mubr.bf16.mxu0 0
      %4031 = vmatmul.mubr.bf16.gmra.mxu0 %v3568
      %v4032 = vpop.f32.mrf.mxu0
      %v4033 = vadd.f32 %v3578, %v4032
      %v4034 = vpop.f32.mrf.mxu0
      %v4035 = vadd.f32 %v3582, %v4034
      %v4036 = vpop.f32.mrf.mxu0
      %v4037 = vadd.f32 %v3578, %v4036
      %v4038 = vpop.f32.mrf.mxu0
      %v4039 = vadd.f32 %v3582, %v4038
      %4040 = vmatprep.mubr.bf16.mxu0 0
      %4041 = vmatmul.mubr.bf16.gmra.mxu0 %v3569
      %v4042 = vpop.f32.mrf.mxu0
      %v4043 = vadd.f32 %v3578, %v4042
      %v4044 = vpop.f32.mrf.mxu0
      %v4045 = vadd.f32 %v3582, %v4044
      %v4046 = vpop.f32.mrf.mxu0
      %v4047 = vadd.f32 %v3578, %v4046
      %v4048 = vpop.f32.mrf.mxu0
      %v4049 = vadd.f32 %v3582, %v4048
      %4050 = vmatprep.mubr.bf16.mxu0 0
      %4051 = vmatmul.mubr.bf16.gmra.mxu0 %v3570
      %v4052 = vpop.f32.mrf.mxu0
      %v4053 = vadd.f32 %v3578, %v4052
      %v4054 = vpop.f32.mrf.mxu0
      %v4055 = vadd.f32 %v3582, %v4054
      %v4056 = vpop.f32.mrf.mxu0
      %v4057 = vadd.f32 %v3578, %v4056
      %v4058 = vpop.f32.mrf.mxu0
      %v4059 = vadd.f32 %v3582, %v4058
      %4060 = vmatprep.mubr.bf16.mxu0 0
      %4061 = vmatmul.mubr.bf16.gmra.mxu0 %v3571
      %v4062 = vpop.f32.mrf.mxu0
      %v4063 = vadd.f32 %v3578, %v4062
      %v4064 = vpop.f32.mrf.mxu0
      %v4065 = vadd.f32 %v3582, %v4064
      %v4066 = vpop.f32.mrf.mxu0
      %v4067 = vadd.f32 %v3578, %v4066
      %v4068 = vpop.f32.mrf.mxu0
      %v4069 = vadd.f32 %v3582, %v4068
      %4070 = vmatprep.mubr.bf16.mxu0 0
      %4071 = vmatmul.mubr.bf16.gmra.mxu0 %v3572
      %v4072 = vpop.f32.mrf.mxu0
      %v4073 = vadd.f32 %v3578, %v4072
      %v4074 = vpop.f32.mrf.mxu0
      %v4075 = vadd.f32 %v3582, %v4074
      %v4076 = vpop.f32.mrf.mxu0
      %v4077 = vadd.f32 %v3578, %v4076
      %v4078 = vpop.f32.mrf.mxu0
      %v4079 = vadd.f32 %v3582, %v4078
      %4080 = vmatprep.mubr.bf16.mxu0 0
      %4081 = vmatmul.mubr.bf16.gmra.mxu0 %v3573
      %v4082 = vpop.f32.mrf.mxu0
      %v4083 = vadd.f32 %v3578, %v4082
      %v4084 = vpop.f32.mrf.mxu0
      %v4085 = vadd.f32 %v3582, %v4084
      %v4086 = vpop.f32.mrf.mxu0
      %v4087 = vadd.f32 %v3578, %v4086
      %v4088 = vpop.f32.mrf.mxu0
      %v4089 = vadd.f32 %v3582, %v4088
      %4090 = vdwg.mxu0
      %4091 = vmatprep.subr.bf16.mxu0 %v3838
      %4092 = vmatpush1.bf16.msra.mxu0 %v3837
      %4093 = vmatprep.subr.bf16.mxu0 %v3831
      %4094 = vmatpush1.bf16.msra.mxu0 %v3830
      %4095 = vmatprep.subr.bf16.mxu0 %v3824
      %4096 = vmatpush1.bf16.msra.mxu0 %v3823
      %4097 = vmatprep.subr.bf16.mxu0 %v3817
      %4098 = vmatpush1.bf16.msra.mxu0 %v3816
      %4099 = vmatprep.subr.bf16.mxu0 %v3810
      %4100 = vmatpush1.bf16.msra.mxu0 %v3809
      %4101 = vmatprep.subr.bf16.mxu0 %v3803
      %4102 = vmatpush1.bf16.msra.mxu0 %v3802
      %4103 = vmatprep.subr.bf16.mxu0 %v3796
      %4104 = vmatpush1.bf16.msra.mxu0 %v3795
      %4105 = vmatprep.subr.bf16.mxu0 %v3789
      %4106 = vmatpush1.bf16.msra.mxu0 %v3788
      %4107 = vmatprep.subr.bf16.mxu0 0
      %4108 = vmatpush2.bf16.msra.mxu0 0
      %4109 = vmatprep.subr.bf16.mxu0 0
      %4110 = vmatpush2.bf16.msra.mxu0 0
      %4111 = vmatprep.subr.bf16.mxu0 0
      %4112 = vmatpush2.bf16.msra.mxu0 0
      %4113 = vmatprep.subr.bf16.mxu0 0
      %4114 = vmatpush2.bf16.msra.mxu0 0
      %4115 = vmatprep.subr.bf16.mxu0 0
      %4116 = vmatpush2.bf16.msra.mxu0 0
      %4117 = vmatprep.subr.bf16.mxu0 0
      %4118 = vmatpush2.bf16.msra.mxu0 0
      %4119 = vmatprep.subr.bf16.mxu0 0
      %4120 = vmatpush2.bf16.msra.mxu0 0
      %4121 = vmatprep.subr.bf16.mxu0 0
      %4122 = vmatpush2.bf16.msra.mxu0 0
      %4123 = vmatprep.mubr.bf16.mxu0 0
      %4124 = vmatmul.mubr.bf16.gmra.mxu0 %v3558
      %v4125 = vpop.f32.mrf.mxu0
      %v4126 = vadd.f32 %v3586, %v4125
      %v4127 = vpop.f32.mrf.mxu0
      %v4128 = vadd.f32 %v3590, %v4127
      %v4129 = vpop.f32.mrf.mxu0
      %v4130 = vadd.f32 %v3586, %v4129
      %v4131 = vpop.f32.mrf.mxu0
      %v4132 = vadd.f32 %v3590, %v4131
      %4133 = vmatprep.mubr.bf16.mxu0 0
      %4134 = vmatmul.mubr.bf16.gmra.mxu0 %v3559
      %v4135 = vpop.f32.mrf.mxu0
      %v4136 = vadd.f32 %v3586, %v4135
      %v4137 = vpop.f32.mrf.mxu0
      %v4138 = vadd.f32 %v3590, %v4137
      %v4139 = vpop.f32.mrf.mxu0
      %v4140 = vadd.f32 %v3586, %v4139
      %v4141 = vpop.f32.mrf.mxu0
      %v4142 = vadd.f32 %v3590, %v4141
      %4143 = vmatprep.mubr.bf16.mxu0 0
      %4144 = vmatmul.mubr.bf16.gmra.mxu0 %v3560
      %v4145 = vpop.f32.mrf.mxu0
      %v4146 = vadd.f32 %v3586, %v4145
      %v4147 = vpop.f32.mrf.mxu0
      %v4148 = vadd.f32 %v3590, %v4147
      %v4149 = vpop.f32.mrf.mxu0
      %v4150 = vadd.f32 %v3586, %v4149
      %v4151 = vpop.f32.mrf.mxu0
      %v4152 = vadd.f32 %v3590, %v4151
      %4153 = vmatprep.mubr.bf16.mxu0 0
      %4154 = vmatmul.mubr.bf16.gmra.mxu0 %v3561
      %v4155 = vpop.f32.mrf.mxu0
      %v4156 = vadd.f32 %v3586, %v4155
      %v4157 = vpop.f32.mrf.mxu0
      %v4158 = vadd.f32 %v3590, %v4157
      %v4159 = vpop.f32.mrf.mxu0
      %v4160 = vadd.f32 %v3586, %v4159
      %v4161 = vpop.f32.mrf.mxu0
      %v4162 = vadd.f32 %v3590, %v4161
      %4163 = vmatprep.mubr.bf16.mxu0 0
      %4164 = vmatmul.mubr.bf16.gmra.mxu0 %v3562
      %v4165 = vpop.f32.mrf.mxu0
      %v4166 = vadd.f32 %v3586, %v4165
      %v4167 = vpop.f32.mrf.mxu0
      %v4168 = vadd.f32 %v3590, %v4167
      %v4169 = vpop.f32.mrf.mxu0
      %v4170 = vadd.f32 %v3586, %v4169
      %v4171 = vpop.f32.mrf.mxu0
      %v4172 = vadd.f32 %v3590, %v4171
      %4173 = vmatprep.mubr.bf16.mxu0 0
      %4174 = vmatmul.mubr.bf16.gmra.mxu0 %v3563
      %v4175 = vpop.f32.mrf.mxu0
      %v4176 = vadd.f32 %v3586, %v4175
      %v4177 = vpop.f32.mrf.mxu0
      %v4178 = vadd.f32 %v3590, %v4177
      %v4179 = vpop.f32.mrf.mxu0
      %v4180 = vadd.f32 %v3586, %v4179
      %v4181 = vpop.f32.mrf.mxu0
      %v4182 = vadd.f32 %v3590, %v4181
      %4183 = vmatprep.mubr.bf16.mxu0 0
      %4184 = vmatmul.mubr.bf16.gmra.mxu0 %v3564
      %v4185 = vpop.f32.mrf.mxu0
      %v4186 = vadd.f32 %v3586, %v4185
      %v4187 = vpop.f32.mrf.mxu0
      %v4188 = vadd.f32 %v3590, %v4187
      %v4189 = vpop.f32.mrf.mxu0
      %v4190 = vadd.f32 %v3586, %v4189
      %v4191 = vpop.f32.mrf.mxu0
      %v4192 = vadd.f32 %v3590, %v4191
      %4193 = vmatprep.mubr.bf16.mxu0 0
      %4194 = vmatmul.mubr.bf16.gmra.mxu0 %v3565
      %v4195 = vpop.f32.mrf.mxu0
      %v4196 = vadd.f32 %v3586, %v4195
      %v4197 = vpop.f32.mrf.mxu0
      %v4198 = vadd.f32 %v3590, %v4197
      %v4199 = vpop.f32.mrf.mxu0
      %v4200 = vadd.f32 %v3586, %v4199
      %v4201 = vpop.f32.mrf.mxu0
      %v4202 = vadd.f32 %v3590, %v4201
      %4203 = vmatprep.mubr.bf16.mxu0 0
      %4204 = vmatmul.mubr.bf16.gmra.mxu0 %v3566
      %v4205 = vpop.f32.mrf.mxu0
      %v4206 = vadd.f32 %v3586, %v4205
      %v4207 = vpop.f32.mrf.mxu0
      %v4208 = vadd.f32 %v3590, %v4207
      %v4209 = vpop.f32.mrf.mxu0
      %v4210 = vadd.f32 %v3586, %v4209
      %v4211 = vpop.f32.mrf.mxu0
      %v4212 = vadd.f32 %v3590, %v4211
      %4213 = vmatprep.mubr.bf16.mxu0 0
      %4214 = vmatmul.mubr.bf16.gmra.mxu0 %v3567
      %v4215 = vpop.f32.mrf.mxu0
      %v4216 = vadd.f32 %v3586, %v4215
      %v4217 = vpop.f32.mrf.mxu0
      %v4218 = vadd.f32 %v3590, %v4217
      %v4219 = vpop.f32.mrf.mxu0
      %v4220 = vadd.f32 %v3586, %v4219
      %v4221 = vpop.f32.mrf.mxu0
      %v4222 = vadd.f32 %v3590, %v4221
      %4223 = vmatprep.mubr.bf16.mxu0 0
      %4224 = vmatmul.mubr.bf16.gmra.mxu0 %v3568
      %v4225 = vpop.f32.mrf.mxu0
      %v4226 = vadd.f32 %v3586, %v4225
      %v4227 = vpop.f32.mrf.mxu0
      %v4228 = vadd.f32 %v3590, %v4227
      %v4229 = vpop.f32.mrf.mxu0
      %v4230 = vadd.f32 %v3586, %v4229
      %v4231 = vpop.f32.mrf.mxu0
      %v4232 = vadd.f32 %v3590, %v4231
      %4233 = vmatprep.mubr.bf16.mxu0 0
      %4234 = vmatmul.mubr.bf16.gmra.mxu0 %v3569
      %v4235 = vpop.f32.mrf.mxu0
      %v4236 = vadd.f32 %v3586, %v4235
      %v4237 = vpop.f32.mrf.mxu0
      %v4238 = vadd.f32 %v3590, %v4237
      %v4239 = vpop.f32.mrf.mxu0
      %v4240 = vadd.f32 %v3586, %v4239
      %v4241 = vpop.f32.mrf.mxu0
      %v4242 = vadd.f32 %v3590, %v4241
      %4243 = vmatprep.mubr.bf16.mxu0 0
      %4244 = vmatmul.mubr.bf16.gmra.mxu0 %v3570
      %v4245 = vpop.f32.mrf.mxu0
      %v4246 = vadd.f32 %v3586, %v4245
      %v4247 = vpop.f32.mrf.mxu0
      %v4248 = vadd.f32 %v3590, %v4247
      %v4249 = vpop.f32.mrf.mxu0
      %v4250 = vadd.f32 %v3586, %v4249
      %v4251 = vpop.f32.mrf.mxu0
      %v4252 = vadd.f32 %v3590, %v4251
      %4253 = vmatprep.mubr.bf16.mxu0 0
      %4254 = vmatmul.mubr.bf16.gmra.mxu0 %v3571
      %v4255 = vpop.f32.mrf.mxu0
      %v4256 = vadd.f32 %v3586, %v4255
      %v4257 = vpop.f32.mrf.mxu0
      %v4258 = vadd.f32 %v3590, %v4257
      %v4259 = vpop.f32.mrf.mxu0
      %v4260 = vadd.f32 %v3586, %v4259
      %v4261 = vpop.f32.mrf.mxu0
      %v4262 = vadd.f32 %v3590, %v4261
      %4263 = vmatprep.mubr.bf16.mxu0 0
      %4264 = vmatmul.mubr.bf16.gmra.mxu0 %v3572
      %v4265 = vpop.f32.mrf.mxu0
      %v4266 = vadd.f32 %v3586, %v4265
      %v4267 = vpop.f32.mrf.mxu0
      %v4268 = vadd.f32 %v3590, %v4267
      %v4269 = vpop.f32.mrf.mxu0
      %v4270 = vadd.f32 %v3586, %v4269
      %v4271 = vpop.f32.mrf.mxu0
      %v4272 = vadd.f32 %v3590, %v4271
      %4273 = vmatprep.mubr.bf16.mxu0 0
      %4274 = vmatmul.mubr.bf16.gmra.mxu0 %v3573
      %v4275 = vpop.f32.mrf.mxu0
      %v4276 = vadd.f32 %v3586, %v4275
      %v4277 = vpop.f32.mrf.mxu0
      %v4278 = vadd.f32 %v3590, %v4277
      %v4279 = vpop.f32.mrf.mxu0
      %v4280 = vadd.f32 %v3586, %v4279
      %v4281 = vpop.f32.mrf.mxu0
      %v4282 = vadd.f32 %v3590, %v4281
      %4283 = vdwg.mxu0
      %4284 = vmatprep.subr.bf16.mxu0 %v3840
      %4285 = vmatpush1.bf16.msra.mxu0 %v3839
      %4286 = vmatprep.subr.bf16.mxu0 %v3833
      %4287 = vmatpush1.bf16.msra.mxu0 %v3832
      %4288 = vmatprep.subr.bf16.mxu0 %v3826
      %4289 = vmatpush1.bf16.msra.mxu0 %v3825
      %4290 = vmatprep.subr.bf16.mxu0 %v3819
      %4291 = vmatpush1.bf16.msra.mxu0 %v3818
      %4292 = vmatprep.subr.bf16.mxu0 %v3812
      %4293 = vmatpush1.bf16.msra.mxu0 %v3811
      %4294 = vmatprep.subr.bf16.mxu0 %v3805
      %4295 = vmatpush1.bf16.msra.mxu0 %v3804
      %4296 = vmatprep.subr.bf16.mxu0 %v3798
      %4297 = vmatpush1.bf16.msra.mxu0 %v3797
      %4298 = vmatprep.subr.bf16.mxu0 %v3791
      %4299 = vmatpush1.bf16.msra.mxu0 %v3790
      %4300 = vmatprep.subr.bf16.mxu0 0
      %4301 = vmatpush2.bf16.msra.mxu0 0
      %4302 = vmatprep.subr.bf16.mxu0 0
      %4303 = vmatpush2.bf16.msra.mxu0 0
      %4304 = vmatprep.subr.bf16.mxu0 0
      %4305 = vmatpush2.bf16.msra.mxu0 0
      %4306 = vmatprep.subr.bf16.mxu0 0
      %4307 = vmatpush2.bf16.msra.mxu0 0
      %4308 = vmatprep.subr.bf16.mxu0 0
      %4309 = vmatpush2.bf16.msra.mxu0 0
      %4310 = vmatprep.subr.bf16.mxu0 0
      %4311 = vmatpush2.bf16.msra.mxu0 0
      %4312 = vmatprep.subr.bf16.mxu0 0
      %4313 = vmatpush2.bf16.msra.mxu0 0
      %4314 = vmatprep.subr.bf16.mxu0 0
      %4315 = vmatpush2.bf16.msra.mxu0 0
      %4316 = vmatprep.mubr.bf16.mxu0 0
      %4317 = vmatmul.mubr.bf16.gmra.mxu0 %v3558
      %v4318 = vpop.f32.mrf.mxu0
      %v4319 = vadd.f32 %v3594, %v4318
      %v4320 = vpop.f32.mrf.mxu0
      %v4321 = vadd.f32 %v3598, %v4320
      %v4322 = vpop.f32.mrf.mxu0
      %v4323 = vadd.f32 %v3594, %v4322
      %v4324 = vpop.f32.mrf.mxu0
      %v4325 = vadd.f32 %v3598, %v4324
      %4326 = vmatprep.mubr.bf16.mxu0 0
      %4327 = vmatmul.mubr.bf16.gmra.mxu0 %v3559
      %v4328 = vpop.f32.mrf.mxu0
      %v4329 = vadd.f32 %v3594, %v4328
      %v4330 = vpop.f32.mrf.mxu0
      %v4331 = vadd.f32 %v3598, %v4330
      %v4332 = vpop.f32.mrf.mxu0
      %v4333 = vadd.f32 %v3594, %v4332
      %v4334 = vpop.f32.mrf.mxu0
      %v4335 = vadd.f32 %v3598, %v4334
      %4336 = vmatprep.mubr.bf16.mxu0 0
      %4337 = vmatmul.mubr.bf16.gmra.mxu0 %v3560
      %v4338 = vpop.f32.mrf.mxu0
      %v4339 = vadd.f32 %v3594, %v4338
      %v4340 = vpop.f32.mrf.mxu0
      %v4341 = vadd.f32 %v3598, %v4340
      %v4342 = vpop.f32.mrf.mxu0
      %v4343 = vadd.f32 %v3594, %v4342
      %v4344 = vpop.f32.mrf.mxu0
      %v4345 = vadd.f32 %v3598, %v4344
      %4346 = vmatprep.mubr.bf16.mxu0 0
      %4347 = vmatmul.mubr.bf16.gmra.mxu0 %v3561
      %v4348 = vpop.f32.mrf.mxu0
      %v4349 = vadd.f32 %v3594, %v4348
      %v4350 = vpop.f32.mrf.mxu0
      %v4351 = vadd.f32 %v3598, %v4350
      %v4352 = vpop.f32.mrf.mxu0
      %v4353 = vadd.f32 %v3594, %v4352
      %v4354 = vpop.f32.mrf.mxu0
      %v4355 = vadd.f32 %v3598, %v4354
      %4356 = vmatprep.mubr.bf16.mxu0 0
      %4357 = vmatmul.mubr.bf16.gmra.mxu0 %v3562
      %v4358 = vpop.f32.mrf.mxu0
      %v4359 = vadd.f32 %v3594, %v4358
      %v4360 = vpop.f32.mrf.mxu0
      %v4361 = vadd.f32 %v3598, %v4360
      %v4362 = vpop.f32.mrf.mxu0
      %v4363 = vadd.f32 %v3594, %v4362
      %v4364 = vpop.f32.mrf.mxu0
      %v4365 = vadd.f32 %v3598, %v4364
      %4366 = vmatprep.mubr.bf16.mxu0 0
      %4367 = vmatmul.mubr.bf16.gmra.mxu0 %v3563
      %v4368 = vpop.f32.mrf.mxu0
      %v4369 = vadd.f32 %v3594, %v4368
      %v4370 = vpop.f32.mrf.mxu0
      %v4371 = vadd.f32 %v3598, %v4370
      %v4372 = vpop.f32.mrf.mxu0
      %v4373 = vadd.f32 %v3594, %v4372
      %v4374 = vpop.f32.mrf.mxu0
      %v4375 = vadd.f32 %v3598, %v4374
      %4376 = vmatprep.mubr.bf16.mxu0 0
      %4377 = vmatmul.mubr.bf16.gmra.mxu0 %v3564
      %v4378 = vpop.f32.mrf.mxu0
      %v4379 = vadd.f32 %v3594, %v4378
      %v4380 = vpop.f32.mrf.mxu0
      %v4381 = vadd.f32 %v3598, %v4380
      %v4382 = vpop.f32.mrf.mxu0
      %v4383 = vadd.f32 %v3594, %v4382
      %v4384 = vpop.f32.mrf.mxu0
      %v4385 = vadd.f32 %v3598, %v4384
      %4386 = vmatprep.mubr.bf16.mxu0 0
      %4387 = vmatmul.mubr.bf16.gmra.mxu0 %v3565
      %v4388 = vpop.f32.mrf.mxu0
      %v4389 = vadd.f32 %v3594, %v4388
      %v4390 = vpop.f32.mrf.mxu0
      %v4391 = vadd.f32 %v3598, %v4390
      %v4392 = vpop.f32.mrf.mxu0
      %v4393 = vadd.f32 %v3594, %v4392
      %v4394 = vpop.f32.mrf.mxu0
      %v4395 = vadd.f32 %v3598, %v4394
      %4396 = vmatprep.mubr.bf16.mxu0 0
      %4397 = vmatmul.mubr.bf16.gmra.mxu0 %v3566
      %v4398 = vpop.f32.mrf.mxu0
      %v4399 = vadd.f32 %v3594, %v4398
      %v4400 = vpop.f32.mrf.mxu0
      %v4401 = vadd.f32 %v3598, %v4400
      %v4402 = vpop.f32.mrf.mxu0
      %v4403 = vadd.f32 %v3594, %v4402
      %v4404 = vpop.f32.mrf.mxu0
      %v4405 = vadd.f32 %v3598, %v4404
      %4406 = vmatprep.mubr.bf16.mxu0 0
      %4407 = vmatmul.mubr.bf16.gmra.mxu0 %v3567
      %v4408 = vpop.f32.mrf.mxu0
      %v4409 = vadd.f32 %v3594, %v4408
      %v4410 = vpop.f32.mrf.mxu0
      %v4411 = vadd.f32 %v3598, %v4410
      %v4412 = vpop.f32.mrf.mxu0
      %v4413 = vadd.f32 %v3594, %v4412
      %v4414 = vpop.f32.mrf.mxu0
      %v4415 = vadd.f32 %v3598, %v4414
      %4416 = vmatprep.mubr.bf16.mxu0 0
      %4417 = vmatmul.mubr.bf16.gmra.mxu0 %v3568
      %v4418 = vpop.f32.mrf.mxu0
      %v4419 = vadd.f32 %v3594, %v4418
      %v4420 = vpop.f32.mrf.mxu0
      %v4421 = vadd.f32 %v3598, %v4420
      %v4422 = vpop.f32.mrf.mxu0
      %v4423 = vadd.f32 %v3594, %v4422
      %v4424 = vpop.f32.mrf.mxu0
      %v4425 = vadd.f32 %v3598, %v4424
      %4426 = vmatprep.mubr.bf16.mxu0 0
      %4427 = vmatmul.mubr.bf16.gmra.mxu0 %v3569
      %v4428 = vpop.f32.mrf.mxu0
      %v4429 = vadd.f32 %v3594, %v4428
      %v4430 = vpop.f32.mrf.mxu0
      %v4431 = vadd.f32 %v3598, %v4430
      %v4432 = vpop.f32.mrf.mxu0
      %v4433 = vadd.f32 %v3594, %v4432
      %v4434 = vpop.f32.mrf.mxu0
      %v4435 = vadd.f32 %v3598, %v4434
      %4436 = vmatprep.mubr.bf16.mxu0 0
      %4437 = vmatmul.mubr.bf16.gmra.mxu0 %v3570
      %v4438 = vpop.f32.mrf.mxu0
      %v4439 = vadd.f32 %v3594, %v4438
      %v4440 = vpop.f32.mrf.mxu0
      %v4441 = vadd.f32 %v3598, %v4440
      %v4442 = vpop.f32.mrf.mxu0
      %v4443 = vadd.f32 %v3594, %v4442
      %v4444 = vpop.f32.mrf.mxu0
      %v4445 = vadd.f32 %v3598, %v4444
      %4446 = vmatprep.mubr.bf16.mxu0 0
      %4447 = vmatmul.mubr.bf16.gmra.mxu0 %v3571
      %v4448 = vpop.f32.mrf.mxu0
      %v4449 = vadd.f32 %v3594, %v4448
      %v4450 = vpop.f32.mrf.mxu0
      %v4451 = vadd.f32 %v3598, %v4450
      %v4452 = vpop.f32.mrf.mxu0
      %v4453 = vadd.f32 %v3594, %v4452
      %v4454 = vpop.f32.mrf.mxu0
      %v4455 = vadd.f32 %v3598, %v4454
      %4456 = vmatprep.mubr.bf16.mxu0 0
      %4457 = vmatmul.mubr.bf16.gmra.mxu0 %v3572
      %v4458 = vpop.f32.mrf.mxu0
      %v4459 = vadd.f32 %v3594, %v4458
      %v4460 = vpop.f32.mrf.mxu0
      %v4461 = vadd.f32 %v3598, %v4460
      %v4462 = vpop.f32.mrf.mxu0
      %v4463 = vadd.f32 %v3594, %v4462
      %v4464 = vpop.f32.mrf.mxu0
      %v4465 = vadd.f32 %v3598, %v4464
      %4466 = vmatprep.mubr.bf16.mxu0 0
      %4467 = vmatmul.mubr.bf16.gmra.mxu0 %v3573
      %v4468 = vpop.f32.mrf.mxu0
      %v4469 = vadd.f32 %v3594, %v4468
      %v4470 = vpop.f32.mrf.mxu0
      %v4471 = vadd.f32 %v3598, %v4470
      %v4472 = vpop.f32.mrf.mxu0
      %v4473 = vadd.f32 %v3594, %v4472
      %v4474 = vpop.f32.mrf.mxu0
      %v4475 = vadd.f32 %v3598, %v4474
      %4476 = vdwg.mxu0
      %4477 = vmatprep.subr.bf16.mxu0 0
      %4478 = vmatpush1.bf16.msra.mxu0 %v3841
      %4479 = vmatprep.subr.bf16.mxu0 0
      %4480 = vmatpush1.bf16.msra.mxu0 %v3834
      %4481 = vmatprep.subr.bf16.mxu0 0
      %4482 = vmatpush1.bf16.msra.mxu0 %v3827
      %4483 = vmatprep.subr.bf16.mxu0 0
      %4484 = vmatpush1.bf16.msra.mxu0 %v3820
      %4485 = vmatprep.subr.bf16.mxu0 0
      %4486 = vmatpush1.bf16.msra.mxu0 %v3813
      %4487 = vmatprep.subr.bf16.mxu0 0
      %4488 = vmatpush1.bf16.msra.mxu0 %v3806
      %4489 = vmatprep.subr.bf16.mxu0 0
      %4490 = vmatpush1.bf16.msra.mxu0 %v3799
      %4491 = vmatprep.subr.bf16.mxu0 0
      %4492 = vmatpush1.bf16.msra.mxu0 %v3792
      %4493 = vmatprep.subr.bf16.mxu0 0
      %4494 = vmatpush2.bf16.msra.mxu0 0
      %4495 = vmatprep.subr.bf16.mxu0 0
      %4496 = vmatpush2.bf16.msra.mxu0 0
      %4497 = vmatprep.subr.bf16.mxu0 0
      %4498 = vmatpush2.bf16.msra.mxu0 0
      %4499 = vmatprep.subr.bf16.mxu0 0
      %4500 = vmatpush2.bf16.msra.mxu0 0
      %4501 = vmatprep.subr.bf16.mxu0 0
      %4502 = vmatpush2.bf16.msra.mxu0 0
      %4503 = vmatprep.subr.bf16.mxu0 0
      %4504 = vmatpush2.bf16.msra.mxu0 0
      %4505 = vmatprep.subr.bf16.mxu0 0
      %4506 = vmatpush2.bf16.msra.mxu0 0
      %4507 = vmatprep.subr.bf16.mxu0 0
      %4508 = vmatpush2.bf16.msra.mxu0 0
      %4509 = vmatprep.mubr.bf16.mxu0 0
      %4510 = vmatmul.mubr.bf16.gmra.mxu0 %v3558
      %v4511 = vpop.f32.mrf.mxu0
      %v4512 = vadd.f32 %v3602, %v4511
      %v4513 = vpop.f32.mrf.mxu0
      %v4514 = vpop.f32.mrf.mxu0
      %v4515 = vadd.f32 %v3602, %v4514
      %v4516 = vpop.f32.mrf.mxu0
      %4517 = vmatprep.mubr.bf16.mxu0 0
      %4518 = vmatmul.mubr.bf16.gmra.mxu0 %v3559
      %v4519 = vpop.f32.mrf.mxu0
      %v4520 = vadd.f32 %v3602, %v4519
      %v4521 = vpop.f32.mrf.mxu0
      %v4522 = vpop.f32.mrf.mxu0
      %v4523 = vadd.f32 %v3602, %v4522
      %v4524 = vpop.f32.mrf.mxu0
      %4525 = vmatprep.mubr.bf16.mxu0 0
      %4526 = vmatmul.mubr.bf16.gmra.mxu0 %v3560
      %v4527 = vpop.f32.mrf.mxu0
      %v4528 = vadd.f32 %v3602, %v4527
      %v4529 = vpop.f32.mrf.mxu0
      %v4530 = vpop.f32.mrf.mxu0
      %v4531 = vadd.f32 %v3602, %v4530
      %v4532 = vpop.f32.mrf.mxu0
      %4533 = vmatprep.mubr.bf16.mxu0 0
      %4534 = vmatmul.mubr.bf16.gmra.mxu0 %v3561
      %v4535 = vpop.f32.mrf.mxu0
      %v4536 = vadd.f32 %v3602, %v4535
      %v4537 = vpop.f32.mrf.mxu0
      %v4538 = vpop.f32.mrf.mxu0
      %v4539 = vadd.f32 %v3602, %v4538
      %v4540 = vpop.f32.mrf.mxu0
      %4541 = vmatprep.mubr.bf16.mxu0 0
      %4542 = vmatmul.mubr.bf16.gmra.mxu0 %v3562
      %v4543 = vpop.f32.mrf.mxu0
      %v4544 = vadd.f32 %v3602, %v4543
      %v4545 = vpop.f32.mrf.mxu0
      %v4546 = vpop.f32.mrf.mxu0
      %v4547 = vadd.f32 %v3602, %v4546
      %v4548 = vpop.f32.mrf.mxu0
      %4549 = vmatprep.mubr.bf16.mxu0 0
      %4550 = vmatmul.mubr.bf16.gmra.mxu0 %v3563
      %v4551 = vpop.f32.mrf.mxu0
      %v4552 = vadd.f32 %v3602, %v4551
      %v4553 = vpop.f32.mrf.mxu0
      %v4554 = vpop.f32.mrf.mxu0
      %v4555 = vadd.f32 %v3602, %v4554
      %v4556 = vpop.f32.mrf.mxu0
      %4557 = vmatprep.mubr.bf16.mxu0 0
      %4558 = vmatmul.mubr.bf16.gmra.mxu0 %v3564
      %v4559 = vpop.f32.mrf.mxu0
      %v4560 = vadd.f32 %v3602, %v4559
      %v4561 = vpop.f32.mrf.mxu0
      %v4562 = vpop.f32.mrf.mxu0
      %v4563 = vadd.f32 %v3602, %v4562
      %v4564 = vpop.f32.mrf.mxu0
      %4565 = vmatprep.mubr.bf16.mxu0 0
      %4566 = vmatmul.mubr.bf16.gmra.mxu0 %v3565
      %v4567 = vpop.f32.mrf.mxu0
      %v4568 = vadd.f32 %v3602, %v4567
      %v4569 = vpop.f32.mrf.mxu0
      %v4570 = vpop.f32.mrf.mxu0
      %v4571 = vadd.f32 %v3602, %v4570
      %v4572 = vpop.f32.mrf.mxu0
      %4573 = vmatprep.mubr.bf16.mxu0 0
      %4574 = vmatmul.mubr.bf16.gmra.mxu0 %v3566
      %v4575 = vpop.f32.mrf.mxu0
      %v4576 = vadd.f32 %v3602, %v4575
      %v4577 = vpop.f32.mrf.mxu0
      %v4578 = vpop.f32.mrf.mxu0
      %v4579 = vadd.f32 %v3602, %v4578
      %v4580 = vpop.f32.mrf.mxu0
      %4581 = vmatprep.mubr.bf16.mxu0 0
      %4582 = vmatmul.mubr.bf16.gmra.mxu0 %v3567
      %v4583 = vpop.f32.mrf.mxu0
      %v4584 = vadd.f32 %v3602, %v4583
      %v4585 = vpop.f32.mrf.mxu0
      %v4586 = vpop.f32.mrf.mxu0
      %v4587 = vadd.f32 %v3602, %v4586
      %v4588 = vpop.f32.mrf.mxu0
      %4589 = vmatprep.mubr.bf16.mxu0 0
      %4590 = vmatmul.mubr.bf16.gmra.mxu0 %v3568
      %v4591 = vpop.f32.mrf.mxu0
      %v4592 = vadd.f32 %v3602, %v4591
      %v4593 = vpop.f32.mrf.mxu0
      %v4594 = vpop.f32.mrf.mxu0
      %v4595 = vadd.f32 %v3602, %v4594
      %v4596 = vpop.f32.mrf.mxu0
      %4597 = vmatprep.mubr.bf16.mxu0 0
      %4598 = vmatmul.mubr.bf16.gmra.mxu0 %v3569
      %v4599 = vpop.f32.mrf.mxu0
      %v4600 = vadd.f32 %v3602, %v4599
      %v4601 = vpop.f32.mrf.mxu0
      %v4602 = vpop.f32.mrf.mxu0
      %v4603 = vadd.f32 %v3602, %v4602
      %v4604 = vpop.f32.mrf.mxu0
      %4605 = vmatprep.mubr.bf16.mxu0 0
      %4606 = vmatmul.mubr.bf16.gmra.mxu0 %v3570
      %v4607 = vpop.f32.mrf.mxu0
      %v4608 = vadd.f32 %v3602, %v4607
      %v4609 = vpop.f32.mrf.mxu0
      %v4610 = vpop.f32.mrf.mxu0
      %v4611 = vadd.f32 %v3602, %v4610
      %v4612 = vpop.f32.mrf.mxu0
      %4613 = vmatprep.mubr.bf16.mxu0 0
      %4614 = vmatmul.mubr.bf16.gmra.mxu0 %v3571
      %v4615 = vpop.f32.mrf.mxu0
      %v4616 = vadd.f32 %v3602, %v4615
      %v4617 = vpop.f32.mrf.mxu0
      %v4618 = vpop.f32.mrf.mxu0
      %v4619 = vadd.f32 %v3602, %v4618
      %v4620 = vpop.f32.mrf.mxu0
      %4621 = vmatprep.mubr.bf16.mxu0 0
      %4622 = vmatmul.mubr.bf16.gmra.mxu0 %v3572
      %v4623 = vpop.f32.mrf.mxu0
      %v4624 = vadd.f32 %v3602, %v4623
      %v4625 = vpop.f32.mrf.mxu0
      %v4626 = vpop.f32.mrf.mxu0
      %v4627 = vadd.f32 %v3602, %v4626
      %v4628 = vpop.f32.mrf.mxu0
      %4629 = vmatprep.mubr.bf16.mxu0 0
      %4630 = vmatmul.mubr.bf16.gmra.mxu0 %v3573
      %v4631 = vpop.f32.mrf.mxu0
      %v4632 = vadd.f32 %v3602, %v4631
      %v4633 = vpop.f32.mrf.mxu0
      %v4634 = vpop.f32.mrf.mxu0
      %v4635 = vadd.f32 %v3602, %v4634
      %v4636 = vpop.f32.mrf.mxu0
      %4637 = vdwg.mxu0
      %v4638 = vxor.u32 %v3933, 2147483648
      %v4639 = vxor.u32 %v3935, 2147483648
      %v4640 = vxor.u32 %v4126, 2147483648
      %v4641 = vxor.u32 %v4128, 2147483648
      %v4642 = vxor.u32 %v4319, 2147483648
      %v4643 = vxor.u32 %v4321, 2147483648
      %v4644 = vxor.u32 %v4512, 2147483648
      %v4645 = vxor.u32 %v3937, 2147483648
      %v4646 = vxor.u32 %v3939, 2147483648
      %v4647 = vxor.u32 %v4130, 2147483648
      %v4648 = vxor.u32 %v4132, 2147483648
      %v4649 = vxor.u32 %v4323, 2147483648
      %v4650 = vxor.u32 %v4325, 2147483648
      %v4651 = vxor.u32 %v4515, 2147483648
      %v4652 = vxor.u32 %v3943, 2147483648
      %v4653 = vxor.u32 %v3945, 2147483648
      %v4654 = vxor.u32 %v4136, 2147483648
      %v4655 = vxor.u32 %v4138, 2147483648
      %v4656 = vxor.u32 %v4329, 2147483648
      %v4657 = vxor.u32 %v4331, 2147483648
      %v4658 = vxor.u32 %v4520, 2147483648
      %v4659 = vxor.u32 %v3947, 2147483648
      %v4660 = vxor.u32 %v3949, 2147483648
      %v4661 = vxor.u32 %v4140, 2147483648
      %v4662 = vxor.u32 %v4142, 2147483648
      %v4663 = vxor.u32 %v4333, 2147483648
      %v4664 = vxor.u32 %v4335, 2147483648
      %v4665 = vxor.u32 %v4523, 2147483648
      %v4666 = vxor.u32 %v3953, 2147483648
      %v4667 = vxor.u32 %v3955, 2147483648
      %v4668 = vxor.u32 %v4146, 2147483648
      %v4669 = vxor.u32 %v4148, 2147483648
      %v4670 = vxor.u32 %v4339, 2147483648
      %v4671 = vxor.u32 %v4341, 2147483648
      %v4672 = vxor.u32 %v4528, 2147483648
      %v4673 = vxor.u32 %v3957, 2147483648
      %v4674 = vxor.u32 %v3959, 2147483648
      %v4675 = vxor.u32 %v4150, 2147483648
      %v4676 = vxor.u32 %v4152, 2147483648
      %v4677 = vxor.u32 %v4343, 2147483648
      %v4678 = vxor.u32 %v4345, 2147483648
      %v4679 = vxor.u32 %v4531, 2147483648
      %v4680 = vxor.u32 %v3963, 2147483648
      %v4681 = vxor.u32 %v3965, 2147483648
      %v4682 = vxor.u32 %v4156, 2147483648
      %v4683 = vxor.u32 %v4158, 2147483648
      %v4684 = vxor.u32 %v4349, 2147483648
      %v4685 = vxor.u32 %v4351, 2147483648
      %v4686 = vxor.u32 %v4536, 2147483648
      %v4687 = vxor.u32 %v3967, 2147483648
      %v4688 = vxor.u32 %v3969, 2147483648
      %v4689 = vxor.u32 %v4160, 2147483648
      %v4690 = vxor.u32 %v4162, 2147483648
      %v4691 = vxor.u32 %v4353, 2147483648
      %v4692 = vxor.u32 %v4355, 2147483648
      %v4693 = vxor.u32 %v4539, 2147483648
      %v4694 = vxor.u32 %v3973, 2147483648
      %v4695 = vxor.u32 %v3975, 2147483648
      %v4696 = vxor.u32 %v4166, 2147483648
      %v4697 = vxor.u32 %v4168, 2147483648
      %v4698 = vxor.u32 %v4359, 2147483648
      %v4699 = vxor.u32 %v4361, 2147483648
      %v4700 = vxor.u32 %v4544, 2147483648
      %v4701 = vxor.u32 %v3977, 2147483648
      %v4702 = vxor.u32 %v3979, 2147483648
      %v4703 = vxor.u32 %v4170, 2147483648
      %v4704 = vxor.u32 %v4172, 2147483648
      %v4705 = vxor.u32 %v4363, 2147483648
      %v4706 = vxor.u32 %v4365, 2147483648
      %v4707 = vxor.u32 %v4547, 2147483648
      %v4708 = vxor.u32 %v3983, 2147483648
      %v4709 = vxor.u32 %v3985, 2147483648
      %v4710 = vxor.u32 %v4176, 2147483648
      %v4711 = vxor.u32 %v4178, 2147483648
      %v4712 = vxor.u32 %v4369, 2147483648
      %v4713 = vxor.u32 %v4371, 2147483648
      %v4714 = vxor.u32 %v4552, 2147483648
      %v4715 = vxor.u32 %v3987, 2147483648
      %v4716 = vxor.u32 %v3989, 2147483648
      %v4717 = vxor.u32 %v4180, 2147483648
      %v4718 = vxor.u32 %v4182, 2147483648
      %v4719 = vxor.u32 %v4373, 2147483648
      %v4720 = vxor.u32 %v4375, 2147483648
      %v4721 = vxor.u32 %v4555, 2147483648
      %v4722 = vxor.u32 %v3993, 2147483648
      %v4723 = vxor.u32 %v3995, 2147483648
      %v4724 = vxor.u32 %v4186, 2147483648
      %v4725 = vxor.u32 %v4188, 2147483648
      %v4726 = vxor.u32 %v4379, 2147483648
      %v4727 = vxor.u32 %v4381, 2147483648
      %v4728 = vxor.u32 %v4560, 2147483648
      %v4729 = vxor.u32 %v3997, 2147483648
      %v4730 = vxor.u32 %v3999, 2147483648
      %v4731 = vxor.u32 %v4190, 2147483648
      %v4732 = vxor.u32 %v4192, 2147483648
      %v4733 = vxor.u32 %v4383, 2147483648
      %v4734 = vxor.u32 %v4385, 2147483648
      %v4735 = vxor.u32 %v4563, 2147483648
      %v4736 = vxor.u32 %v4003, 2147483648
      %v4737 = vxor.u32 %v4005, 2147483648
      %v4738 = vxor.u32 %v4196, 2147483648
      %v4739 = vxor.u32 %v4198, 2147483648
      %v4740 = vxor.u32 %v4389, 2147483648
      %v4741 = vxor.u32 %v4391, 2147483648
      %v4742 = vxor.u32 %v4568, 2147483648
      %v4743 = vxor.u32 %v4007, 2147483648
      %v4744 = vxor.u32 %v4009, 2147483648
      %v4745 = vxor.u32 %v4200, 2147483648
      %v4746 = vxor.u32 %v4202, 2147483648
      %v4747 = vxor.u32 %v4393, 2147483648
      %v4748 = vxor.u32 %v4395, 2147483648
      %v4749 = vxor.u32 %v4571, 2147483648
      %v4750 = vxor.u32 %v4013, 2147483648
      %v4751 = vxor.u32 %v4015, 2147483648
      %v4752 = vxor.u32 %v4206, 2147483648
      %v4753 = vxor.u32 %v4208, 2147483648
      %v4754 = vxor.u32 %v4399, 2147483648
      %v4755 = vxor.u32 %v4401, 2147483648
      %v4756 = vxor.u32 %v4576, 2147483648
      %v4757 = vxor.u32 %v4017, 2147483648
      %v4758 = vxor.u32 %v4019, 2147483648
      %v4759 = vxor.u32 %v4210, 2147483648
      %v4760 = vxor.u32 %v4212, 2147483648
      %v4761 = vxor.u32 %v4403, 2147483648
      %v4762 = vxor.u32 %v4405, 2147483648
      %v4763 = vxor.u32 %v4579, 2147483648
      %v4764 = vxor.u32 %v4023, 2147483648
      %v4765 = vxor.u32 %v4025, 2147483648
      %v4766 = vxor.u32 %v4216, 2147483648
      %v4767 = vxor.u32 %v4218, 2147483648
      %v4768 = vxor.u32 %v4409, 2147483648
      %v4769 = vxor.u32 %v4411, 2147483648
      %v4770 = vxor.u32 %v4584, 2147483648
      %v4771 = vxor.u32 %v4027, 2147483648
      %v4772 = vxor.u32 %v4029, 2147483648
      %v4773 = vxor.u32 %v4220, 2147483648
      %v4774 = vxor.u32 %v4222, 2147483648
      %v4775 = vxor.u32 %v4413, 2147483648
      %v4776 = vxor.u32 %v4415, 2147483648
      %v4777 = vxor.u32 %v4587, 2147483648
      %v4778 = vxor.u32 %v4033, 2147483648
      %v4779 = vxor.u32 %v4035, 2147483648
      %v4780 = vxor.u32 %v4226, 2147483648
      %v4781 = vxor.u32 %v4228, 2147483648
      %v4782 = vxor.u32 %v4419, 2147483648
      %v4783 = vxor.u32 %v4421, 2147483648
      %v4784 = vxor.u32 %v4592, 2147483648
      %v4785 = vxor.u32 %v4037, 2147483648
      %v4786 = vxor.u32 %v4039, 2147483648
      %v4787 = vxor.u32 %v4230, 2147483648
      %v4788 = vxor.u32 %v4232, 2147483648
      %v4789 = vxor.u32 %v4423, 2147483648
      %v4790 = vxor.u32 %v4425, 2147483648
      %v4791 = vxor.u32 %v4595, 2147483648
      %v4792 = vxor.u32 %v4043, 2147483648
      %v4793 = vxor.u32 %v4045, 2147483648
      %v4794 = vxor.u32 %v4236, 2147483648
      %v4795 = vxor.u32 %v4238, 2147483648
      %v4796 = vxor.u32 %v4429, 2147483648
      %v4797 = vxor.u32 %v4431, 2147483648
      %v4798 = vxor.u32 %v4600, 2147483648
      %v4799 = vxor.u32 %v4047, 2147483648
      %v4800 = vxor.u32 %v4049, 2147483648
      %v4801 = vxor.u32 %v4240, 2147483648
      %v4802 = vxor.u32 %v4242, 2147483648
      %v4803 = vxor.u32 %v4433, 2147483648
      %v4804 = vxor.u32 %v4435, 2147483648
      %v4805 = vxor.u32 %v4603, 2147483648
      %v4806 = vxor.u32 %v4053, 2147483648
      %v4807 = vxor.u32 %v4055, 2147483648
      %v4808 = vxor.u32 %v4246, 2147483648
      %v4809 = vxor.u32 %v4248, 2147483648
      %v4810 = vxor.u32 %v4439, 2147483648
      %v4811 = vxor.u32 %v4441, 2147483648
      %v4812 = vxor.u32 %v4608, 2147483648
      %v4813 = vxor.u32 %v4057, 2147483648
      %v4814 = vxor.u32 %v4059, 2147483648
      %v4815 = vxor.u32 %v4250, 2147483648
      %v4816 = vxor.u32 %v4252, 2147483648
      %v4817 = vxor.u32 %v4443, 2147483648
      %v4818 = vxor.u32 %v4445, 2147483648
      %v4819 = vxor.u32 %v4611, 2147483648
      %v4820 = vxor.u32 %v4063, 2147483648
      %v4821 = vxor.u32 %v4065, 2147483648
      %v4822 = vxor.u32 %v4256, 2147483648
      %v4823 = vxor.u32 %v4258, 2147483648
      %v4824 = vxor.u32 %v4449, 2147483648
      %v4825 = vxor.u32 %v4451, 2147483648
      %v4826 = vxor.u32 %v4616, 2147483648
      %v4827 = vxor.u32 %v4067, 2147483648
      %v4828 = vxor.u32 %v4069, 2147483648
      %v4829 = vxor.u32 %v4260, 2147483648
      %v4830 = vxor.u32 %v4262, 2147483648
      %v4831 = vxor.u32 %v4453, 2147483648
      %v4832 = vxor.u32 %v4455, 2147483648
      %v4833 = vxor.u32 %v4619, 2147483648
      %v4834 = vxor.u32 %v4073, 2147483648
      %v4835 = vxor.u32 %v4075, 2147483648
      %v4836 = vxor.u32 %v4266, 2147483648
      %v4837 = vxor.u32 %v4268, 2147483648
      %v4838 = vxor.u32 %v4459, 2147483648
      %v4839 = vxor.u32 %v4461, 2147483648
      %v4840 = vxor.u32 %v4624, 2147483648
      %v4841 = vxor.u32 %v4077, 2147483648
      %v4842 = vxor.u32 %v4079, 2147483648
      %v4843 = vxor.u32 %v4270, 2147483648
      %v4844 = vxor.u32 %v4272, 2147483648
      %v4845 = vxor.u32 %v4463, 2147483648
      %v4846 = vxor.u32 %v4465, 2147483648
      %v4847 = vxor.u32 %v4627, 2147483648
      %v4848 = vxor.u32 %v4083, 2147483648
      %v4849 = vxor.u32 %v4085, 2147483648
      %v4850 = vxor.u32 %v4276, 2147483648
      %v4851 = vxor.u32 %v4278, 2147483648
      %v4852 = vxor.u32 %v4469, 2147483648
      %v4853 = vxor.u32 %v4471, 2147483648
      %v4854 = vxor.u32 %v4632, 2147483648
      %v4855 = vxor.u32 %v4087, 2147483648
      %v4856 = vxor.u32 %v4089, 2147483648
      %v4857 = vxor.u32 %v4280, 2147483648
      %v4858 = vxor.u32 %v4282, 2147483648
      %v4859 = vxor.u32 %v4473, 2147483648
      %v4860 = vxor.u32 %v4475, 2147483648
      %v4861 = vxor.u32 %v4635, 2147483648
      %v4862 = vmul.f32 %v4638, 1.442695
      %v4863 = vpow.pop %v4862
      %v4864 = vmul.f32 %v4639, 1.442695
      %v4865 = vpow.pop %v4864
      %v4866 = vmul.f32 %v4640, 1.442695
      %v4867 = vpow.pop %v4866
      %v4868 = vmul.f32 %v4641, 1.442695
      %v4869 = vpow.pop %v4868
      %v4870 = vmul.f32 %v4642, 1.442695
      %v4871 = vpow.pop %v4870
      %v4872 = vmul.f32 %v4643, 1.442695
      %v4873 = vpow.pop %v4872
      %v4874 = vmul.f32 %v4644, 1.442695
      %v4875 = vpow.pop %v4874
      %v4876 = vmul.f32 %v4645, 1.442695
      %v4877 = vpow.pop %v4876
      %v4878 = vmul.f32 %v4646, 1.442695
      %v4879 = vpow.pop %v4878
      %v4880 = vmul.f32 %v4647, 1.442695
      %v4881 = vpow.pop %v4880
      %v4882 = vmul.f32 %v4648, 1.442695
      %v4883 = vpow.pop %v4882
      %v4884 = vmul.f32 %v4649, 1.442695
      %v4885 = vpow.pop %v4884
      %v4886 = vmul.f32 %v4650, 1.442695
      %v4887 = vpow.pop %v4886
      %v4888 = vmul.f32 %v4651, 1.442695
      %v4889 = vpow.pop %v4888
      %v4890 = vmul.f32 %v4652, 1.442695
      %v4891 = vpow.pop %v4890
      %v4892 = vmul.f32 %v4653, 1.442695
      %v4893 = vpow.pop %v4892
      %v4894 = vmul.f32 %v4654, 1.442695
      %v4895 = vpow.pop %v4894
      %v4896 = vmul.f32 %v4655, 1.442695
      %v4897 = vpow.pop %v4896
      %v4898 = vmul.f32 %v4656, 1.442695
      %v4899 = vpow.pop %v4898
      %v4900 = vmul.f32 %v4657, 1.442695
      %v4901 = vpow.pop %v4900
      %v4902 = vmul.f32 %v4658, 1.442695
      %v4903 = vpow.pop %v4902
      %v4904 = vmul.f32 %v4659, 1.442695
      %v4905 = vpow.pop %v4904
      %v4906 = vmul.f32 %v4660, 1.442695
      %v4907 = vpow.pop %v4906
      %v4908 = vmul.f32 %v4661, 1.442695
      %v4909 = vpow.pop %v4908
      %v4910 = vmul.f32 %v4662, 1.442695
      %v4911 = vpow.pop %v4910
      %v4912 = vmul.f32 %v4663, 1.442695
      %v4913 = vpow.pop %v4912
      %v4914 = vmul.f32 %v4664, 1.442695
      %v4915 = vpow.pop %v4914
      %v4916 = vmul.f32 %v4665, 1.442695
      %v4917 = vpow.pop %v4916
      %v4918 = vmul.f32 %v4666, 1.442695
      %v4919 = vpow.pop %v4918
      %v4920 = vmul.f32 %v4667, 1.442695
      %v4921 = vpow.pop %v4920
      %v4922 = vmul.f32 %v4668, 1.442695
      %v4923 = vpow.pop %v4922
      %v4924 = vmul.f32 %v4669, 1.442695
      %v4925 = vpow.pop %v4924
      %v4926 = vmul.f32 %v4670, 1.442695
      %v4927 = vpow.pop %v4926
      %v4928 = vmul.f32 %v4671, 1.442695
      %v4929 = vpow.pop %v4928
      %v4930 = vmul.f32 %v4672, 1.442695
      %v4931 = vpow.pop %v4930
      %v4932 = vmul.f32 %v4673, 1.442695
      %v4933 = vpow.pop %v4932
      %v4934 = vmul.f32 %v4674, 1.442695
      %v4935 = vpow.pop %v4934
      %v4936 = vmul.f32 %v4675, 1.442695
      %v4937 = vpow.pop %v4936
      %v4938 = vmul.f32 %v4676, 1.442695
      %v4939 = vpow.pop %v4938
      %v4940 = vmul.f32 %v4677, 1.442695
      %v4941 = vpow.pop %v4940
      %v4942 = vmul.f32 %v4678, 1.442695
      %v4943 = vpow.pop %v4942
      %v4944 = vmul.f32 %v4679, 1.442695
      %v4945 = vpow.pop %v4944
      %v4946 = vmul.f32 %v4680, 1.442695
      %v4947 = vpow.pop %v4946
      %v4948 = vmul.f32 %v4681, 1.442695
      %v4949 = vpow.pop %v4948
      %v4950 = vmul.f32 %v4682, 1.442695
      %v4951 = vpow.pop %v4950
      %v4952 = vmul.f32 %v4683, 1.442695
      %v4953 = vpow.pop %v4952
      %v4954 = vmul.f32 %v4684, 1.442695
      %v4955 = vpow.pop %v4954
      %v4956 = vmul.f32 %v4685, 1.442695
      %v4957 = vpow.pop %v4956
      %v4958 = vmul.f32 %v4686, 1.442695
      %v4959 = vpow.pop %v4958
      %v4960 = vmul.f32 %v4687, 1.442695
      %v4961 = vpow.pop %v4960
      %v4962 = vmul.f32 %v4688, 1.442695
      %v4963 = vpow.pop %v4962
      %v4964 = vmul.f32 %v4689, 1.442695
      %v4965 = vpow.pop %v4964
      %v4966 = vmul.f32 %v4690, 1.442695
      %v4967 = vpow.pop %v4966
      %v4968 = vmul.f32 %v4691, 1.442695
      %v4969 = vpow.pop %v4968
      %v4970 = vmul.f32 %v4692, 1.442695
      %v4971 = vpow.pop %v4970
      %v4972 = vmul.f32 %v4693, 1.442695
      %v4973 = vpow.pop %v4972
      %v4974 = vmul.f32 %v4694, 1.442695
      %v4975 = vpow.pop %v4974
      %v4976 = vmul.f32 %v4695, 1.442695
      %v4977 = vpow.pop %v4976
      %v4978 = vmul.f32 %v4696, 1.442695
      %v4979 = vpow.pop %v4978
      %v4980 = vmul.f32 %v4697, 1.442695
      %v4981 = vpow.pop %v4980
      %v4982 = vmul.f32 %v4698, 1.442695
      %v4983 = vpow.pop %v4982
      %v4984 = vmul.f32 %v4699, 1.442695
      %v4985 = vpow.pop %v4984
      %v4986 = vmul.f32 %v4700, 1.442695
      %v4987 = vpow.pop %v4986
      %v4988 = vmul.f32 %v4701, 1.442695
      %v4989 = vpow.pop %v4988
      %v4990 = vmul.f32 %v4702, 1.442695
      %v4991 = vpow.pop %v4990
      %v4992 = vmul.f32 %v4703, 1.442695
      %v4993 = vpow.pop %v4992
      %v4994 = vmul.f32 %v4704, 1.442695
      %v4995 = vpow.pop %v4994
      %v4996 = vmul.f32 %v4705, 1.442695
      %v4997 = vpow.pop %v4996
      %v4998 = vmul.f32 %v4706, 1.442695
      %v4999 = vpow.pop %v4998
      %v5000 = vmul.f32 %v4707, 1.442695
      %v5001 = vpow.pop %v5000
      %v5002 = vmul.f32 %v4708, 1.442695
      %v5003 = vpow.pop %v5002
      %v5004 = vmul.f32 %v4709, 1.442695
      %v5005 = vpow.pop %v5004
      %v5006 = vmul.f32 %v4710, 1.442695
      %v5007 = vpow.pop %v5006
      %v5008 = vmul.f32 %v4711, 1.442695
      %v5009 = vpow.pop %v5008
      %v5010 = vmul.f32 %v4712, 1.442695
      %v5011 = vpow.pop %v5010
      %v5012 = vmul.f32 %v4713, 1.442695
      %v5013 = vpow.pop %v5012
      %v5014 = vmul.f32 %v4714, 1.442695
      %v5015 = vpow.pop %v5014
      %v5016 = vmul.f32 %v4715, 1.442695
      %v5017 = vpow.pop %v5016
      %v5018 = vmul.f32 %v4716, 1.442695
      %v5019 = vpow.pop %v5018
      %v5020 = vmul.f32 %v4717, 1.442695
      %v5021 = vpow.pop %v5020
      %v5022 = vmul.f32 %v4718, 1.442695
      %v5023 = vpow.pop %v5022
      %v5024 = vmul.f32 %v4719, 1.442695
      %v5025 = vpow.pop %v5024
      %v5026 = vmul.f32 %v4720, 1.442695
      %v5027 = vpow.pop %v5026
      %v5028 = vmul.f32 %v4721, 1.442695
      %v5029 = vpow.pop %v5028
      %v5030 = vmul.f32 %v4722, 1.442695
      %v5031 = vpow.pop %v5030
      %v5032 = vmul.f32 %v4723, 1.442695
      %v5033 = vpow.pop %v5032
      %v5034 = vmul.f32 %v4724, 1.442695
      %v5035 = vpow.pop %v5034
      %v5036 = vmul.f32 %v4725, 1.442695
      %v5037 = vpow.pop %v5036
      %v5038 = vmul.f32 %v4726, 1.442695
      %v5039 = vpow.pop %v5038
      %v5040 = vmul.f32 %v4727, 1.442695
      %v5041 = vpow.pop %v5040
      %v5042 = vmul.f32 %v4728, 1.442695
      %v5043 = vpow.pop %v5042
      %v5044 = vmul.f32 %v4729, 1.442695
      %v5045 = vpow.pop %v5044
      %v5046 = vmul.f32 %v4730, 1.442695
      %v5047 = vpow.pop %v5046
      %v5048 = vmul.f32 %v4731, 1.442695
      %v5049 = vpow.pop %v5048
      %v5050 = vmul.f32 %v4732, 1.442695
      %v5051 = vpow.pop %v5050
      %v5052 = vmul.f32 %v4733, 1.442695
      %v5053 = vpow.pop %v5052
      %v5054 = vmul.f32 %v4734, 1.442695
      %v5055 = vpow.pop %v5054
      %v5056 = vmul.f32 %v4735, 1.442695
      %v5057 = vpow.pop %v5056
      %v5058 = vmul.f32 %v4736, 1.442695
      %v5059 = vpow.pop %v5058
      %v5060 = vmul.f32 %v4737, 1.442695
      %v5061 = vpow.pop %v5060
      %v5062 = vmul.f32 %v4738, 1.442695
      %v5063 = vpow.pop %v5062
      %v5064 = vmul.f32 %v4739, 1.442695
      %v5065 = vpow.pop %v5064
      %v5066 = vmul.f32 %v4740, 1.442695
      %v5067 = vpow.pop %v5066
      %v5068 = vmul.f32 %v4741, 1.442695
      %v5069 = vpow.pop %v5068
      %v5070 = vmul.f32 %v4742, 1.442695
      %v5071 = vpow.pop %v5070
      %v5072 = vmul.f32 %v4743, 1.442695
      %v5073 = vpow.pop %v5072
      %v5074 = vmul.f32 %v4744, 1.442695
      %v5075 = vpow.pop %v5074
      %v5076 = vmul.f32 %v4745, 1.442695
      %v5077 = vpow.pop %v5076
      %v5078 = vmul.f32 %v4746, 1.442695
      %v5079 = vpow.pop %v5078
      %v5080 = vmul.f32 %v4747, 1.442695
      %v5081 = vpow.pop %v5080
      %v5082 = vmul.f32 %v4748, 1.442695
      %v5083 = vpow.pop %v5082
      %v5084 = vmul.f32 %v4749, 1.442695
      %v5085 = vpow.pop %v5084
      %v5086 = vmul.f32 %v4750, 1.442695
      %v5087 = vpow.pop %v5086
      %v5088 = vmul.f32 %v4751, 1.442695
      %v5089 = vpow.pop %v5088
      %v5090 = vmul.f32 %v4752, 1.442695
      %v5091 = vpow.pop %v5090
      %v5092 = vmul.f32 %v4753, 1.442695
      %v5093 = vpow.pop %v5092
      %v5094 = vmul.f32 %v4754, 1.442695
      %v5095 = vpow.pop %v5094
      %v5096 = vmul.f32 %v4755, 1.442695
      %v5097 = vpow.pop %v5096
      %v5098 = vmul.f32 %v4756, 1.442695
      %v5099 = vpow.pop %v5098
      %v5100 = vmul.f32 %v4757, 1.442695
      %v5101 = vpow.pop %v5100
      %v5102 = vmul.f32 %v4758, 1.442695
      %v5103 = vpow.pop %v5102
      %v5104 = vmul.f32 %v4759, 1.442695
      %v5105 = vpow.pop %v5104
      %v5106 = vmul.f32 %v4760, 1.442695
      %v5107 = vpow.pop %v5106
      %v5108 = vmul.f32 %v4761, 1.442695
      %v5109 = vpow.pop %v5108
      %v5110 = vmul.f32 %v4762, 1.442695
      %v5111 = vpow.pop %v5110
      %v5112 = vmul.f32 %v4763, 1.442695
      %v5113 = vpow.pop %v5112
      %v5114 = vmul.f32 %v4764, 1.442695
      %v5115 = vpow.pop %v5114
      %v5116 = vmul.f32 %v4765, 1.442695
      %v5117 = vpow.pop %v5116
      %v5118 = vmul.f32 %v4766, 1.442695
      %v5119 = vpow.pop %v5118
      %v5120 = vmul.f32 %v4767, 1.442695
      %v5121 = vpow.pop %v5120
      %v5122 = vmul.f32 %v4768, 1.442695
      %v5123 = vpow.pop %v5122
      %v5124 = vmul.f32 %v4769, 1.442695
      %v5125 = vpow.pop %v5124
      %v5126 = vmul.f32 %v4770, 1.442695
      %v5127 = vpow.pop %v5126
      %v5128 = vmul.f32 %v4771, 1.442695
      %v5129 = vpow.pop %v5128
      %v5130 = vmul.f32 %v4772, 1.442695
      %v5131 = vpow.pop %v5130
      %v5132 = vmul.f32 %v4773, 1.442695
      %v5133 = vpow.pop %v5132
      %v5134 = vmul.f32 %v4774, 1.442695
      %v5135 = vpow.pop %v5134
      %v5136 = vmul.f32 %v4775, 1.442695
      %v5137 = vpow.pop %v5136
      %v5138 = vmul.f32 %v4776, 1.442695
      %v5139 = vpow.pop %v5138
      %v5140 = vmul.f32 %v4777, 1.442695
      %v5141 = vpow.pop %v5140
      %v5142 = vmul.f32 %v4778, 1.442695
      %v5143 = vpow.pop %v5142
      %v5144 = vmul.f32 %v4779, 1.442695
      %v5145 = vpow.pop %v5144
      %v5146 = vmul.f32 %v4780, 1.442695
      %v5147 = vpow.pop %v5146
      %v5148 = vmul.f32 %v4781, 1.442695
      %v5149 = vpow.pop %v5148
      %v5150 = vmul.f32 %v4782, 1.442695
      %v5151 = vpow.pop %v5150
      %v5152 = vmul.f32 %v4783, 1.442695
      %v5153 = vpow.pop %v5152
      %v5154 = vmul.f32 %v4784, 1.442695
      %v5155 = vpow.pop %v5154
      %v5156 = vmul.f32 %v4785, 1.442695
      %v5157 = vpow.pop %v5156
      %v5158 = vmul.f32 %v4786, 1.442695
      %v5159 = vpow.pop %v5158
      %v5160 = vmul.f32 %v4787, 1.442695
      %v5161 = vpow.pop %v5160
      %v5162 = vmul.f32 %v4788, 1.442695
      %v5163 = vpow.pop %v5162
      %v5164 = vmul.f32 %v4789, 1.442695
      %v5165 = vpow.pop %v5164
      %v5166 = vmul.f32 %v4790, 1.442695
      %v5167 = vpow.pop %v5166
      %v5168 = vmul.f32 %v4791, 1.442695
      %v5169 = vpow.pop %v5168
      %v5170 = vmul.f32 %v4792, 1.442695
      %v5171 = vpow.pop %v5170
      %v5172 = vmul.f32 %v4793, 1.442695
      %v5173 = vpow.pop %v5172
      %v5174 = vmul.f32 %v4794, 1.442695
      %v5175 = vpow.pop %v5174
      %v5176 = vmul.f32 %v4795, 1.442695
      %v5177 = vpow.pop %v5176
      %v5178 = vmul.f32 %v4796, 1.442695
      %v5179 = vpow.pop %v5178
      %v5180 = vmul.f32 %v4797, 1.442695
      %v5181 = vpow.pop %v5180
      %v5182 = vmul.f32 %v4798, 1.442695
      %v5183 = vpow.pop %v5182
      %v5184 = vmul.f32 %v4799, 1.442695
      %v5185 = vpow.pop %v5184
      %v5186 = vmul.f32 %v4800, 1.442695
      %v5187 = vpow.pop %v5186
      %v5188 = vmul.f32 %v4801, 1.442695
      %v5189 = vpow.pop %v5188
      %v5190 = vmul.f32 %v4802, 1.442695
      %v5191 = vpow.pop %v5190
      %v5192 = vmul.f32 %v4803, 1.442695
      %v5193 = vpow.pop %v5192
      %v5194 = vmul.f32 %v4804, 1.442695
      %v5195 = vpow.pop %v5194
      %v5196 = vmul.f32 %v4805, 1.442695
      %v5197 = vpow.pop %v5196
      %v5198 = vmul.f32 %v4806, 1.442695
      %v5199 = vpow.pop %v5198
      %v5200 = vmul.f32 %v4807, 1.442695
      %v5201 = vpow.pop %v5200
      %v5202 = vmul.f32 %v4808, 1.442695
      %v5203 = vpow.pop %v5202
      %v5204 = vmul.f32 %v4809, 1.442695
      %v5205 = vpow.pop %v5204
      %v5206 = vmul.f32 %v4810, 1.442695
      %v5207 = vpow.pop %v5206
      %v5208 = vmul.f32 %v4811, 1.442695
      %v5209 = vpow.pop %v5208
      %v5210 = vmul.f32 %v4812, 1.442695
      %v5211 = vpow.pop %v5210
      %v5212 = vmul.f32 %v4813, 1.442695
      %v5213 = vpow.pop %v5212
      %v5214 = vmul.f32 %v4814, 1.442695
      %v5215 = vpow.pop %v5214
      %v5216 = vmul.f32 %v4815, 1.442695
      %v5217 = vpow.pop %v5216
      %v5218 = vmul.f32 %v4816, 1.442695
      %v5219 = vpow.pop %v5218
      %v5220 = vmul.f32 %v4817, 1.442695
      %v5221 = vpow.pop %v5220
      %v5222 = vmul.f32 %v4818, 1.442695
      %v5223 = vpow.pop %v5222
      %v5224 = vmul.f32 %v4819, 1.442695
      %v5225 = vpow.pop %v5224
      %v5226 = vmul.f32 %v4820, 1.442695
      %v5227 = vpow.pop %v5226
      %v5228 = vmul.f32 %v4821, 1.442695
      %v5229 = vpow.pop %v5228
      %v5230 = vmul.f32 %v4822, 1.442695
      %v5231 = vpow.pop %v5230
      %v5232 = vmul.f32 %v4823, 1.442695
      %v5233 = vpow.pop %v5232
      %v5234 = vmul.f32 %v4824, 1.442695
      %v5235 = vpow.pop %v5234
      %v5236 = vmul.f32 %v4825, 1.442695
      %v5237 = vpow.pop %v5236
      %v5238 = vmul.f32 %v4826, 1.442695
      %v5239 = vpow.pop %v5238
      %v5240 = vmul.f32 %v4827, 1.442695
      %v5241 = vpow.pop %v5240
      %v5242 = vmul.f32 %v4828, 1.442695
      %v5243 = vpow.pop %v5242
      %v5244 = vmul.f32 %v4829, 1.442695
      %v5245 = vpow.pop %v5244
      %v5246 = vmul.f32 %v4830, 1.442695
      %v5247 = vpow.pop %v5246
      %v5248 = vmul.f32 %v4831, 1.442695
      %v5249 = vpow.pop %v5248
      %v5250 = vmul.f32 %v4832, 1.442695
      %v5251 = vpow.pop %v5250
      %v5252 = vmul.f32 %v4833, 1.442695
      %v5253 = vpow.pop %v5252
      %v5254 = vmul.f32 %v4834, 1.442695
      %v5255 = vpow.pop %v5254
      %v5256 = vmul.f32 %v4835, 1.442695
      %v5257 = vpow.pop %v5256
      %v5258 = vmul.f32 %v4836, 1.442695
      %v5259 = vpow.pop %v5258
      %v5260 = vmul.f32 %v4837, 1.442695
      %v5261 = vpow.pop %v5260
      %v5262 = vmul.f32 %v4838, 1.442695
      %v5263 = vpow.pop %v5262
      %v5264 = vmul.f32 %v4839, 1.442695
      %v5265 = vpow.pop %v5264
      %v5266 = vmul.f32 %v4840, 1.442695
      %v5267 = vpow.pop %v5266
      %v5268 = vmul.f32 %v4841, 1.442695
      %v5269 = vpow.pop %v5268
      %v5270 = vmul.f32 %v4842, 1.442695
      %v5271 = vpow.pop %v5270
      %v5272 = vmul.f32 %v4843, 1.442695
      %v5273 = vpow.pop %v5272
      %v5274 = vmul.f32 %v4844, 1.442695
      %v5275 = vpow.pop %v5274
      %v5276 = vmul.f32 %v4845, 1.442695
      %v5277 = vpow.pop %v5276
      %v5278 = vmul.f32 %v4846, 1.442695
      %v5279 = vpow.pop %v5278
      %v5280 = vmul.f32 %v4847, 1.442695
      %v5281 = vpow.pop %v5280
      %v5282 = vmul.f32 %v4848, 1.442695
      %v5283 = vpow.pop %v5282
      %v5284 = vmul.f32 %v4849, 1.442695
      %v5285 = vpow.pop %v5284
      %v5286 = vmul.f32 %v4850, 1.442695
      %v5287 = vpow.pop %v5286
      %v5288 = vmul.f32 %v4851, 1.442695
      %v5289 = vpow.pop %v5288
      %v5290 = vmul.f32 %v4852, 1.442695
      %v5291 = vpow.pop %v5290
      %v5292 = vmul.f32 %v4853, 1.442695
      %v5293 = vpow.pop %v5292
      %v5294 = vmul.f32 %v4854, 1.442695
      %v5295 = vpow.pop %v5294
      %v5296 = vmul.f32 %v4855, 1.442695
      %v5297 = vpow.pop %v5296
      %v5298 = vmul.f32 %v4856, 1.442695
      %v5299 = vpow.pop %v5298
      %v5300 = vmul.f32 %v4857, 1.442695
      %v5301 = vpow.pop %v5300
      %v5302 = vmul.f32 %v4858, 1.442695
      %v5303 = vpow.pop %v5302
      %v5304 = vmul.f32 %v4859, 1.442695
      %v5305 = vpow.pop %v5304
      %v5306 = vmul.f32 %v4860, 1.442695
      %v5307 = vpow.pop %v5306
      %v5308 = vmul.f32 %v4861, 1.442695
      %v5309 = vpow.pop %v5308
      %v5310 = vadd.f32 %v4863, 1.0
      %v5311 = vadd.f32 %v4865, 1.0
      %v5312 = vadd.f32 %v4867, 1.0
      %v5313 = vadd.f32 %v4869, 1.0
      %v5314 = vadd.f32 %v4871, 1.0
      %v5315 = vadd.f32 %v4873, 1.0
      %v5316 = vadd.f32 %v4875, 1.0
      %v5317 = vadd.f32 %v4877, 1.0
      %v5318 = vadd.f32 %v4879, 1.0
      %v5319 = vadd.f32 %v4881, 1.0
      %v5320 = vadd.f32 %v4883, 1.0
      %v5321 = vadd.f32 %v4885, 1.0
      %v5322 = vadd.f32 %v4887, 1.0
      %v5323 = vadd.f32 %v4889, 1.0
      %v5324 = vadd.f32 %v4891, 1.0
      %v5325 = vadd.f32 %v4893, 1.0
      %v5326 = vadd.f32 %v4895, 1.0
      %v5327 = vadd.f32 %v4897, 1.0
      %v5328 = vadd.f32 %v4899, 1.0
      %v5329 = vadd.f32 %v4901, 1.0
      %v5330 = vadd.f32 %v4903, 1.0
      %v5331 = vadd.f32 %v4905, 1.0
      %v5332 = vadd.f32 %v4907, 1.0
      %v5333 = vadd.f32 %v4909, 1.0
      %v5334 = vadd.f32 %v4911, 1.0
      %v5335 = vadd.f32 %v4913, 1.0
      %v5336 = vadd.f32 %v4915, 1.0
      %v5337 = vadd.f32 %v4917, 1.0
      %v5338 = vadd.f32 %v4919, 1.0
      %v5339 = vadd.f32 %v4921, 1.0
      %v5340 = vadd.f32 %v4923, 1.0
      %v5341 = vadd.f32 %v4925, 1.0
      %v5342 = vadd.f32 %v4927, 1.0
      %v5343 = vadd.f32 %v4929, 1.0
      %v5344 = vadd.f32 %v4931, 1.0
      %v5345 = vadd.f32 %v4933, 1.0
      %v5346 = vadd.f32 %v4935, 1.0
      %v5347 = vadd.f32 %v4937, 1.0
      %v5348 = vadd.f32 %v4939, 1.0
      %v5349 = vadd.f32 %v4941, 1.0
      %v5350 = vadd.f32 %v4943, 1.0
      %v5351 = vadd.f32 %v4945, 1.0
      %v5352 = vadd.f32 %v4947, 1.0
      %v5353 = vadd.f32 %v4949, 1.0
      %v5354 = vadd.f32 %v4951, 1.0
      %v5355 = vadd.f32 %v4953, 1.0
      %v5356 = vadd.f32 %v4955, 1.0
      %v5357 = vadd.f32 %v4957, 1.0
      %v5358 = vadd.f32 %v4959, 1.0
      %v5359 = vadd.f32 %v4961, 1.0
      %v5360 = vadd.f32 %v4963, 1.0
      %v5361 = vadd.f32 %v4965, 1.0
      %v5362 = vadd.f32 %v4967, 1.0
      %v5363 = vadd.f32 %v4969, 1.0
      %v5364 = vadd.f32 %v4971, 1.0
      %v5365 = vadd.f32 %v4973, 1.0
      %v5366 = vadd.f32 %v4975, 1.0
      %v5367 = vadd.f32 %v4977, 1.0
      %v5368 = vadd.f32 %v4979, 1.0
      %v5369 = vadd.f32 %v4981, 1.0
      %v5370 = vadd.f32 %v4983, 1.0
      %v5371 = vadd.f32 %v4985, 1.0
      %v5372 = vadd.f32 %v4987, 1.0
      %v5373 = vadd.f32 %v4989, 1.0
      %v5374 = vadd.f32 %v4991, 1.0
      %v5375 = vadd.f32 %v4993, 1.0
      %v5376 = vadd.f32 %v4995, 1.0
      %v5377 = vadd.f32 %v4997, 1.0
      %v5378 = vadd.f32 %v4999, 1.0
      %v5379 = vadd.f32 %v5001, 1.0
      %v5380 = vadd.f32 %v5003, 1.0
      %v5381 = vadd.f32 %v5005, 1.0
      %v5382 = vadd.f32 %v5007, 1.0
      %v5383 = vadd.f32 %v5009, 1.0
      %v5384 = vadd.f32 %v5011, 1.0
      %v5385 = vadd.f32 %v5013, 1.0
      %v5386 = vadd.f32 %v5015, 1.0
      %v5387 = vadd.f32 %v5017, 1.0
      %v5388 = vadd.f32 %v5019, 1.0
      %v5389 = vadd.f32 %v5021, 1.0
      %v5390 = vadd.f32 %v5023, 1.0
      %v5391 = vadd.f32 %v5025, 1.0
      %v5392 = vadd.f32 %v5027, 1.0
      %v5393 = vadd.f32 %v5029, 1.0
      %v5394 = vadd.f32 %v5031, 1.0
      %v5395 = vadd.f32 %v5033, 1.0
      %v5396 = vadd.f32 %v5035, 1.0
      %v5397 = vadd.f32 %v5037, 1.0
      %v5398 = vadd.f32 %v5039, 1.0
      %v5399 = vadd.f32 %v5041, 1.0
      %v5400 = vadd.f32 %v5043, 1.0
      %v5401 = vadd.f32 %v5045, 1.0
      %v5402 = vadd.f32 %v5047, 1.0
      %v5403 = vadd.f32 %v5049, 1.0
      %v5404 = vadd.f32 %v5051, 1.0
      %v5405 = vadd.f32 %v5053, 1.0
      %v5406 = vadd.f32 %v5055, 1.0
      %v5407 = vadd.f32 %v5057, 1.0
      %v5408 = vadd.f32 %v5059, 1.0
      %v5409 = vadd.f32 %v5061, 1.0
      %v5410 = vadd.f32 %v5063, 1.0
      %v5411 = vadd.f32 %v5065, 1.0
      %v5412 = vadd.f32 %v5067, 1.0
      %v5413 = vadd.f32 %v5069, 1.0
      %v5414 = vadd.f32 %v5071, 1.0
      %v5415 = vadd.f32 %v5073, 1.0
      %v5416 = vadd.f32 %v5075, 1.0
      %v5417 = vadd.f32 %v5077, 1.0
      %v5418 = vadd.f32 %v5079, 1.0
      %v5419 = vadd.f32 %v5081, 1.0
      %v5420 = vadd.f32 %v5083, 1.0
      %v5421 = vadd.f32 %v5085, 1.0
      %v5422 = vadd.f32 %v5087, 1.0
      %v5423 = vadd.f32 %v5089, 1.0
      %v5424 = vadd.f32 %v5091, 1.0
      %v5425 = vadd.f32 %v5093, 1.0
      %v5426 = vadd.f32 %v5095, 1.0
      %v5427 = vadd.f32 %v5097, 1.0
      %v5428 = vadd.f32 %v5099, 1.0
      %v5429 = vadd.f32 %v5101, 1.0
      %v5430 = vadd.f32 %v5103, 1.0
      %v5431 = vadd.f32 %v5105, 1.0
      %v5432 = vadd.f32 %v5107, 1.0
      %v5433 = vadd.f32 %v5109, 1.0
      %v5434 = vadd.f32 %v5111, 1.0
      %v5435 = vadd.f32 %v5113, 1.0
      %v5436 = vadd.f32 %v5115, 1.0
      %v5437 = vadd.f32 %v5117, 1.0
      %v5438 = vadd.f32 %v5119, 1.0
      %v5439 = vadd.f32 %v5121, 1.0
      %v5440 = vadd.f32 %v5123, 1.0
      %v5441 = vadd.f32 %v5125, 1.0
      %v5442 = vadd.f32 %v5127, 1.0
      %v5443 = vadd.f32 %v5129, 1.0
      %v5444 = vadd.f32 %v5131, 1.0
      %v5445 = vadd.f32 %v5133, 1.0
      %v5446 = vadd.f32 %v5135, 1.0
      %v5447 = vadd.f32 %v5137, 1.0
      %v5448 = vadd.f32 %v5139, 1.0
      %v5449 = vadd.f32 %v5141, 1.0
      %v5450 = vadd.f32 %v5143, 1.0
      %v5451 = vadd.f32 %v5145, 1.0
      %v5452 = vadd.f32 %v5147, 1.0
      %v5453 = vadd.f32 %v5149, 1.0
      %v5454 = vadd.f32 %v5151, 1.0
      %v5455 = vadd.f32 %v5153, 1.0
      %v5456 = vadd.f32 %v5155, 1.0
      %v5457 = vadd.f32 %v5157, 1.0
      %v5458 = vadd.f32 %v5159, 1.0
      %v5459 = vadd.f32 %v5161, 1.0
      %v5460 = vadd.f32 %v5163, 1.0
      %v5461 = vadd.f32 %v5165, 1.0
      %v5462 = vadd.f32 %v5167, 1.0
      %v5463 = vadd.f32 %v5169, 1.0
      %v5464 = vadd.f32 %v5171, 1.0
      %v5465 = vadd.f32 %v5173, 1.0
      %v5466 = vadd.f32 %v5175, 1.0
      %v5467 = vadd.f32 %v5177, 1.0
      %v5468 = vadd.f32 %v5179, 1.0
      %v5469 = vadd.f32 %v5181, 1.0
      %v5470 = vadd.f32 %v5183, 1.0
      %v5471 = vadd.f32 %v5185, 1.0
      %v5472 = vadd.f32 %v5187, 1.0
      %v5473 = vadd.f32 %v5189, 1.0
      %v5474 = vadd.f32 %v5191, 1.0
      %v5475 = vadd.f32 %v5193, 1.0
      %v5476 = vadd.f32 %v5195, 1.0
      %v5477 = vadd.f32 %v5197, 1.0
      %v5478 = vadd.f32 %v5199, 1.0
      %v5479 = vadd.f32 %v5201, 1.0
      %v5480 = vadd.f32 %v5203, 1.0
      %v5481 = vadd.f32 %v5205, 1.0
      %v5482 = vadd.f32 %v5207, 1.0
      %v5483 = vadd.f32 %v5209, 1.0
      %v5484 = vadd.f32 %v5211, 1.0
      %v5485 = vadd.f32 %v5213, 1.0
      %v5486 = vadd.f32 %v5215, 1.0
      %v5487 = vadd.f32 %v5217, 1.0
      %v5488 = vadd.f32 %v5219, 1.0
      %v5489 = vadd.f32 %v5221, 1.0
      %v5490 = vadd.f32 %v5223, 1.0
      %v5491 = vadd.f32 %v5225, 1.0
      %v5492 = vadd.f32 %v5227, 1.0
      %v5493 = vadd.f32 %v5229, 1.0
      %v5494 = vadd.f32 %v5231, 1.0
      %v5495 = vadd.f32 %v5233, 1.0
      %v5496 = vadd.f32 %v5235, 1.0
      %v5497 = vadd.f32 %v5237, 1.0
      %v5498 = vadd.f32 %v5239, 1.0
      %v5499 = vadd.f32 %v5241, 1.0
      %v5500 = vadd.f32 %v5243, 1.0
      %v5501 = vadd.f32 %v5245, 1.0
      %v5502 = vadd.f32 %v5247, 1.0
      %v5503 = vadd.f32 %v5249, 1.0
      %v5504 = vadd.f32 %v5251, 1.0
      %v5505 = vadd.f32 %v5253, 1.0
      %v5506 = vadd.f32 %v5255, 1.0
      %v5507 = vadd.f32 %v5257, 1.0
      %v5508 = vadd.f32 %v5259, 1.0
      %v5509 = vadd.f32 %v5261, 1.0
      %v5510 = vadd.f32 %v5263, 1.0
      %v5511 = vadd.f32 %v5265, 1.0
      %v5512 = vadd.f32 %v5267, 1.0
      %v5513 = vadd.f32 %v5269, 1.0
      %v5514 = vadd.f32 %v5271, 1.0
      %v5515 = vadd.f32 %v5273, 1.0
      %v5516 = vadd.f32 %v5275, 1.0
      %v5517 = vadd.f32 %v5277, 1.0
      %v5518 = vadd.f32 %v5279, 1.0
      %v5519 = vadd.f32 %v5281, 1.0
      %v5520 = vadd.f32 %v5283, 1.0
      %v5521 = vadd.f32 %v5285, 1.0
      %v5522 = vadd.f32 %v5287, 1.0
      %v5523 = vadd.f32 %v5289, 1.0
      %v5524 = vadd.f32 %v5291, 1.0
      %v5525 = vadd.f32 %v5293, 1.0
      %v5526 = vadd.f32 %v5295, 1.0
      %v5527 = vadd.f32 %v5297, 1.0
      %v5528 = vadd.f32 %v5299, 1.0
      %v5529 = vadd.f32 %v5301, 1.0
      %v5530 = vadd.f32 %v5303, 1.0
      %v5531 = vadd.f32 %v5305, 1.0
      %v5532 = vadd.f32 %v5307, 1.0
      %v5533 = vadd.f32 %v5309, 1.0
      %v5534 = vrcp.pop %v5310
      %v5535 = vmul.f32 1.0, %v5534
      %v5536 = vrcp.pop %v5311
      %v5537 = vmul.f32 1.0, %v5536
      %v5538 = vrcp.pop %v5312
      %v5539 = vmul.f32 1.0, %v5538
      %v5540 = vrcp.pop %v5313
      %v5541 = vmul.f32 1.0, %v5540
      %v5542 = vrcp.pop %v5314
      %v5543 = vmul.f32 1.0, %v5542
      %v5544 = vrcp.pop %v5315
      %v5545 = vmul.f32 1.0, %v5544
      %v5546 = vrcp.pop %v5316
      %v5547 = vmul.f32 1.0, %v5546
      %v5548 = vrcp.pop %v5317
      %v5549 = vmul.f32 1.0, %v5548
      %v5550 = vrcp.pop %v5318
      %v5551 = vmul.f32 1.0, %v5550
      %v5552 = vrcp.pop %v5319
      %v5553 = vmul.f32 1.0, %v5552
      %v5554 = vrcp.pop %v5320
      %v5555 = vmul.f32 1.0, %v5554
      %v5556 = vrcp.pop %v5321
      %v5557 = vmul.f32 1.0, %v5556
      %v5558 = vrcp.pop %v5322
      %v5559 = vmul.f32 1.0, %v5558
      %v5560 = vrcp.pop %v5323
      %v5561 = vmul.f32 1.0, %v5560
      %v5562 = vrcp.pop %v5324
      %v5563 = vmul.f32 1.0, %v5562
      %v5564 = vrcp.pop %v5325
      %v5565 = vmul.f32 1.0, %v5564
      %v5566 = vrcp.pop %v5326
      %v5567 = vmul.f32 1.0, %v5566
      %v5568 = vrcp.pop %v5327
      %v5569 = vmul.f32 1.0, %v5568
      %v5570 = vrcp.pop %v5328
      %v5571 = vmul.f32 1.0, %v5570
      %v5572 = vrcp.pop %v5329
      %v5573 = vmul.f32 1.0, %v5572
      %v5574 = vrcp.pop %v5330
      %v5575 = vmul.f32 1.0, %v5574
      %v5576 = vrcp.pop %v5331
      %v5577 = vmul.f32 1.0, %v5576
      %v5578 = vrcp.pop %v5332
      %v5579 = vmul.f32 1.0, %v5578
      %v5580 = vrcp.pop %v5333
      %v5581 = vmul.f32 1.0, %v5580
      %v5582 = vrcp.pop %v5334
      %v5583 = vmul.f32 1.0, %v5582
      %v5584 = vrcp.pop %v5335
      %v5585 = vmul.f32 1.0, %v5584
      %v5586 = vrcp.pop %v5336
      %v5587 = vmul.f32 1.0, %v5586
      %v5588 = vrcp.pop %v5337
      %v5589 = vmul.f32 1.0, %v5588
      %v5590 = vrcp.pop %v5338
      %v5591 = vmul.f32 1.0, %v5590
      %v5592 = vrcp.pop %v5339
      %v5593 = vmul.f32 1.0, %v5592
      %v5594 = vrcp.pop %v5340
      %v5595 = vmul.f32 1.0, %v5594
      %v5596 = vrcp.pop %v5341
      %v5597 = vmul.f32 1.0, %v5596
      %v5598 = vrcp.pop %v5342
      %v5599 = vmul.f32 1.0, %v5598
      %v5600 = vrcp.pop %v5343
      %v5601 = vmul.f32 1.0, %v5600
      %v5602 = vrcp.pop %v5344
      %v5603 = vmul.f32 1.0, %v5602
      %v5604 = vrcp.pop %v5345
      %v5605 = vmul.f32 1.0, %v5604
      %v5606 = vrcp.pop %v5346
      %v5607 = vmul.f32 1.0, %v5606
      %v5608 = vrcp.pop %v5347
      %v5609 = vmul.f32 1.0, %v5608
      %v5610 = vrcp.pop %v5348
      %v5611 = vmul.f32 1.0, %v5610
      %v5612 = vrcp.pop %v5349
      %v5613 = vmul.f32 1.0, %v5612
      %v5614 = vrcp.pop %v5350
      %v5615 = vmul.f32 1.0, %v5614
      %v5616 = vrcp.pop %v5351
      %v5617 = vmul.f32 1.0, %v5616
      %v5618 = vrcp.pop %v5352
      %v5619 = vmul.f32 1.0, %v5618
      %v5620 = vrcp.pop %v5353
      %v5621 = vmul.f32 1.0, %v5620
      %v5622 = vrcp.pop %v5354
      %v5623 = vmul.f32 1.0, %v5622
      %v5624 = vrcp.pop %v5355
      %v5625 = vmul.f32 1.0, %v5624
      %v5626 = vrcp.pop %v5356
      %v5627 = vmul.f32 1.0, %v5626
      %v5628 = vrcp.pop %v5357
      %v5629 = vmul.f32 1.0, %v5628
      %v5630 = vrcp.pop %v5358
      %v5631 = vmul.f32 1.0, %v5630
      %v5632 = vrcp.pop %v5359
      %v5633 = vmul.f32 1.0, %v5632
      %v5634 = vrcp.pop %v5360
      %v5635 = vmul.f32 1.0, %v5634
      %v5636 = vrcp.pop %v5361
      %v5637 = vmul.f32 1.0, %v5636
      %v5638 = vrcp.pop %v5362
      %v5639 = vmul.f32 1.0, %v5638
      %v5640 = vrcp.pop %v5363
      %v5641 = vmul.f32 1.0, %v5640
      %v5642 = vrcp.pop %v5364
      %v5643 = vmul.f32 1.0, %v5642
      %v5644 = vrcp.pop %v5365
      %v5645 = vmul.f32 1.0, %v5644
      %v5646 = vrcp.pop %v5366
      %v5647 = vmul.f32 1.0, %v5646
      %v5648 = vrcp.pop %v5367
      %v5649 = vmul.f32 1.0, %v5648
      %v5650 = vrcp.pop %v5368
      %v5651 = vmul.f32 1.0, %v5650
      %v5652 = vrcp.pop %v5369
      %v5653 = vmul.f32 1.0, %v5652
      %v5654 = vrcp.pop %v5370
      %v5655 = vmul.f32 1.0, %v5654
      %v5656 = vrcp.pop %v5371
      %v5657 = vmul.f32 1.0, %v5656
      %v5658 = vrcp.pop %v5372
      %v5659 = vmul.f32 1.0, %v5658
      %v5660 = vrcp.pop %v5373
      %v5661 = vmul.f32 1.0, %v5660
      %v5662 = vrcp.pop %v5374
      %v5663 = vmul.f32 1.0, %v5662
      %v5664 = vrcp.pop %v5375
      %v5665 = vmul.f32 1.0, %v5664
      %v5666 = vrcp.pop %v5376
      %v5667 = vmul.f32 1.0, %v5666
      %v5668 = vrcp.pop %v5377
      %v5669 = vmul.f32 1.0, %v5668
      %v5670 = vrcp.pop %v5378
      %v5671 = vmul.f32 1.0, %v5670
      %v5672 = vrcp.pop %v5379
      %v5673 = vmul.f32 1.0, %v5672
      %v5674 = vrcp.pop %v5380
      %v5675 = vmul.f32 1.0, %v5674
      %v5676 = vrcp.pop %v5381
      %v5677 = vmul.f32 1.0, %v5676
      %v5678 = vrcp.pop %v5382
      %v5679 = vmul.f32 1.0, %v5678
      %v5680 = vrcp.pop %v5383
      %v5681 = vmul.f32 1.0, %v5680
      %v5682 = vrcp.pop %v5384
      %v5683 = vmul.f32 1.0, %v5682
      %v5684 = vrcp.pop %v5385
      %v5685 = vmul.f32 1.0, %v5684
      %v5686 = vrcp.pop %v5386
      %v5687 = vmul.f32 1.0, %v5686
      %v5688 = vrcp.pop %v5387
      %v5689 = vmul.f32 1.0, %v5688
      %v5690 = vrcp.pop %v5388
      %v5691 = vmul.f32 1.0, %v5690
      %v5692 = vrcp.pop %v5389
      %v5693 = vmul.f32 1.0, %v5692
      %v5694 = vrcp.pop %v5390
      %v5695 = vmul.f32 1.0, %v5694
      %v5696 = vrcp.pop %v5391
      %v5697 = vmul.f32 1.0, %v5696
      %v5698 = vrcp.pop %v5392
      %v5699 = vmul.f32 1.0, %v5698
      %v5700 = vrcp.pop %v5393
      %v5701 = vmul.f32 1.0, %v5700
      %v5702 = vrcp.pop %v5394
      %v5703 = vmul.f32 1.0, %v5702
      %v5704 = vrcp.pop %v5395
      %v5705 = vmul.f32 1.0, %v5704
      %v5706 = vrcp.pop %v5396
      %v5707 = vmul.f32 1.0, %v5706
      %v5708 = vrcp.pop %v5397
      %v5709 = vmul.f32 1.0, %v5708
      %v5710 = vrcp.pop %v5398
      %v5711 = vmul.f32 1.0, %v5710
      %v5712 = vrcp.pop %v5399
      %v5713 = vmul.f32 1.0, %v5712
      %v5714 = vrcp.pop %v5400
      %v5715 = vmul.f32 1.0, %v5714
      %v5716 = vrcp.pop %v5401
      %v5717 = vmul.f32 1.0, %v5716
      %v5718 = vrcp.pop %v5402
      %v5719 = vmul.f32 1.0, %v5718
      %v5720 = vrcp.pop %v5403
      %v5721 = vmul.f32 1.0, %v5720
      %v5722 = vrcp.pop %v5404
      %v5723 = vmul.f32 1.0, %v5722
      %v5724 = vrcp.pop %v5405
      %v5725 = vmul.f32 1.0, %v5724
      %v5726 = vrcp.pop %v5406
      %v5727 = vmul.f32 1.0, %v5726
      %v5728 = vrcp.pop %v5407
      %v5729 = vmul.f32 1.0, %v5728
      %v5730 = vrcp.pop %v5408
      %v5731 = vmul.f32 1.0, %v5730
      %v5732 = vrcp.pop %v5409
      %v5733 = vmul.f32 1.0, %v5732
      %v5734 = vrcp.pop %v5410
      %v5735 = vmul.f32 1.0, %v5734
      %v5736 = vrcp.pop %v5411
      %v5737 = vmul.f32 1.0, %v5736
      %v5738 = vrcp.pop %v5412
      %v5739 = vmul.f32 1.0, %v5738
      %v5740 = vrcp.pop %v5413
      %v5741 = vmul.f32 1.0, %v5740
      %v5742 = vrcp.pop %v5414
      %v5743 = vmul.f32 1.0, %v5742
      %v5744 = vrcp.pop %v5415
      %v5745 = vmul.f32 1.0, %v5744
      %v5746 = vrcp.pop %v5416
      %v5747 = vmul.f32 1.0, %v5746
      %v5748 = vrcp.pop %v5417
      %v5749 = vmul.f32 1.0, %v5748
      %v5750 = vrcp.pop %v5418
      %v5751 = vmul.f32 1.0, %v5750
      %v5752 = vrcp.pop %v5419
      %v5753 = vmul.f32 1.0, %v5752
      %v5754 = vrcp.pop %v5420
      %v5755 = vmul.f32 1.0, %v5754
      %v5756 = vrcp.pop %v5421
      %v5757 = vmul.f32 1.0, %v5756
      %v5758 = vrcp.pop %v5422
      %v5759 = vmul.f32 1.0, %v5758
      %v5760 = vrcp.pop %v5423
      %v5761 = vmul.f32 1.0, %v5760
      %v5762 = vrcp.pop %v5424
      %v5763 = vmul.f32 1.0, %v5762
      %v5764 = vrcp.pop %v5425
      %v5765 = vmul.f32 1.0, %v5764
      %v5766 = vrcp.pop %v5426
      %v5767 = vmul.f32 1.0, %v5766
      %v5768 = vrcp.pop %v5427
      %v5769 = vmul.f32 1.0, %v5768
      %v5770 = vrcp.pop %v5428
      %v5771 = vmul.f32 1.0, %v5770
      %v5772 = vrcp.pop %v5429
      %v5773 = vmul.f32 1.0, %v5772
      %v5774 = vrcp.pop %v5430
      %v5775 = vmul.f32 1.0, %v5774
      %v5776 = vrcp.pop %v5431
      %v5777 = vmul.f32 1.0, %v5776
      %v5778 = vrcp.pop %v5432
      %v5779 = vmul.f32 1.0, %v5778
      %v5780 = vrcp.pop %v5433
      %v5781 = vmul.f32 1.0, %v5780
      %v5782 = vrcp.pop %v5434
      %v5783 = vmul.f32 1.0, %v5782
      %v5784 = vrcp.pop %v5435
      %v5785 = vmul.f32 1.0, %v5784
      %v5786 = vrcp.pop %v5436
      %v5787 = vmul.f32 1.0, %v5786
      %v5788 = vrcp.pop %v5437
      %v5789 = vmul.f32 1.0, %v5788
      %v5790 = vrcp.pop %v5438
      %v5791 = vmul.f32 1.0, %v5790
      %v5792 = vrcp.pop %v5439
      %v5793 = vmul.f32 1.0, %v5792
      %v5794 = vrcp.pop %v5440
      %v5795 = vmul.f32 1.0, %v5794
      %v5796 = vrcp.pop %v5441
      %v5797 = vmul.f32 1.0, %v5796
      %v5798 = vrcp.pop %v5442
      %v5799 = vmul.f32 1.0, %v5798
      %v5800 = vrcp.pop %v5443
      %v5801 = vmul.f32 1.0, %v5800
      %v5802 = vrcp.pop %v5444
      %v5803 = vmul.f32 1.0, %v5802
      %v5804 = vrcp.pop %v5445
      %v5805 = vmul.f32 1.0, %v5804
      %v5806 = vrcp.pop %v5446
      %v5807 = vmul.f32 1.0, %v5806
      %v5808 = vrcp.pop %v5447
      %v5809 = vmul.f32 1.0, %v5808
      %v5810 = vrcp.pop %v5448
      %v5811 = vmul.f32 1.0, %v5810
      %v5812 = vrcp.pop %v5449
      %v5813 = vmul.f32 1.0, %v5812
      %v5814 = vrcp.pop %v5450
      %v5815 = vmul.f32 1.0, %v5814
      %v5816 = vrcp.pop %v5451
      %v5817 = vmul.f32 1.0, %v5816
      %v5818 = vrcp.pop %v5452
      %v5819 = vmul.f32 1.0, %v5818
      %v5820 = vrcp.pop %v5453
      %v5821 = vmul.f32 1.0, %v5820
      %v5822 = vrcp.pop %v5454
      %v5823 = vmul.f32 1.0, %v5822
      %v5824 = vrcp.pop %v5455
      %v5825 = vmul.f32 1.0, %v5824
      %v5826 = vrcp.pop %v5456
      %v5827 = vmul.f32 1.0, %v5826
      %v5828 = vrcp.pop %v5457
      %v5829 = vmul.f32 1.0, %v5828
      %v5830 = vrcp.pop %v5458
      %v5831 = vmul.f32 1.0, %v5830
      %v5832 = vrcp.pop %v5459
      %v5833 = vmul.f32 1.0, %v5832
      %v5834 = vrcp.pop %v5460
      %v5835 = vmul.f32 1.0, %v5834
      %v5836 = vrcp.pop %v5461
      %v5837 = vmul.f32 1.0, %v5836
      %v5838 = vrcp.pop %v5462
      %v5839 = vmul.f32 1.0, %v5838
      %v5840 = vrcp.pop %v5463
      %v5841 = vmul.f32 1.0, %v5840
      %v5842 = vrcp.pop %v5464
      %v5843 = vmul.f32 1.0, %v5842
      %v5844 = vrcp.pop %v5465
      %v5845 = vmul.f32 1.0, %v5844
      %v5846 = vrcp.pop %v5466
      %v5847 = vmul.f32 1.0, %v5846
      %v5848 = vrcp.pop %v5467
      %v5849 = vmul.f32 1.0, %v5848
      %v5850 = vrcp.pop %v5468
      %v5851 = vmul.f32 1.0, %v5850
      %v5852 = vrcp.pop %v5469
      %v5853 = vmul.f32 1.0, %v5852
      %v5854 = vrcp.pop %v5470
      %v5855 = vmul.f32 1.0, %v5854
      %v5856 = vrcp.pop %v5471
      %v5857 = vmul.f32 1.0, %v5856
      %v5858 = vrcp.pop %v5472
      %v5859 = vmul.f32 1.0, %v5858
      %v5860 = vrcp.pop %v5473
      %v5861 = vmul.f32 1.0, %v5860
      %v5862 = vrcp.pop %v5474
      %v5863 = vmul.f32 1.0, %v5862
      %v5864 = vrcp.pop %v5475
      %v5865 = vmul.f32 1.0, %v5864
      %v5866 = vrcp.pop %v5476
      %v5867 = vmul.f32 1.0, %v5866
      %v5868 = vrcp.pop %v5477
      %v5869 = vmul.f32 1.0, %v5868
      %v5870 = vrcp.pop %v5478
      %v5871 = vmul.f32 1.0, %v5870
      %v5872 = vrcp.pop %v5479
      %v5873 = vmul.f32 1.0, %v5872
      %v5874 = vrcp.pop %v5480
      %v5875 = vmul.f32 1.0, %v5874
      %v5876 = vrcp.pop %v5481
      %v5877 = vmul.f32 1.0, %v5876
      %v5878 = vrcp.pop %v5482
      %v5879 = vmul.f32 1.0, %v5878
      %v5880 = vrcp.pop %v5483
      %v5881 = vmul.f32 1.0, %v5880
      %v5882 = vrcp.pop %v5484
      %v5883 = vmul.f32 1.0, %v5882
      %v5884 = vrcp.pop %v5485
      %v5885 = vmul.f32 1.0, %v5884
      %v5886 = vrcp.pop %v5486
      %v5887 = vmul.f32 1.0, %v5886
      %v5888 = vrcp.pop %v5487
      %v5889 = vmul.f32 1.0, %v5888
      %v5890 = vrcp.pop %v5488
      %v5891 = vmul.f32 1.0, %v5890
      %v5892 = vrcp.pop %v5489
      %v5893 = vmul.f32 1.0, %v5892
      %v5894 = vrcp.pop %v5490
      %v5895 = vmul.f32 1.0, %v5894
      %v5896 = vrcp.pop %v5491
      %v5897 = vmul.f32 1.0, %v5896
      %v5898 = vrcp.pop %v5492
      %v5899 = vmul.f32 1.0, %v5898
      %v5900 = vrcp.pop %v5493
      %v5901 = vmul.f32 1.0, %v5900
      %v5902 = vrcp.pop %v5494
      %v5903 = vmul.f32 1.0, %v5902
      %v5904 = vrcp.pop %v5495
      %v5905 = vmul.f32 1.0, %v5904
      %v5906 = vrcp.pop %v5496
      %v5907 = vmul.f32 1.0, %v5906
      %v5908 = vrcp.pop %v5497
      %v5909 = vmul.f32 1.0, %v5908
      %v5910 = vrcp.pop %v5498
      %v5911 = vmul.f32 1.0, %v5910
      %v5912 = vrcp.pop %v5499
      %v5913 = vmul.f32 1.0, %v5912
      %v5914 = vrcp.pop %v5500
      %v5915 = vmul.f32 1.0, %v5914
      %v5916 = vrcp.pop %v5501
      %v5917 = vmul.f32 1.0, %v5916
      %v5918 = vrcp.pop %v5502
      %v5919 = vmul.f32 1.0, %v5918
      %v5920 = vrcp.pop %v5503
      %v5921 = vmul.f32 1.0, %v5920
      %v5922 = vrcp.pop %v5504
      %v5923 = vmul.f32 1.0, %v5922
      %v5924 = vrcp.pop %v5505
      %v5925 = vmul.f32 1.0, %v5924
      %v5926 = vrcp.pop %v5506
      %v5927 = vmul.f32 1.0, %v5926
      %v5928 = vrcp.pop %v5507
      %v5929 = vmul.f32 1.0, %v5928
      %v5930 = vrcp.pop %v5508
      %v5931 = vmul.f32 1.0, %v5930
      %v5932 = vrcp.pop %v5509
      %v5933 = vmul.f32 1.0, %v5932
      %v5934 = vrcp.pop %v5510
      %v5935 = vmul.f32 1.0, %v5934
      %v5936 = vrcp.pop %v5511
      %v5937 = vmul.f32 1.0, %v5936
      %v5938 = vrcp.pop %v5512
      %v5939 = vmul.f32 1.0, %v5938
      %v5940 = vrcp.pop %v5513
      %v5941 = vmul.f32 1.0, %v5940
      %v5942 = vrcp.pop %v5514
      %v5943 = vmul.f32 1.0, %v5942
      %v5944 = vrcp.pop %v5515
      %v5945 = vmul.f32 1.0, %v5944
      %v5946 = vrcp.pop %v5516
      %v5947 = vmul.f32 1.0, %v5946
      %v5948 = vrcp.pop %v5517
      %v5949 = vmul.f32 1.0, %v5948
      %v5950 = vrcp.pop %v5518
      %v5951 = vmul.f32 1.0, %v5950
      %v5952 = vrcp.pop %v5519
      %v5953 = vmul.f32 1.0, %v5952
      %v5954 = vrcp.pop %v5520
      %v5955 = vmul.f32 1.0, %v5954
      %v5956 = vrcp.pop %v5521
      %v5957 = vmul.f32 1.0, %v5956
      %v5958 = vrcp.pop %v5522
      %v5959 = vmul.f32 1.0, %v5958
      %v5960 = vrcp.pop %v5523
      %v5961 = vmul.f32 1.0, %v5960
      %v5962 = vrcp.pop %v5524
      %v5963 = vmul.f32 1.0, %v5962
      %v5964 = vrcp.pop %v5525
      %v5965 = vmul.f32 1.0, %v5964
      %v5966 = vrcp.pop %v5526
      %v5967 = vmul.f32 1.0, %v5966
      %v5968 = vrcp.pop %v5527
      %v5969 = vmul.f32 1.0, %v5968
      %v5970 = vrcp.pop %v5528
      %v5971 = vmul.f32 1.0, %v5970
      %v5972 = vrcp.pop %v5529
      %v5973 = vmul.f32 1.0, %v5972
      %v5974 = vrcp.pop %v5530
      %v5975 = vmul.f32 1.0, %v5974
      %v5976 = vrcp.pop %v5531
      %v5977 = vmul.f32 1.0, %v5976
      %v5978 = vrcp.pop %v5532
      %v5979 = vmul.f32 1.0, %v5978
      %v5980 = vrcp.pop %v5533
      %v5981 = vmul.f32 1.0, %v5980
      %5982 = vst [vmem:[%s366] sm:$0xff] %v5535
      %5983 = vst [vmem:[%s366 + $0x8] sm:$0xff] %v5537
      %5984 = vst [vmem:[%s366 + $0x10] sm:$0xff] %v5539
      %5985 = vst [vmem:[%s366 + $0x18] sm:$0xff] %v5541
      %5986 = vst [vmem:[%s366 + $0x20] sm:$0xff] %v5543
      %5987 = vst [vmem:[%s366 + $0x28] sm:$0xff] %v5545
      %5988 = vst [vmem:[%s366 + $0x30] sm:$0xff] %v5547
      %5989 = vst [vmem:[%s366 + $0x38] sm:$0xff] %v5549
      %5990 = vst [vmem:[%s366 + $0x40] sm:$0xff] %v5551
      %5991 = vst [vmem:[%s366 + $0x48] sm:$0xff] %v5553
      %5992 = vst [vmem:[%s366 + $0x50] sm:$0xff] %v5555
      %5993 = vst [vmem:[%s366 + $0x58] sm:$0xff] %v5557
      %5994 = vst [vmem:[%s366 + $0x60] sm:$0xff] %v5559
      %5995 = vst [vmem:[%s366 + $0x68] sm:$0xff] %v5561
      %5996 = vst [vmem:[%s366 + $0x70] sm:$0xff] %v5563
      %5997 = vst [vmem:[%s366 + $0x78] sm:$0xff] %v5565
      %5998 = vst [vmem:[%s366 + $0x80] sm:$0xff] %v5567
      %5999 = vst [vmem:[%s366 + $0x88] sm:$0xff] %v5569
      %6000 = vst [vmem:[%s366 + $0x90] sm:$0xff] %v5571
      %6001 = vst [vmem:[%s366 + $0x98] sm:$0xff] %v5573
      %6002 = vst [vmem:[%s366 + $0xa0] sm:$0xff] %v5575
      %6003 = vst [vmem:[%s366 + $0xa8] sm:$0xff] %v5577
      %6004 = vst [vmem:[%s366 + $0xb0] sm:$0xff] %v5579
      %6005 = vst [vmem:[%s366 + $0xb8] sm:$0xff] %v5581
      %6006 = vst [vmem:[%s366 + $0xc0] sm:$0xff] %v5583
      %6007 = vst [vmem:[%s366 + $0xc8] sm:$0xff] %v5585
      %6008 = vst [vmem:[%s366 + $0xd0] sm:$0xff] %v5587
      %6009 = vst [vmem:[%s366 + $0xd8] sm:$0xff] %v5589
      %6010 = vst [vmem:[%s366 + $0xe0] sm:$0xff] %v5591
      %6011 = vst [vmem:[%s366 + $0xe8] sm:$0xff] %v5593
      %6012 = vst [vmem:[%s366 + $0xf0] sm:$0xff] %v5595
      %6013 = vst [vmem:[%s366 + $0xf8] sm:$0xff] %v5597
      %6014 = vst [vmem:[%s366 + $0x100] sm:$0xff] %v5599
      %6015 = vst [vmem:[%s366 + $0x108] sm:$0xff] %v5601
      %6016 = vst [vmem:[%s366 + $0x110] sm:$0xff] %v5603
      %6017 = vst [vmem:[%s366 + $0x118] sm:$0xff] %v5605
      %6018 = vst [vmem:[%s366 + $0x120] sm:$0xff] %v5607
      %6019 = vst [vmem:[%s366 + $0x128] sm:$0xff] %v5609
      %6020 = vst [vmem:[%s366 + $0x130] sm:$0xff] %v5611
      %6021 = vst [vmem:[%s366 + $0x138] sm:$0xff] %v5613
      %6022 = vst [vmem:[%s366 + $0x140] sm:$0xff] %v5615
      %6023 = vst [vmem:[%s366 + $0x148] sm:$0xff] %v5617
      %6024 = vst [vmem:[%s366 + $0x150] sm:$0xff] %v5619
      %6025 = vst [vmem:[%s366 + $0x158] sm:$0xff] %v5621
      %6026 = vst [vmem:[%s366 + $0x160] sm:$0xff] %v5623
      %6027 = vst [vmem:[%s366 + $0x168] sm:$0xff] %v5625
      %6028 = vst [vmem:[%s366 + $0x170] sm:$0xff] %v5627
      %6029 = vst [vmem:[%s366 + $0x178] sm:$0xff] %v5629
      %6030 = vst [vmem:[%s366 + $0x180] sm:$0xff] %v5631
      %6031 = vst [vmem:[%s366 + $0x188] sm:$0xff] %v5633
      %6032 = vst [vmem:[%s366 + $0x190] sm:$0xff] %v5635
      %6033 = vst [vmem:[%s366 + $0x198] sm:$0xff] %v5637
      %6034 = vst [vmem:[%s366 + $0x1a0] sm:$0xff] %v5639
      %6035 = vst [vmem:[%s366 + $0x1a8] sm:$0xff] %v5641
      %6036 = vst [vmem:[%s366 + $0x1b0] sm:$0xff] %v5643
      %6037 = vst [vmem:[%s366 + $0x1b8] sm:$0xff] %v5645
      %6038 = vst [vmem:[%s366 + $0x1c0] sm:$0xff] %v5647
      %6039 = vst [vmem:[%s366 + $0x1c8] sm:$0xff] %v5649
      %6040 = vst [vmem:[%s366 + $0x1d0] sm:$0xff] %v5651
      %6041 = vst [vmem:[%s366 + $0x1d8] sm:$0xff] %v5653
      %6042 = vst [vmem:[%s366 + $0x1e0] sm:$0xff] %v5655
      %6043 = vst [vmem:[%s366 + $0x1e8] sm:$0xff] %v5657
      %6044 = vst [vmem:[%s366 + $0x1f0] sm:$0xff] %v5659
      %6045 = vst [vmem:[%s366 + $0x1f8] sm:$0xff] %v5661
      %6046 = vst [vmem:[%s366 + $0x200] sm:$0xff] %v5663
      %6047 = vst [vmem:[%s366 + $0x208] sm:$0xff] %v5665
      %6048 = vst [vmem:[%s366 + $0x210] sm:$0xff] %v5667
      %6049 = vst [vmem:[%s366 + $0x218] sm:$0xff] %v5669
      %6050 = vst [vmem:[%s366 + $0x220] sm:$0xff] %v5671
      %6051 = vst [vmem:[%s366 + $0x228] sm:$0xff] %v5673
      %6052 = vst [vmem:[%s366 + $0x230] sm:$0xff] %v5675
      %6053 = vst [vmem:[%s366 + $0x238] sm:$0xff] %v5677
      %6054 = vst [vmem:[%s366 + $0x240] sm:$0xff] %v5679
      %6055 = vst [vmem:[%s366 + $0x248] sm:$0xff] %v5681
      %6056 = vst [vmem:[%s366 + $0x250] sm:$0xff] %v5683
      %6057 = vst [vmem:[%s366 + $0x258] sm:$0xff] %v5685
      %6058 = vst [vmem:[%s366 + $0x260] sm:$0xff] %v5687
      %6059 = vst [vmem:[%s366 + $0x268] sm:$0xff] %v5689
      %6060 = vst [vmem:[%s366 + $0x270] sm:$0xff] %v5691
      %6061 = vst [vmem:[%s366 + $0x278] sm:$0xff] %v5693
      %6062 = vst [vmem:[%s366 + $0x280] sm:$0xff] %v5695
      %6063 = vst [vmem:[%s366 + $0x288] sm:$0xff] %v5697
      %6064 = vst [vmem:[%s366 + $0x290] sm:$0xff] %v5699
      %6065 = vst [vmem:[%s366 + $0x298] sm:$0xff] %v5701
      %6066 = vst [vmem:[%s366 + $0x2a0] sm:$0xff] %v5703
      %6067 = vst [vmem:[%s366 + $0x2a8] sm:$0xff] %v5705
      %6068 = vst [vmem:[%s366 + $0x2b0] sm:$0xff] %v5707
      %6069 = vst [vmem:[%s366 + $0x2b8] sm:$0xff] %v5709
      %6070 = vst [vmem:[%s366 + $0x2c0] sm:$0xff] %v5711
      %6071 = vst [vmem:[%s366 + $0x2c8] sm:$0xff] %v5713
      %6072 = vst [vmem:[%s366 + $0x2d0] sm:$0xff] %v5715
      %6073 = vst [vmem:[%s366 + $0x2d8] sm:$0xff] %v5717
      %6074 = vst [vmem:[%s366 + $0x2e0] sm:$0xff] %v5719
      %6075 = vst [vmem:[%s366 + $0x2e8] sm:$0xff] %v5721
      %6076 = vst [vmem:[%s366 + $0x2f0] sm:$0xff] %v5723
      %6077 = vst [vmem:[%s366 + $0x2f8] sm:$0xff] %v5725
      %6078 = vst [vmem:[%s366 + $0x300] sm:$0xff] %v5727
      %6079 = vst [vmem:[%s366 + $0x308] sm:$0xff] %v5729
      %6080 = vst [vmem:[%s366 + $0x310] sm:$0xff] %v5731
      %6081 = vst [vmem:[%s366 + $0x318] sm:$0xff] %v5733
      %6082 = vst [vmem:[%s366 + $0x320] sm:$0xff] %v5735
      %6083 = vst [vmem:[%s366 + $0x328] sm:$0xff] %v5737
      %6084 = vst [vmem:[%s366 + $0x330] sm:$0xff] %v5739
      %6085 = vst [vmem:[%s366 + $0x338] sm:$0xff] %v5741
      %6086 = vst [vmem:[%s366 + $0x340] sm:$0xff] %v5743
      %6087 = vst [vmem:[%s366 + $0x348] sm:$0xff] %v5745
      %6088 = vst [vmem:[%s366 + $0x350] sm:$0xff] %v5747
      %6089 = vst [vmem:[%s366 + $0x358] sm:$0xff] %v5749
      %6090 = vst [vmem:[%s366 + $0x360] sm:$0xff] %v5751
      %6091 = vst [vmem:[%s366 + $0x368] sm:$0xff] %v5753
      %6092 = vst [vmem:[%s366 + $0x370] sm:$0xff] %v5755
      %6093 = vst [vmem:[%s366 + $0x378] sm:$0xff] %v5757
      %6094 = vst [vmem:[%s366 + $0x380] sm:$0xff] %v5759
      %6095 = vst [vmem:[%s366 + $0x388] sm:$0xff] %v5761
      %6096 = vst [vmem:[%s366 + $0x390] sm:$0xff] %v5763
      %6097 = vst [vmem:[%s366 + $0x398] sm:$0xff] %v5765
      %6098 = vst [vmem:[%s366 + $0x3a0] sm:$0xff] %v5767
      %6099 = vst [vmem:[%s366 + $0x3a8] sm:$0xff] %v5769
      %6100 = vst [vmem:[%s366 + $0x3b0] sm:$0xff] %v5771
      %6101 = vst [vmem:[%s366 + $0x3b8] sm:$0xff] %v5773
      %6102 = vst [vmem:[%s366 + $0x3c0] sm:$0xff] %v5775
      %6103 = vst [vmem:[%s366 + $0x3c8] sm:$0xff] %v5777
      %6104 = vst [vmem:[%s366 + $0x3d0] sm:$0xff] %v5779
      %6105 = vst [vmem:[%s366 + $0x3d8] sm:$0xff] %v5781
      %6106 = vst [vmem:[%s366 + $0x3e0] sm:$0xff] %v5783
      %6107 = vst [vmem:[%s366 + $0x3e8] sm:$0xff] %v5785
      %6108 = vst [vmem:[%s366 + $0x3f0] sm:$0xff] %v5787
      %6109 = vst [vmem:[%s366 + $0x3f8] sm:$0xff] %v5789
      %6110 = vst [vmem:[%s366 + $0x400] sm:$0xff] %v5791
      %6111 = vst [vmem:[%s366 + $0x408] sm:$0xff] %v5793
      %6112 = vst [vmem:[%s366 + $0x410] sm:$0xff] %v5795
      %6113 = vst [vmem:[%s366 + $0x418] sm:$0xff] %v5797
      %6114 = vst [vmem:[%s366 + $0x420] sm:$0xff] %v5799
      %6115 = vst [vmem:[%s366 + $0x428] sm:$0xff] %v5801
      %6116 = vst [vmem:[%s366 + $0x430] sm:$0xff] %v5803
      %6117 = vst [vmem:[%s366 + $0x438] sm:$0xff] %v5805
      %6118 = vst [vmem:[%s366 + $0x440] sm:$0xff] %v5807
      %6119 = vst [vmem:[%s366 + $0x448] sm:$0xff] %v5809
      %6120 = vst [vmem:[%s366 + $0x450] sm:$0xff] %v5811
      %6121 = vst [vmem:[%s366 + $0x458] sm:$0xff] %v5813
      %6122 = vst [vmem:[%s366 + $0x460] sm:$0xff] %v5815
      %6123 = vst [vmem:[%s366 + $0x468] sm:$0xff] %v5817
      %6124 = vst [vmem:[%s366 + $0x470] sm:$0xff] %v5819
      %6125 = vst [vmem:[%s366 + $0x478] sm:$0xff] %v5821
      %6126 = vst [vmem:[%s366 + $0x480] sm:$0xff] %v5823
      %6127 = vst [vmem:[%s366 + $0x488] sm:$0xff] %v5825
      %6128 = vst [vmem:[%s366 + $0x490] sm:$0xff] %v5827
      %6129 = vst [vmem:[%s366 + $0x498] sm:$0xff] %v5829
      %6130 = vst [vmem:[%s366 + $0x4a0] sm:$0xff] %v5831
      %6131 = vst [vmem:[%s366 + $0x4a8] sm:$0xff] %v5833
      %6132 = vst [vmem:[%s366 + $0x4b0] sm:$0xff] %v5835
      %6133 = vst [vmem:[%s366 + $0x4b8] sm:$0xff] %v5837
      %6134 = vst [vmem:[%s366 + $0x4c0] sm:$0xff] %v5839
      %6135 = vst [vmem:[%s366 + $0x4c8] sm:$0xff] %v5841
      %6136 = vst [vmem:[%s366 + $0x4d0] sm:$0xff] %v5843
      %6137 = vst [vmem:[%s366 + $0x4d8] sm:$0xff] %v5845
      %6138 = vst [vmem:[%s366 + $0x4e0] sm:$0xff] %v5847
      %6139 = vst [vmem:[%s366 + $0x4e8] sm:$0xff] %v5849
      %6140 = vst [vmem:[%s366 + $0x4f0] sm:$0xff] %v5851
      %6141 = vst [vmem:[%s366 + $0x4f8] sm:$0xff] %v5853
      %6142 = vst [vmem:[%s366 + $0x500] sm:$0xff] %v5855
      %6143 = vst [vmem:[%s366 + $0x508] sm:$0xff] %v5857
      %6144 = vst [vmem:[%s366 + $0x510] sm:$0xff] %v5859
      %6145 = vst [vmem:[%s366 + $0x518] sm:$0xff] %v5861
      %6146 = vst [vmem:[%s366 + $0x520] sm:$0xff] %v5863
      %6147 = vst [vmem:[%s366 + $0x528] sm:$0xff] %v5865
      %6148 = vst [vmem:[%s366 + $0x530] sm:$0xff] %v5867
      %6149 = vst [vmem:[%s366 + $0x538] sm:$0xff] %v5869
      %6150 = vst [vmem:[%s366 + $0x540] sm:$0xff] %v5871
      %6151 = vst [vmem:[%s366 + $0x548] sm:$0xff] %v5873
      %6152 = vst [vmem:[%s366 + $0x550] sm:$0xff] %v5875
      %6153 = vst [vmem:[%s366 + $0x558] sm:$0xff] %v5877
      %6154 = vst [vmem:[%s366 + $0x560] sm:$0xff] %v5879
      %6155 = vst [vmem:[%s366 + $0x568] sm:$0xff] %v5881
      %6156 = vst [vmem:[%s366 + $0x570] sm:$0xff] %v5883
      %6157 = vst [vmem:[%s366 + $0x578] sm:$0xff] %v5885
      %6158 = vst [vmem:[%s366 + $0x580] sm:$0xff] %v5887
      %6159 = vst [vmem:[%s366 + $0x588] sm:$0xff] %v5889
      %6160 = vst [vmem:[%s366 + $0x590] sm:$0xff] %v5891
      %6161 = vst [vmem:[%s366 + $0x598] sm:$0xff] %v5893
      %6162 = vst [vmem:[%s366 + $0x5a0] sm:$0xff] %v5895
      %6163 = vst [vmem:[%s366 + $0x5a8] sm:$0xff] %v5897
      %6164 = vst [vmem:[%s366 + $0x5b0] sm:$0xff] %v5899
      %6165 = vst [vmem:[%s366 + $0x5b8] sm:$0xff] %v5901
      %6166 = vst [vmem:[%s366 + $0x5c0] sm:$0xff] %v5903
      %6167 = vst [vmem:[%s366 + $0x5c8] sm:$0xff] %v5905
      %6168 = vst [vmem:[%s366 + $0x5d0] sm:$0xff] %v5907
      %6169 = vst [vmem:[%s366 + $0x5d8] sm:$0xff] %v5909
      %6170 = vst [vmem:[%s366 + $0x5e0] sm:$0xff] %v5911
      %6171 = vst [vmem:[%s366 + $0x5e8] sm:$0xff] %v5913
      %6172 = vst [vmem:[%s366 + $0x5f0] sm:$0xff] %v5915
      %6173 = vst [vmem:[%s366 + $0x5f8] sm:$0xff] %v5917
      %6174 = vst [vmem:[%s366 + $0x600] sm:$0xff] %v5919
      %6175 = vst [vmem:[%s366 + $0x608] sm:$0xff] %v5921
      %6176 = vst [vmem:[%s366 + $0x610] sm:$0xff] %v5923
      %6177 = vst [vmem:[%s366 + $0x618] sm:$0xff] %v5925
      %6178 = vst [vmem:[%s366 + $0x620] sm:$0xff] %v5927
      %6179 = vst [vmem:[%s366 + $0x628] sm:$0xff] %v5929
      %6180 = vst [vmem:[%s366 + $0x630] sm:$0xff] %v5931
      %6181 = vst [vmem:[%s366 + $0x638] sm:$0xff] %v5933
      %6182 = vst [vmem:[%s366 + $0x640] sm:$0xff] %v5935
      %6183 = vst [vmem:[%s366 + $0x648] sm:$0xff] %v5937
      %6184 = vst [vmem:[%s366 + $0x650] sm:$0xff] %v5939
      %6185 = vst [vmem:[%s366 + $0x658] sm:$0xff] %v5941
      %6186 = vst [vmem:[%s366 + $0x660] sm:$0xff] %v5943
      %6187 = vst [vmem:[%s366 + $0x668] sm:$0xff] %v5945
      %6188 = vst [vmem:[%s366 + $0x670] sm:$0xff] %v5947
      %6189 = vst [vmem:[%s366 + $0x678] sm:$0xff] %v5949
      %6190 = vst [vmem:[%s366 + $0x680] sm:$0xff] %v5951
      %6191 = vst [vmem:[%s366 + $0x688] sm:$0xff] %v5953
      %6192 = vst [vmem:[%s366 + $0x690] sm:$0xff] %v5955
      %6193 = vst [vmem:[%s366 + $0x698] sm:$0xff] %v5957
      %6194 = vst [vmem:[%s366 + $0x6a0] sm:$0xff] %v5959
      %6195 = vst [vmem:[%s366 + $0x6a8] sm:$0xff] %v5961
      %6196 = vst [vmem:[%s366 + $0x6b0] sm:$0xff] %v5963
      %6197 = vst [vmem:[%s366 + $0x6b8] sm:$0xff] %v5965
      %6198 = vst [vmem:[%s366 + $0x6c0] sm:$0xff] %v5967
      %6199 = vst [vmem:[%s366 + $0x6c8] sm:$0xff] %v5969
      %6200 = vst [vmem:[%s366 + $0x6d0] sm:$0xff] %v5971
      %6201 = vst [vmem:[%s366 + $0x6d8] sm:$0xff] %v5973
      %6202 = vst [vmem:[%s366 + $0x6e0] sm:$0xff] %v5975
      %6203 = vst [vmem:[%s366 + $0x6e8] sm:$0xff] %v5977
      %6204 = vst [vmem:[%s366 + $0x6f0] sm:$0xff] %v5979
      %6205 = vst [vmem:[%s366 + $0x6f8] sm:$0xff] %v5981
      %s6206 = smul.u32 32, %s21
      %p6207 = scmp.lt.s32.totalorder %s6206, 63
      %s6208 = scalar_select %p6207, %s6206, 63
      %s6209 = smul.addr %s6208, 7
      %s6210 = smul.addr %s6209, 8
      %s6211 = scalar_lea.vmem %s10, %s6210
      // Predicated region
      $region61: #{autoencoder_forward.1} parent=59 // pred_check
        %p6212 = pneg %p254
      $region62: #{autoencoder_forward.1} parent=59 // pred_check_branch
        %6214 = sbr.rel (%p6212) target = $region64
      $region63: #{autoencoder_forward.1} parent=59 // pred_region
        %s6215 = smul.u32 32, %s21
      $region64: #{autoencoder_forward.1} parent=59 // pred_fallthru
        _
    $region60: #{autoencoder_forward.1} parent=5 // pred_fallthru
      _
    %p6216 = scmp.le.s32.totalorder 2, %s16
    // Predicated region
    $region65: #{autoencoder_forward.1} parent=5 // pred_check
      %p6217 = pneg %p6216
    $region66: #{autoencoder_forward.1} parent=5 // pred_check_branch
      %6219 = sbr.rel (%p6217) target = $region68
    $region67: #{autoencoder_forward.1} parent=5 // pred_region
      %s6220 = ssub.s32 %s16, 2
      // Predicated region
      $region69: #{autoencoder_forward.1} parent=67 // pred_check
        %p6221 = pneg %p260
      $region70: #{autoencoder_forward.1} parent=67 // pred_check_branch
        %6223 = sbr.rel (%p6221) target = $region72
      $region71: #{autoencoder_forward.1} parent=67 // pred_region
        %s6224 = smul.u32 32, %s22
        %p6225 = scmp.lt.s32.totalorder %s6224, 63
        %s6226 = scalar_select %p6225, %s6224, 63
        %s6227 = smul.addr %s6226, 7
        %s6228 = smul.addr %s6227, 8
        %s6229 = scalar_lea.vmem %s10, %s6228
      $region72: #{autoencoder_forward.1} parent=67 // pred_fallthru
        _
    $region68: #{autoencoder_forward.1} parent=5 // pred_fallthru
      _
  $region6: #{autoencoder_forward.1} parent=0 // loop_footer
    %s20 = sadd.s32 1, %s16
  $region7: #{autoencoder_forward.1} parent=0 // loop_footer_branch
    %15 = sbr.rel target = $region3
  $region8: #{autoencoder_forward.1} parent=0 // loop_exit
    _

</llo_original>
